<compile_context>
chip_gen: v6e
topology: v6e:2x2x1
jax: 0.10.0
libtpu: 0.0.40
codegen_flags: <defaults>
</compile_context>

<pallas_src>
import jax
import jax.numpy as jnp
from jax import lax
from jax.experimental import pallas as pl
from jax.experimental.pallas import tpu as pltpu


def _mish(x):
    # x * tanh(softplus(x)), with a numerically stable softplus.
    sp = jnp.maximum(x, 0.0) + jnp.log(1.0 + jnp.exp(-jnp.abs(x)))
    return x * jnp.tanh(sp)


def _resblock_unit_kernel(xp_ref, w1_ref, b1_ref, w2_ref, b2_ref, o_ref,
                          hmid_ref):
    """One residual unit for a single batch element.

    xp_ref  : (1, H+2, W+8, C)  input, zero-padded 1 top/bottom/left and 7
                                extra columns on the right (keeps the padded
                                width a multiple of 8 -> clean reshapes).
    w1_ref  : (C, Ch)           conv1x1 weight with BN1 scale folded in
    b1_ref  : (1, Ch)           BN1 folded bias
    w2_ref  : (9, Ch, C)        conv3x3 weight (tap-major) with BN2 folded in
    b2_ref  : (1, C)            BN2 folded bias
    o_ref   : (1, H, W, C)      unit output (residual already added)
    hmid_ref: VMEM scratch (H+2, W+8, Ch) f32 — padded intermediate activation
    """
    _, hp, wp, c = xp_ref.shape
    _, h_out, w_out, _ = o_ref.shape
    ch = w1_ref.shape[1]

    xp = xp_ref[0].astype(jnp.float32)                       # (Hp, Wp, C)

    # ---- 1x1 conv + BN + Mish over the whole padded plane (one matmul) ----
    h = jnp.dot(xp.reshape(hp * wp, c), w1_ref[...],
                preferred_element_type=jnp.float32) + b1_ref[...]
    h = _mish(h).reshape(hp, wp, ch)

    # Zero the halo so the 3x3 conv below sees true zero padding.
    row = lax.broadcasted_iota(jnp.int32, (hp, wp, ch), 0)
    col = lax.broadcasted_iota(jnp.int32, (hp, wp, ch), 1)
    valid = (row >= 1) & (row <= h_out) & (col >= 1) & (col <= w_out)
    hmid_ref[...] = jnp.where(valid, h, 0.0)

    # ---- 3x3 conv as 9 shifted MXU matmuls, accumulated in f32 ----
    acc = jnp.zeros((h_out * w_out, c), jnp.float32) + b2_ref[...]
    for dh in range(3):
        for dw in range(3):
            patch = hmid_ref[dh:dh + h_out, dw:dw + w_out, :]   # (H, W, Ch)
            acc = acc + jnp.dot(patch.reshape(h_out * w_out, ch),
                                w2_ref[dh * 3 + dw],
                                preferred_element_type=jnp.float32)
    y = _mish(acc)

    # ---- residual add (interior of the padded input) ----
    resid = xp_ref[0, 1:1 + h_out, 1:1 + w_out, :].astype(jnp.float32)
    out = y.reshape(h_out, w_out, c) + resid
    o_ref[0] = out.astype(o_ref.dtype)


def _resblock_unit(xp, w1, b1, w2, b2, h, w):
    n, hp, wp, c = xp.shape
    ch = w1.shape[1]
    return pl.pallas_call(
        _resblock_unit_kernel,
        out_shape=jax.ShapeDtypeStruct((n, h, w, c), xp.dtype),
        grid=(n,),
        in_specs=[
            pl.BlockSpec((1, hp, wp, c), lambda i: (i, 0, 0, 0)),
            pl.BlockSpec((c, ch), lambda i: (0, 0)),
            pl.BlockSpec((1, ch), lambda i: (0, 0)),
            pl.BlockSpec((9, ch, c), lambda i: (0, 0, 0)),
            pl.BlockSpec((1, c), lambda i: (0, 0)),
        ],
        out_specs=pl.BlockSpec((1, h, w, c), lambda i: (i, 0, 0, 0)),
        scratch_shapes=[pltpu.VMEM((hp, wp, ch), jnp.float32)],
        compiler_params=pltpu.CompilerParams(
            dimension_semantics=("parallel",)),
    )(xp, w1, b1, w2, b2)


def _fold_conv_bn(w_oihw, gamma, beta, mean, var, eps=1e-5):
    """Fold inference-mode BatchNorm into a bias-free conv.

    Returns (w_taps, bias): w_taps is (kh*kw, Cin, Cout), bias is (1, Cout).
    """
    scale = gamma / jnp.sqrt(var + eps)                       # (Cout,)
    w = jnp.transpose(w_oihw, (2, 3, 1, 0)) * scale           # (kh,kw,Cin,Cout)
    kh, kw, cin, cout = w.shape
    bias = (beta - mean * scale).reshape(1, cout)
    return w.reshape(kh * kw, cin, cout), bias


@jax.jit
def resblock_forward(x_nchw, params):
    """Equivalent of ResBlock.forward(x) (NCHW, inference-mode BatchNorm)."""
    n, c, h, w = x_nchw.shape
    if w % 8 != 0:
        # TODO(synk): general W requires padding W to a multiple of 8.
        raise NotImplementedError("kernel assumes W % 8 == 0")

    x = jnp.transpose(x_nchw, (0, 2, 3, 1)).astype(jnp.float32)   # NHWC
    for p in params:
        w1, b1 = _fold_conv_bn(p["w1"], p["g1"], p["b1"], p["m1"], p["v1"])
        w2, b2 = _fold_conv_bn(p["w2"], p["g2"], p["b2"], p["m2"], p["v2"])
        w1 = w1[0]                                   # (C, C//2) 1x1 conv
        # pad 1 top/bottom/left, 7 right (keeps padded width % 8 == 0)
        xp = jnp.pad(x, ((0, 0), (1, 1), (1, 7), (0, 0)))
        x = _resblock_unit(xp, w1, b1, w2, b2, h, w)
    return jnp.transpose(x, (0, 3, 1, 2))


def _reference_resblock(x, params, eps=1e-5):
    """Pure-JAX reference (NCHW), mirrors the PyTorch module in eval mode."""
    def bn(t, g, b, m, v):
        return ((t - m[None, :, None, None])
                / jnp.sqrt(v[None, :, None, None] + eps)
                * g[None, :, None, None] + b[None, :, None, None])

    def mish(t):
        return t * jnp.tanh(jax.nn.softplus(t))

    dn = ("NCHW", "OIHW", "NCHW")
    for p in params:
        t = lax.conv_general_dilated(x, p["w1"], (1, 1), "VALID",
                                     dimension_numbers=dn,
                                     precision=lax.Precision.HIGHEST)
        t = mish(bn(t, p["g1"], p["b1"], p["m1"], p["v1"]))
        y = lax.conv_general_dilated(t, p["w2"], (1, 1), ((1, 1), (1, 1)),
                                     dimension_numbers=dn,
                                     precision=lax.Precision.HIGHEST)
        y = mish(bn(y, p["g2"], p["b2"], p["m2"], p["v2"]))
        x = y + x
    return x


if __name__ == "__main__":
    key = jax.random.PRNGKey(0)
    N, C, H, W = 2, 8, 16, 16
    num_blocks = 2
    Ch = C // 2

    keys = jax.random.split(key, 1 + num_blocks * 10)
    x = jax.random.normal(keys[0], (N, C, H, W), dtype=jnp.float32)

    params = []
    k = 1
    for _ in range(num_blocks):
        params.append({
            "w1": jax.random.normal(keys[k + 0], (Ch, C, 1, 1), jnp.float32) * 0.3,
            "g1": 1.0 + 0.1 * jax.random.normal(keys[k + 1], (Ch,), jnp.float32),
            "b1": 0.1 * jax.random.normal(keys[k + 2], (Ch,), jnp.float32),
            "m1": 0.1 * jax.random.normal(keys[k + 3], (Ch,), jnp.float32),
            "v1": 0.5 + jax.random.uniform(keys[k + 4], (Ch,), jnp.float32),
            "w2": jax.random.normal(keys[k + 5], (C, Ch, 3, 3), jnp.float32) * 0.2,
            "g2": 1.0 + 0.1 * jax.random.normal(keys[k + 6], (C,), jnp.float32),
            "b2": 0.1 * jax.random.normal(keys[k + 7], (C,), jnp.float32),
            "m2": 0.1 * jax.random.normal(keys[k + 8], (C,), jnp.float32),
            "v2": 0.5 + jax.random.uniform(keys[k + 9], (C,), jnp.float32),
        })
        k += 10

    out = resblock_forward(x, params)
    out = jax.block_until_ready(out)

    ref = _reference_resblock(x, params)
    assert out.shape == (N, C, H, W), out.shape
    max_err = jnp.max(jnp.abs(out - ref))
    assert jnp.allclose(out, ref, atol=1e-4, rtol=1e-4), f"max abs err {max_err}"

    print("KERNEL_OK")
</pallas_src>

<mosaic_0001>
module attributes {stable_mosaic.version = 11 : i64} {
  func.func @_resblock_unit_kernel(%arg0: i32, %arg1: memref<1x18x24x8xf32, #tpu.memory_space<vmem>>, %arg2: memref<8x4xf32, #tpu.memory_space<vmem>>, %arg3: memref<1x4xf32, #tpu.memory_space<vmem>>, %arg4: memref<9x4x8xf32, #tpu.memory_space<vmem>>, %arg5: memref<1x8xf32, #tpu.memory_space<vmem>>, %arg6: memref<1x16x16x8xf32, #tpu.memory_space<vmem>>, %arg7: memref<18x24x4xf32, #tpu.memory_space<vmem>>) attributes {dimension_semantics = [#tpu.dimension_semantics<parallel>], iteration_bounds = array<i64: 2>, scalar_prefetch = 0 : i64, scratch_operands = 1 : i64, tpu.core_type = #tpu.core_type<tc>, window_params = [{transform_indices = @transform_0, window_bounds = array<i64: 1, 18, 24, 8>}, {pipeline_mode = #tpu.pipeline_mode<synchronous>, transform_indices = @transform_1, window_bounds = array<i64: 8, 4>}, {pipeline_mode = #tpu.pipeline_mode<synchronous>, transform_indices = @transform_2, window_bounds = array<i64: 1, 4>}, {pipeline_mode = #tpu.pipeline_mode<synchronous>, transform_indices = @transform_3, window_bounds = array<i64: 9, 4, 8>}, {pipeline_mode = #tpu.pipeline_mode<synchronous>, transform_indices = @transform_4, window_bounds = array<i64: 1, 8>}, {transform_indices = @transform_5, window_bounds = array<i64: 1, 16, 16, 8>}]} {
    %c0 = arith.constant 0 : index
    %c0_0 = arith.constant 0 : index
    %c0_1 = arith.constant 0 : index
    %c0_2 = arith.constant 0 : index
    %0 = vector.load %arg1[%c0, %c0_0, %c0_1, %c0_2] : memref<1x18x24x8xf32, #tpu.memory_space<vmem>>, vector<1x18x24x8xf32>
    %1 = vector.shape_cast %0 : vector<1x18x24x8xf32> to vector<18x24x8xf32>
    %2 = vector.shape_cast %1 : vector<18x24x8xf32> to vector<432x8xf32>
    %c0_3 = arith.constant 0 : index
    %c0_4 = arith.constant 0 : index
    %3 = vector.load %arg2[%c0_3, %c0_4] : memref<8x4xf32, #tpu.memory_space<vmem>>, vector<8x4xf32>
    %cst = arith.constant dense<0.000000e+00> : vector<432x4xf32>
    %4 = tpu.matmul %2, %3, %cst {dimension_numbers = #tpu.dot_dimension_numbers<[1], [0], [0], [1], [0, 0, 1, 1], [], []>} : vector<432x8xf32>, vector<8x4xf32>, vector<432x4xf32> -> vector<432x4xf32>
    %c0_5 = arith.constant 0 : index
    %c0_6 = arith.constant 0 : index
    %5 = vector.load %arg3[%c0_5, %c0_6] : memref<1x4xf32, #tpu.memory_space<vmem>>, vector<1x4xf32>
    %6 = vector.broadcast %5 : vector<1x4xf32> to vector<432x4xf32>
    %7 = arith.addf %4, %6 : vector<432x4xf32>
    %cst_7 = arith.constant 0.000000e+00 : f32
    %8 = vector.broadcast %cst_7 : f32 to vector<432x4xf32>
    %9 = arith.maximumf %7, %8 : vector<432x4xf32>
    %10 = math.absf %7 : vector<432x4xf32>
    %cst_8 = arith.constant 0.000000e+00 : f32
    %11 = vector.broadcast %cst_8 : f32 to vector<432x4xf32>
    %12 = arith.subf %11, %10 : vector<432x4xf32>
    %13 = math.exp %12 : vector<432x4xf32>
    %cst_9 = arith.constant 1.000000e+00 : f32
    %14 = vector.broadcast %cst_9 : f32 to vector<432x4xf32>
    %15 = arith.addf %14, %13 : vector<432x4xf32>
    %16 = math.log %15 : vector<432x4xf32>
    %17 = arith.addf %9, %16 : vector<432x4xf32>
    %18 = math.tanh %17 : vector<432x4xf32>
    %19 = arith.mulf %7, %18 : vector<432x4xf32>
    %20 = vector.shape_cast %19 : vector<432x4xf32> to vector<18x24x4xf32>
    %21 = tpu.iota {dimensions = array<i32: 0>} : vector<18x24x4xi32>
    %22 = tpu.iota {dimensions = array<i32: 1>} : vector<18x24x4xi32>
    %c1_i32 = arith.constant 1 : i32
    %23 = vector.broadcast %c1_i32 : i32 to vector<18x24x4xi32>
    %24 = arith.cmpi sge, %21, %23 : vector<18x24x4xi32>
    %c16_i32 = arith.constant 16 : i32
    %25 = vector.broadcast %c16_i32 : i32 to vector<18x24x4xi32>
    %26 = arith.cmpi sle, %21, %25 : vector<18x24x4xi32>
    %27 = arith.andi %24, %26 : vector<18x24x4xi1>
    %c1_i32_10 = arith.constant 1 : i32
    %28 = vector.broadcast %c1_i32_10 : i32 to vector<18x24x4xi32>
    %29 = arith.cmpi sge, %22, %28 : vector<18x24x4xi32>
    %30 = arith.andi %27, %29 : vector<18x24x4xi1>
    %c16_i32_11 = arith.constant 16 : i32
    %31 = vector.broadcast %c16_i32_11 : i32 to vector<18x24x4xi32>
    %32 = arith.cmpi sle, %22, %31 : vector<18x24x4xi32>
    %33 = arith.andi %30, %32 : vector<18x24x4xi1>
    %cst_12 = arith.constant 0.000000e+00 : f32
    %34 = vector.broadcast %cst_12 : f32 to vector<18x24x4xf32>
    %35 = arith.select %33, %20, %34 : vector<18x24x4xi1>, vector<18x24x4xf32>
    %c0_13 = arith.constant 0 : index
    %c0_14 = arith.constant 0 : index
    %c0_15 = arith.constant 0 : index
    %36 = vector.load %arg7[%c0_13, %c0_14, %c0_15] : memref<18x24x4xf32, #tpu.memory_space<vmem>>, vector<18x24x4xf32>
    tpu.vector_store %arg7[%c0_13, %c0_14, %c0_15], %35 {strides = array<i32>} : memref<18x24x4xf32, #tpu.memory_space<vmem>>, vector<18x24x4xf32>,
    %cst_16 = arith.constant 0.000000e+00 : f32
    %37 = vector.broadcast %cst_16 : f32 to vector<256x8xf32>
    %c0_17 = arith.constant 0 : index
    %c0_18 = arith.constant 0 : index
    %38 = vector.load %arg5[%c0_17, %c0_18] : memref<1x8xf32, #tpu.memory_space<vmem>>, vector<1x8xf32>
    %39 = vector.broadcast %38 : vector<1x8xf32> to vector<256x8xf32>
    %40 = arith.addf %37, %39 : vector<256x8xf32>
    %c0_19 = arith.constant 0 : index
    %c0_20 = arith.constant 0 : index
    %c0_21 = arith.constant 0 : index
    %41 = vector.load %arg7[%c0_19, %c0_20, %c0_21] : memref<18x24x4xf32, #tpu.memory_space<vmem>>, vector<16x16x4xf32>
    %42 = vector.shape_cast %41 : vector<16x16x4xf32> to vector<256x4xf32>
    %c0_22 = arith.constant 0 : index
    %c0_23 = arith.constant 0 : index
    %c0_24 = arith.constant 0 : index
    %43 = vector.load %arg4[%c0_22, %c0_23, %c0_24] : memref<9x4x8xf32, #tpu.memory_space<vmem>>, vector<1x4x8xf32>
    %44 = vector.shape_cast %43 : vector<1x4x8xf32> to vector<4x8xf32>
    %cst_25 = arith.constant dense<0.000000e+00> : vector<256x8xf32>
    %45 = tpu.matmul %42, %44, %cst_25 {dimension_numbers = #tpu.dot_dimension_numbers<[1], [0], [0], [1], [0, 0, 1, 1], [], []>} : vector<256x4xf32>, vector<4x8xf32>, vector<256x8xf32> -> vector<256x8xf32>
    %46 = arith.addf %40, %45 : vector<256x8xf32>
    %c0_26 = arith.constant 0 : index
    %c1 = arith.constant 1 : index
    %c0_27 = arith.constant 0 : index
    %47 = vector.load %arg7[%c0_26, %c1, %c0_27] : memref<18x24x4xf32, #tpu.memory_space<vmem>>, vector<16x16x4xf32>
    %48 = vector.shape_cast %47 : vector<16x16x4xf32> to vector<256x4xf32>
    %c1_28 = arith.constant 1 : index
    %c0_29 = arith.constant 0 : index
    %c0_30 = arith.constant 0 : index
    %49 = vector.load %arg4[%c1_28, %c0_29, %c0_30] : memref<9x4x8xf32, #tpu.memory_space<vmem>>, vector<1x4x8xf32>
    %50 = vector.shape_cast %49 : vector<1x4x8xf32> to vector<4x8xf32>
    %cst_31 = arith.constant dense<0.000000e+00> : vector<256x8xf32>
    %51 = tpu.matmul %48, %50, %cst_31 {dimension_numbers = #tpu.dot_dimension_numbers<[1], [0], [0], [1], [0, 0, 1, 1], [], []>} : vector<256x4xf32>, vector<4x8xf32>, vector<256x8xf32> -> vector<256x8xf32>
    %52 = arith.addf %46, %51 : vector<256x8xf32>
    %c0_32 = arith.constant 0 : index
    %c2 = arith.constant 2 : index
    %c0_33 = arith.constant 0 : index
    %53 = vector.load %arg7[%c0_32, %c2, %c0_33] : memref<18x24x4xf32, #tpu.memory_space<vmem>>, vector<16x16x4xf32>
    %54 = vector.shape_cast %53 : vector<16x16x4xf32> to vector<256x4xf32>
    %c2_34 = arith.constant 2 : index
    %c0_35 = arith.constant 0 : index
    %c0_36 = arith.constant 0 : index
    %55 = vector.load %arg4[%c2_34, %c0_35, %c0_36] : memref<9x4x8xf32, #tpu.memory_space<vmem>>, vector<1x4x8xf32>
    %56 = vector.shape_cast %55 : vector<1x4x8xf32> to vector<4x8xf32>
    %cst_37 = arith.constant dense<0.000000e+00> : vector<256x8xf32>
    %57 = tpu.matmul %54, %56, %cst_37 {dimension_numbers = #tpu.dot_dimension_numbers<[1], [0], [0], [1], [0, 0, 1, 1], [], []>} : vector<256x4xf32>, vector<4x8xf32>, vector<256x8xf32> -> vector<256x8xf32>
    %58 = arith.addf %52, %57 : vector<256x8xf32>
    %c1_38 = arith.constant 1 : index
    %c0_39 = arith.constant 0 : index
    %c0_40 = arith.constant 0 : index
    %59 = vector.load %arg7[%c1_38, %c0_39, %c0_40] : memref<18x24x4xf32, #tpu.memory_space<vmem>>, vector<16x16x4xf32>
    %60 = vector.shape_cast %59 : vector<16x16x4xf32> to vector<256x4xf32>
    %c3 = arith.constant 3 : index
    %c0_41 = arith.constant 0 : index
    %c0_42 = arith.constant 0 : index
    %61 = vector.load %arg4[%c3, %c0_41, %c0_42] : memref<9x4x8xf32, #tpu.memory_space<vmem>>, vector<1x4x8xf32>
    %62 = vector.shape_cast %61 : vector<1x4x8xf32> to vector<4x8xf32>
    %cst_43 = arith.constant dense<0.000000e+00> : vector<256x8xf32>
    %63 = tpu.matmul %60, %62, %cst_43 {dimension_numbers = #tpu.dot_dimension_numbers<[1], [0], [0], [1], [0, 0, 1, 1], [], []>} : vector<256x4xf32>, vector<4x8xf32>, vector<256x8xf32> -> vector<256x8xf32>
    %64 = arith.addf %58, %63 : vector<256x8xf32>
    %c1_44 = arith.constant 1 : index
    %c1_45 = arith.constant 1 : index
    %c0_46 = arith.constant 0 : index
    %65 = vector.load %arg7[%c1_44, %c1_45, %c0_46] : memref<18x24x4xf32, #tpu.memory_space<vmem>>, vector<16x16x4xf32>
    %66 = vector.shape_cast %65 : vector<16x16x4xf32> to vector<256x4xf32>
    %c4 = arith.constant 4 : index
    %c0_47 = arith.constant 0 : index
    %c0_48 = arith.constant 0 : index
    %67 = vector.load %arg4[%c4, %c0_47, %c0_48] : memref<9x4x8xf32, #tpu.memory_space<vmem>>, vector<1x4x8xf32>
    %68 = vector.shape_cast %67 : vector<1x4x8xf32> to vector<4x8xf32>
    %cst_49 = arith.constant dense<0.000000e+00> : vector<256x8xf32>
    %69 = tpu.matmul %66, %68, %cst_49 {dimension_numbers = #tpu.dot_dimension_numbers<[1], [0], [0], [1], [0, 0, 1, 1], [], []>} : vector<256x4xf32>, vector<4x8xf32>, vector<256x8xf32> -> vector<256x8xf32>
    %70 = arith.addf %64, %69 : vector<256x8xf32>
    %c1_50 = arith.constant 1 : index
    %c2_51 = arith.constant 2 : index
    %c0_52 = arith.constant 0 : index
    %71 = vector.load %arg7[%c1_50, %c2_51, %c0_52] : memref<18x24x4xf32, #tpu.memory_space<vmem>>, vector<16x16x4xf32>
    %72 = vector.shape_cast %71 : vector<16x16x4xf32> to vector<256x4xf32>
    %c5 = arith.constant 5 : index
    %c0_53 = arith.constant 0 : index
    %c0_54 = arith.constant 0 : index
    %73 = vector.load %arg4[%c5, %c0_53, %c0_54] : memref<9x4x8xf32, #tpu.memory_space<vmem>>, vector<1x4x8xf32>
    %74 = vector.shape_cast %73 : vector<1x4x8xf32> to vector<4x8xf32>
    %cst_55 = arith.constant dense<0.000000e+00> : vector<256x8xf32>
    %75 = tpu.matmul %72, %74, %cst_55 {dimension_numbers = #tpu.dot_dimension_numbers<[1], [0], [0], [1], [0, 0, 1, 1], [], []>} : vector<256x4xf32>, vector<4x8xf32>, vector<256x8xf32> -> vector<256x8xf32>
    %76 = arith.addf %70, %75 : vector<256x8xf32>
    %c2_56 = arith.constant 2 : index
    %c0_57 = arith.constant 0 : index
    %c0_58 = arith.constant 0 : index
    %77 = vector.load %arg7[%c2_56, %c0_57, %c0_58] : memref<18x24x4xf32, #tpu.memory_space<vmem>>, vector<16x16x4xf32>
    %78 = vector.shape_cast %77 : vector<16x16x4xf32> to vector<256x4xf32>
    %c6 = arith.constant 6 : index
    %c0_59 = arith.constant 0 : index
    %c0_60 = arith.constant 0 : index
    %79 = vector.load %arg4[%c6, %c0_59, %c0_60] : memref<9x4x8xf32, #tpu.memory_space<vmem>>, vector<1x4x8xf32>
    %80 = vector.shape_cast %79 : vector<1x4x8xf32> to vector<4x8xf32>
    %cst_61 = arith.constant dense<0.000000e+00> : vector<256x8xf32>
    %81 = tpu.matmul %78, %80, %cst_61 {dimension_numbers = #tpu.dot_dimension_numbers<[1], [0], [0], [1], [0, 0, 1, 1], [], []>} : vector<256x4xf32>, vector<4x8xf32>, vector<256x8xf32> -> vector<256x8xf32>
    %82 = arith.addf %76, %81 : vector<256x8xf32>
    %c2_62 = arith.constant 2 : index
    %c1_63 = arith.constant 1 : index
    %c0_64 = arith.constant 0 : index
    %83 = vector.load %arg7[%c2_62, %c1_63, %c0_64] : memref<18x24x4xf32, #tpu.memory_space<vmem>>, vector<16x16x4xf32>
    %84 = vector.shape_cast %83 : vector<16x16x4xf32> to vector<256x4xf32>
    %c7 = arith.constant 7 : index
    %c0_65 = arith.constant 0 : index
    %c0_66 = arith.constant 0 : index
    %85 = vector.load %arg4[%c7, %c0_65, %c0_66] : memref<9x4x8xf32, #tpu.memory_space<vmem>>, vector<1x4x8xf32>
    %86 = vector.shape_cast %85 : vector<1x4x8xf32> to vector<4x8xf32>
    %cst_67 = arith.constant dense<0.000000e+00> : vector<256x8xf32>
    %87 = tpu.matmul %84, %86, %cst_67 {dimension_numbers = #tpu.dot_dimension_numbers<[1], [0], [0], [1], [0, 0, 1, 1], [], []>} : vector<256x4xf32>, vector<4x8xf32>, vector<256x8xf32> -> vector<256x8xf32>
    %88 = arith.addf %82, %87 : vector<256x8xf32>
    %c2_68 = arith.constant 2 : index
    %c2_69 = arith.constant 2 : index
    %c0_70 = arith.constant 0 : index
    %89 = vector.load %arg7[%c2_68, %c2_69, %c0_70] : memref<18x24x4xf32, #tpu.memory_space<vmem>>, vector<16x16x4xf32>
    %90 = vector.shape_cast %89 : vector<16x16x4xf32> to vector<256x4xf32>
    %c8 = arith.constant 8 : index
    %c0_71 = arith.constant 0 : index
    %c0_72 = arith.constant 0 : index
    %91 = vector.load %arg4[%c8, %c0_71, %c0_72] : memref<9x4x8xf32, #tpu.memory_space<vmem>>, vector<1x4x8xf32>
    %92 = vector.shape_cast %91 : vector<1x4x8xf32> to vector<4x8xf32>
    %cst_73 = arith.constant dense<0.000000e+00> : vector<256x8xf32>
    %93 = tpu.matmul %90, %92, %cst_73 {dimension_numbers = #tpu.dot_dimension_numbers<[1], [0], [0], [1], [0, 0, 1, 1], [], []>} : vector<256x4xf32>, vector<4x8xf32>, vector<256x8xf32> -> vector<256x8xf32>
    %94 = arith.addf %88, %93 : vector<256x8xf32>
    %cst_74 = arith.constant 0.000000e+00 : f32
    %95 = vector.broadcast %cst_74 : f32 to vector<256x8xf32>
    %96 = arith.maximumf %94, %95 : vector<256x8xf32>
    %97 = math.absf %94 : vector<256x8xf32>
    %cst_75 = arith.constant 0.000000e+00 : f32
    %98 = vector.broadcast %cst_75 : f32 to vector<256x8xf32>
    %99 = arith.subf %98, %97 : vector<256x8xf32>
    %100 = math.exp %99 : vector<256x8xf32>
    %cst_76 = arith.constant 1.000000e+00 : f32
    %101 = vector.broadcast %cst_76 : f32 to vector<256x8xf32>
    %102 = arith.addf %101, %100 : vector<256x8xf32>
    %103 = math.log %102 : vector<256x8xf32>
    %104 = arith.addf %96, %103 : vector<256x8xf32>
    %105 = math.tanh %104 : vector<256x8xf32>
    %106 = arith.mulf %94, %105 : vector<256x8xf32>
    %c0_77 = arith.constant 0 : index
    %c1_78 = arith.constant 1 : index
    %c1_79 = arith.constant 1 : index
    %c0_80 = arith.constant 0 : index
    %107 = vector.load %arg1[%c0_77, %c1_78, %c1_79, %c0_80] : memref<1x18x24x8xf32, #tpu.memory_space<vmem>>, vector<1x16x16x8xf32>
    %108 = vector.shape_cast %107 : vector<1x16x16x8xf32> to vector<16x16x8xf32>
    %109 = vector.shape_cast %106 : vector<256x8xf32> to vector<16x16x8xf32>
    %110 = arith.addf %109, %108 : vector<16x16x8xf32>
    %c0_81 = arith.constant 0 : index
    %c0_82 = arith.constant 0 : index
    %c0_83 = arith.constant 0 : index
    %c0_84 = arith.constant 0 : index
    %111 = vector.load %arg6[%c0_81, %c0_82, %c0_83, %c0_84] : memref<1x16x16x8xf32, #tpu.memory_space<vmem>>, vector<1x16x16x8xf32>
    %112 = vector.shape_cast %111 : vector<1x16x16x8xf32> to vector<16x16x8xf32>
    %113 = vector.shape_cast %110 : vector<16x16x8xf32> to vector<1x16x16x8xf32>
    tpu.vector_store %arg6[%c0_81, %c0_82, %c0_83, %c0_84], %113 {strides = array<i32>} : memref<1x16x16x8xf32, #tpu.memory_space<vmem>>, vector<1x16x16x8xf32>,
    return
  }
  func.func @transform_0(%arg0: i32) -> (i32, i32, i32, i32) {
    %c0_i32 = arith.constant 0 : i32
    %c0_i32_0 = arith.constant 0 : i32
    %c0_i32_1 = arith.constant 0 : i32
    %c0_i32_2 = arith.constant 0 : i32
    return %arg0, %c0_i32, %c0_i32_0, %c0_i32_1 : i32, i32, i32, i32
  }
  func.func @transform_1(%arg0: i32) -> (i32, i32) {
    %c0_i32 = arith.constant 0 : i32
    %c0_i32_0 = arith.constant 0 : i32
    %c0_i32_1 = arith.constant 0 : i32
    return %c0_i32, %c0_i32_0 : i32, i32
  }
  func.func @transform_2(%arg0: i32) -> (i32, i32) {
    %c0_i32 = arith.constant 0 : i32
    %c0_i32_0 = arith.constant 0 : i32
    %c0_i32_1 = arith.constant 0 : i32
    return %c0_i32, %c0_i32_0 : i32, i32
  }
  func.func @transform_3(%arg0: i32) -> (i32, i32, i32) {
    %c0_i32 = arith.constant 0 : i32
    %c0_i32_0 = arith.constant 0 : i32
    %c0_i32_1 = arith.constant 0 : i32
    %c0_i32_2 = arith.constant 0 : i32
    return %c0_i32, %c0_i32_0, %c0_i32_1 : i32, i32, i32
  }
  func.func @transform_4(%arg0: i32) -> (i32, i32) {
    %c0_i32 = arith.constant 0 : i32
    %c0_i32_0 = arith.constant 0 : i32
    %c0_i32_1 = arith.constant 0 : i32
    return %c0_i32, %c0_i32_0 : i32, i32
  }
  func.func @transform_5(%arg0: i32) -> (i32, i32, i32, i32) {
    %c0_i32 = arith.constant 0 : i32
    %c0_i32_0 = arith.constant 0 : i32
    %c0_i32_1 = arith.constant 0 : i32
    %c0_i32_2 = arith.constant 0 : i32
    return %arg0, %c0_i32, %c0_i32_0, %c0_i32_1 : i32, i32, i32, i32
  }
}

</mosaic_0001>

<llo_original>
// kernel: resblock_forward.2
$region0: #{resblock_forward.2}
  #allocation0 [shape = 'u32[]', space=smem, size = 0x4, offset = 0x4, fixed_abs, tag = 'smem constant byte address 0x4 - core index']
  #allocation1 [shape = 'u32[144,128]{1,0:T(1,128)}', space=vmem, size = 0x12000, scoped, tag = 'internal scratch']
  #allocation2 [shape = 'f32[18,24,4]{2,1,0:T(8,128)}', space=vmem, size = 0x36000, scoped, tag = 'scratch operand']
  %s0 = inlined_call_operand.vmem [shape: f32[2,18,24,8], index: 0, kind: input, shape index: {}]
  %s1 = inlined_call_operand.vmem [shape: f32[8,4], index: 1, kind: input, shape index: {}]
  %s2 = inlined_call_operand.vmem [shape: f32[1,4], index: 2, kind: input, shape index: {}]
  %s3 = inlined_call_operand.vmem [shape: f32[9,4,8], index: 3, kind: input, shape index: {}]
  %s4 = inlined_call_operand.vmem [shape: f32[1,8], index: 4, kind: input, shape index: {}]
  %s5 = inlined_call_operand.vmem [shape: f32[2,16,16,8], index: 5, kind: output, shape index: {}]
  %s6 = sld [smem:[#allocation0]]
  $region53: #{resblock_forward.2} parent=0
    _
  %s8 = ssub.s32 1, %s6
  %s9 = scalar_select 0, %s8, %s6
  loop: start=0, step=1, limit=4
  $region2: #{resblock_forward.2} parent=0 // loop_pre_header
    _
  $region3: #{resblock_forward.2} parent=0 // loop_header
    %s11 = sphi 0, %s15
    %p12 = scmp.ge.s32.totalorder %s11, 4
    %s21 = sphi 0, %s23
    %s24 = sphi 0, %s21
    %s25 = sphi 0, %s24
    %s41 = sphi 0, %s25
    %s45 = sphi 0, %s45
    %s47 = sphi 0, %s45
    %s48 = sphi 0, %s47
    %s62 = sphi 0, %s48
    %s66 = sphi 0, %s66
    %s68 = sphi 0, %s66
    %s69 = sphi 0, %s68
    %s83 = sphi 0, %s69
    %s87 = sphi 0, %s87
    %s89 = sphi 0, %s87
    %s90 = sphi 0, %s89
    %s104 = sphi 0, %s90
    %s108 = sphi 0, %s108
    %s110 = sphi 0, %s108
    %s111 = sphi 0, %s110
    %s125 = sphi 0, %s111
    %s131 = sphi 0, %s133
    %s134 = sphi 0, %s131
    %s135 = sphi 0, %s134
    %s151 = sphi 0, %s135
  $region4: #{resblock_forward.2} parent=0 // loop_header_branch
    %14 = sbr.rel (%p12) target = $region8
  $region5: #{resblock_forward.2} parent=0 // loop_body
    %s16 = ssub.s32 %s11, 1
    %s17 = ssub.s32 %s11, 2
    %s18 = sadd.s32 %s11, 1
    %s19 = ssub.s32 %s11, %s18
    %p20 = scmp.eq.s32.totalorder %s19, 0
    %s22 = sadd.s32 %s21, 1
    %s23 = scalar_select %p20, %s21, %s22
    %p26 = pneg %p20
    %p27 = scmp.eq.s32.totalorder %s11, 1
    %p28 = por %p26, %p27
    %p29 = scmp.ne.s32.totalorder %s21, %s24
    %p30 = scmp.eq.s32.totalorder %s11, 0
    %p31 = por %p29, %p30
    %p32 = scmp.ne.s32.totalorder %s21, %s24
    %p33 = scmp.eq.s32.totalorder %s16, 1
    %p34 = por %p32, %p33
    %p35 = scmp.ne.s32.totalorder %s24, %s25
    %p36 = scmp.eq.s32.totalorder %s16, 0
    %p37 = por %p35, %p36
    %p38 = scmp.ne.s32.totalorder %s24, %s25
    %p39 = scmp.eq.s32.totalorder %s17, 1
    %p40 = por %p38, %p39
    %p42 = scmp.ne.s32.totalorder %s25, %s41
    %p43 = scmp.eq.s32.totalorder %s17, 0
    %p44 = por %p42, %p43
    %s46 = sadd.s32 %s45, 1
    %p49 = scmp.eq.s32.totalorder %s11, 1
    %p50 = scmp.ne.s32.totalorder %s45, %s47
    %p51 = scmp.eq.s32.totalorder %s11, 0
    %p52 = por %p50, %p51
    %p53 = scmp.ne.s32.totalorder %s45, %s47
    %p54 = scmp.eq.s32.totalorder %s16, 1
    %p55 = por %p53, %p54
    %p56 = scmp.ne.s32.totalorder %s47, %s48
    %p57 = scmp.eq.s32.totalorder %s16, 0
    %p58 = por %p56, %p57
    %p59 = scmp.ne.s32.totalorder %s47, %s48
    %p60 = scmp.eq.s32.totalorder %s17, 1
    %p61 = por %p59, %p60
    %p63 = scmp.ne.s32.totalorder %s48, %s62
    %p64 = scmp.eq.s32.totalorder %s17, 0
    %p65 = por %p63, %p64
    %s67 = sadd.s32 %s66, 1
    %p70 = scmp.eq.s32.totalorder %s11, 1
    %p71 = scmp.ne.s32.totalorder %s66, %s68
    %p72 = scmp.eq.s32.totalorder %s11, 0
    %p73 = por %p71, %p72
    %p74 = scmp.ne.s32.totalorder %s66, %s68
    %p75 = scmp.eq.s32.totalorder %s16, 1
    %p76 = por %p74, %p75
    %p77 = scmp.ne.s32.totalorder %s68, %s69
    %p78 = scmp.eq.s32.totalorder %s16, 0
    %p79 = por %p77, %p78
    %p80 = scmp.ne.s32.totalorder %s68, %s69
    %p81 = scmp.eq.s32.totalorder %s17, 1
    %p82 = por %p80, %p81
    %p84 = scmp.ne.s32.totalorder %s69, %s83
    %p85 = scmp.eq.s32.totalorder %s17, 0
    %p86 = por %p84, %p85
    %s88 = sadd.s32 %s87, 1
    %p91 = scmp.eq.s32.totalorder %s11, 1
    %p92 = scmp.ne.s32.totalorder %s87, %s89
    %p93 = scmp.eq.s32.totalorder %s11, 0
    %p94 = por %p92, %p93
    %p95 = scmp.ne.s32.totalorder %s87, %s89
    %p96 = scmp.eq.s32.totalorder %s16, 1
    %p97 = por %p95, %p96
    %p98 = scmp.ne.s32.totalorder %s89, %s90
    %p99 = scmp.eq.s32.totalorder %s16, 0
    %p100 = por %p98, %p99
    %p101 = scmp.ne.s32.totalorder %s89, %s90
    %p102 = scmp.eq.s32.totalorder %s17, 1
    %p103 = por %p101, %p102
    %p105 = scmp.ne.s32.totalorder %s90, %s104
    %p106 = scmp.eq.s32.totalorder %s17, 0
    %p107 = por %p105, %p106
    %s109 = sadd.s32 %s108, 1
    %p112 = scmp.eq.s32.totalorder %s11, 1
    %p113 = scmp.ne.s32.totalorder %s108, %s110
    %p114 = scmp.eq.s32.totalorder %s11, 0
    %p115 = por %p113, %p114
    %p116 = scmp.ne.s32.totalorder %s108, %s110
    %p117 = scmp.eq.s32.totalorder %s16, 1
    %p118 = por %p116, %p117
    %p119 = scmp.ne.s32.totalorder %s110, %s111
    %p120 = scmp.eq.s32.totalorder %s16, 0
    %p121 = por %p119, %p120
    %p122 = scmp.ne.s32.totalorder %s110, %s111
    %p123 = scmp.eq.s32.totalorder %s17, 1
    %p124 = por %p122, %p123
    %p126 = scmp.ne.s32.totalorder %s111, %s125
    %p127 = scmp.eq.s32.totalorder %s17, 0
    %p128 = por %p126, %p127
    %s129 = ssub.s32 %s11, %s18
    %p130 = scmp.eq.s32.totalorder %s129, 0
    %s132 = sadd.s32 %s131, 1
    %s133 = scalar_select %p130, %s131, %s132
    %p136 = pneg %p130
    %p137 = scmp.eq.s32.totalorder %s11, 1
    %p138 = por %p136, %p137
    %p139 = scmp.ne.s32.totalorder %s131, %s134
    %p140 = scmp.eq.s32.totalorder %s11, 0
    %p141 = por %p139, %p140
    %p142 = scmp.ne.s32.totalorder %s131, %s134
    %p143 = scmp.eq.s32.totalorder %s16, 1
    %p144 = por %p142, %p143
    %p145 = scmp.ne.s32.totalorder %s134, %s135
    %p146 = scmp.eq.s32.totalorder %s16, 0
    %p147 = por %p145, %p146
    %p148 = scmp.ne.s32.totalorder %s134, %s135
    %p149 = scmp.eq.s32.totalorder %s17, 1
    %p150 = por %p148, %p149
    %p152 = scmp.ne.s32.totalorder %s135, %s151
    %p153 = scmp.eq.s32.totalorder %s17, 0
    %p154 = por %p152, %p153
    %p155 = scmp.le.s32.totalorder 1, %s11
    %p156 = scmp.lt.s32.totalorder %s11, 3
    %p157 = pnand %p155, %p156
    %p158 = pneg %p157
    // Predicated region
    $region9: #{resblock_forward.2} parent=5 // pred_check
      _
    $region10: #{resblock_forward.2} parent=5 // pred_check_branch
      %160 = sbr.rel (%p157) target = $region12
    $region11: #{resblock_forward.2} parent=5 // pred_region
      %s161 = ssub.s32 %s11, 1
      // Predicated region
      $region13: #{resblock_forward.2} parent=11 // pred_check
        %p162 = pneg %p58
      $region14: #{resblock_forward.2} parent=11 // pred_check_branch
        %164 = sbr.rel (%p162) target = $region16
      $region15: #{resblock_forward.2} parent=11 // pred_region
        _
      $region16: #{resblock_forward.2} parent=11 // pred_fallthru
        _
      // Predicated region
      $region17: #{resblock_forward.2} parent=11 // pred_check
        %p165 = pneg %p79
      $region18: #{resblock_forward.2} parent=11 // pred_check_branch
        %167 = sbr.rel (%p165) target = $region20
      $region19: #{resblock_forward.2} parent=11 // pred_region
        _
      $region20: #{resblock_forward.2} parent=11 // pred_fallthru
        _
      // Predicated region
      $region21: #{resblock_forward.2} parent=11 // pred_check
        %p168 = pneg %p100
      $region22: #{resblock_forward.2} parent=11 // pred_check_branch
        %170 = sbr.rel (%p168) target = $region24
      $region23: #{resblock_forward.2} parent=11 // pred_region
        _
      $region24: #{resblock_forward.2} parent=11 // pred_fallthru
        _
      // Predicated region
      $region25: #{resblock_forward.2} parent=11 // pred_check
        %p171 = pneg %p121
      $region26: #{resblock_forward.2} parent=11 // pred_check_branch
        %173 = sbr.rel (%p171) target = $region28
      $region27: #{resblock_forward.2} parent=11 // pred_region
        _
      $region28: #{resblock_forward.2} parent=11 // pred_fallthru
        _
    $region12: #{resblock_forward.2} parent=5 // pred_fallthru
      _
    %p174 = scmp.lt.s32.totalorder %s11, 2
    // Predicated region
    $region29: #{resblock_forward.2} parent=5 // pred_check
      %p175 = pneg %p174
    $region30: #{resblock_forward.2} parent=5 // pred_check_branch
      %177 = sbr.rel (%p175) target = $region32
    $region31: #{resblock_forward.2} parent=5 // pred_region
      // Predicated region
      $region33: #{resblock_forward.2} parent=31 // pred_check
        %p178 = pneg %p31
      $region34: #{resblock_forward.2} parent=31 // pred_check_branch
        %180 = sbr.rel (%p178) target = $region36
      $region35: #{resblock_forward.2} parent=31 // pred_region
        %p181 = scmp.lt.s32.totalorder %s11, 1
        %s182 = scalar_select %p181, %s11, 1
        %s183 = smul.addr %s182, 54
        %s184 = smul.addr %s183, 8
        %s185 = scalar_lea.vmem %s0, %s184
      $region36: #{resblock_forward.2} parent=31 // pred_fallthru
        _
    $region32: #{resblock_forward.2} parent=5 // pred_fallthru
      _
    %p186 = scmp.le.s32.totalorder 1, %s11
    %p187 = scmp.lt.s32.totalorder %s11, 3
    %p188 = pnand %p186, %p187
    %p189 = pneg %p188
    // Predicated region
    $region37: #{resblock_forward.2} parent=5 // pred_check
      _
    $region38: #{resblock_forward.2} parent=5 // pred_check_branch
      %191 = sbr.rel (%p188) target = $region40
    $region39: #{resblock_forward.2} parent=5 // pred_region
      %s192 = ssub.s32 %s11, 1
      %p193 = scmp.lt.s32.totalorder %s16, 1
      %s194 = scalar_select %p193, %s16, 1
      %s195 = smul.addr %s194, 54
      %s196 = smul.addr %s195, 8
      %s197 = scalar_lea.vmem %s0, %s196
      %p198 = pneg %p37
      %p199 = pneg %p34
      %p200 = pneg %p58
      %p201 = pneg %p55
      %p202 = pneg %p79
      %p203 = pneg %p76
      %p204 = pneg %p100
      %p205 = pneg %p97
      %p206 = pneg %p121
      %p207 = pneg %p118
      %p208 = pneg %p147
      %p209 = pneg %p144
      %p210 = scmp.lt.s32.totalorder %s16, 1
      %s211 = scalar_select %p210, %s16, 1
      %s212 = smul.addr %s211, 32
      %s213 = smul.addr %s212, 8
      %s214 = scalar_lea.vmem %s5, %s213
      %p215 = scmp.lt.s32.totalorder %s16, 1
      %s216 = scalar_select %p215, %s16, 1
      %s217 = smul.addr %s216, 54
      %s218 = smul.addr %s217, 8
      %s219 = scalar_lea.vmem %s0, %s218
      %p220 = scmp.lt.s32.totalorder %s16, 1
      %s221 = scalar_select %p220, %s16, 1
      %s222 = smul.addr %s221, 32
      %s223 = smul.addr %s222, 8
      %s224 = scalar_lea.vmem %s5, %s223
      %v225 = vld [vmem:[%s219] sm:$0xff]
      %v226 = vld [vmem:[%s219 + $0x8] sm:$0xff]
      %v227 = vld [vmem:[%s219 + $0x10] sm:$0xff]
      %v228 = vld [vmem:[%s219 + $0x18] sm:$0xff]
      %v229 = vld [vmem:[%s219 + $0x20] sm:$0xff]
      %v230 = vld [vmem:[%s219 + $0x28] sm:$0xff]
      %v231 = vld [vmem:[%s219 + $0x30] sm:$0xff]
      %v232 = vld [vmem:[%s219 + $0x38] sm:$0xff]
      %v233 = vld [vmem:[%s219 + $0x40] sm:$0xff]
      %v234 = vld [vmem:[%s219 + $0x48] sm:$0xff]
      %v235 = vld [vmem:[%s219 + $0x50] sm:$0xff]
      %v236 = vld [vmem:[%s219 + $0x58] sm:$0xff]
      %v237 = vld [vmem:[%s219 + $0x60] sm:$0xff]
      %v238 = vld [vmem:[%s219 + $0x68] sm:$0xff]
      %v239 = vld [vmem:[%s219 + $0x70] sm:$0xff]
      %v240 = vld [vmem:[%s219 + $0x78] sm:$0xff]
      %v241 = vld [vmem:[%s219 + $0x80] sm:$0xff]
      %v242 = vld [vmem:[%s219 + $0x88] sm:$0xff]
      %v243 = vld [vmem:[%s219 + $0x90] sm:$0xff]
      %v244 = vld [vmem:[%s219 + $0x98] sm:$0xff]
      %v245 = vld [vmem:[%s219 + $0xa0] sm:$0xff]
      %v246 = vld [vmem:[%s219 + $0xa8] sm:$0xff]
      %v247 = vld [vmem:[%s219 + $0xb0] sm:$0xff]
      %v248 = vld [vmem:[%s219 + $0xb8] sm:$0xff]
      %v249 = vld [vmem:[%s219 + $0xc0] sm:$0xff]
      %v250 = vld [vmem:[%s219 + $0xc8] sm:$0xff]
      %v251 = vld [vmem:[%s219 + $0xd0] sm:$0xff]
      %v252 = vld [vmem:[%s219 + $0xd8] sm:$0xff]
      %v253 = vld [vmem:[%s219 + $0xe0] sm:$0xff]
      %v254 = vld [vmem:[%s219 + $0xe8] sm:$0xff]
      %v255 = vld [vmem:[%s219 + $0xf0] sm:$0xff]
      %v256 = vld [vmem:[%s219 + $0xf8] sm:$0xff]
      %v257 = vld [vmem:[%s219 + $0x100] sm:$0xff]
      %v258 = vld [vmem:[%s219 + $0x108] sm:$0xff]
      %v259 = vld [vmem:[%s219 + $0x110] sm:$0xff]
      %v260 = vld [vmem:[%s219 + $0x118] sm:$0xff]
      %v261 = vld [vmem:[%s219 + $0x120] sm:$0xff]
      %v262 = vld [vmem:[%s219 + $0x128] sm:$0xff]
      %v263 = vld [vmem:[%s219 + $0x130] sm:$0xff]
      %v264 = vld [vmem:[%s219 + $0x138] sm:$0xff]
      %v265 = vld [vmem:[%s219 + $0x140] sm:$0xff]
      %v266 = vld [vmem:[%s219 + $0x148] sm:$0xff]
      %v267 = vld [vmem:[%s219 + $0x150] sm:$0xff]
      %v268 = vld [vmem:[%s219 + $0x158] sm:$0xff]
      %v269 = vld [vmem:[%s219 + $0x160] sm:$0xff]
      %v270 = vld [vmem:[%s219 + $0x168] sm:$0xff]
      %v271 = vld [vmem:[%s219 + $0x170] sm:$0xff]
      %v272 = vld [vmem:[%s219 + $0x178] sm:$0xff]
      %v273 = vld [vmem:[%s219 + $0x180] sm:$0xff]
      %v274 = vld [vmem:[%s219 + $0x188] sm:$0xff]
      %v275 = vld [vmem:[%s219 + $0x190] sm:$0xff]
      %v276 = vld [vmem:[%s219 + $0x198] sm:$0xff]
      %v277 = vld [vmem:[%s219 + $0x1a0] sm:$0xff]
      %v278 = vld [vmem:[%s219 + $0x1a8] sm:$0xff]
      %v279 = vld [vmem:[%s1] sm:$0xff]
      %v280 = vld [vmem:[%s2] sm:$0x1]
      %v282 = vlaneseq
      %v283 = vshrl.u32 %v282, 7
      %v284 = vsub.s32 0, %v283
      %v285 = vrot.slane %v280, %v284
      %vm287 = vcmask 64512
      %v289 = vsel %vm287, %v225, 0
      %v292 = vsel %vm287, %v226, 0
      %v295 = vsel %vm287, %v227, 0
      %v298 = vsel %vm287, %v228, 0
      %v301 = vsel %vm287, %v229, 0
      %v304 = vsel %vm287, %v230, 0
      %v307 = vsel %vm287, %v231, 0
      %v310 = vsel %vm287, %v232, 0
      %v313 = vsel %vm287, %v233, 0
      %v316 = vsel %vm287, %v234, 0
      %v319 = vsel %vm287, %v235, 0
      %v322 = vsel %vm287, %v236, 0
      %v325 = vsel %vm287, %v237, 0
      %v328 = vsel %vm287, %v238, 0
      %v331 = vsel %vm287, %v239, 0
      %v334 = vsel %vm287, %v240, 0
      %v337 = vsel %vm287, %v241, 0
      %v340 = vsel %vm287, %v242, 0
      %v343 = vsel %vm287, %v243, 0
      %v346 = vsel %vm287, %v244, 0
      %v349 = vsel %vm287, %v245, 0
      %v352 = vsel %vm287, %v246, 0
      %v355 = vsel %vm287, %v247, 0
      %v358 = vsel %vm287, %v248, 0
      %v361 = vsel %vm287, %v249, 0
      %v364 = vsel %vm287, %v250, 0
      %v367 = vsel %vm287, %v251, 0
      %v370 = vsel %vm287, %v252, 0
      %v373 = vsel %vm287, %v253, 0
      %v376 = vsel %vm287, %v254, 0
      %v379 = vsel %vm287, %v255, 0
      %v382 = vsel %vm287, %v256, 0
      %v385 = vsel %vm287, %v257, 0
      %v388 = vsel %vm287, %v258, 0
      %v391 = vsel %vm287, %v259, 0
      %v394 = vsel %vm287, %v260, 0
      %v397 = vsel %vm287, %v261, 0
      %v400 = vsel %vm287, %v262, 0
      %v403 = vsel %vm287, %v263, 0
      %v406 = vsel %vm287, %v264, 0
      %v409 = vsel %vm287, %v265, 0
      %v412 = vsel %vm287, %v266, 0
      %v415 = vsel %vm287, %v267, 0
      %v418 = vsel %vm287, %v268, 0
      %v421 = vsel %vm287, %v269, 0
      %v424 = vsel %vm287, %v270, 0
      %v427 = vsel %vm287, %v271, 0
      %v430 = vsel %vm287, %v272, 0
      %v433 = vsel %vm287, %v273, 0
      %v436 = vsel %vm287, %v274, 0
      %v439 = vsel %vm287, %v275, 0
      %v442 = vsel %vm287, %v276, 0
      %v445 = vsel %vm287, %v277, 0
      %v448 = vsel %vm287, %v278, 0
      %450 = vmatprep.subr.mxu0 0.0
      %451 = vmatpush1.msra.mxu0 0.0
      %452 = vmatprep.subr.mxu0 0.0
      %453 = vmatpush1.msra.mxu0 0.0
      %454 = vmatprep.subr.mxu0 0.0
      %455 = vmatpush1.msra.mxu0 0.0
      %456 = vmatprep.subr.mxu0 0.0
      %457 = vmatpush1.msra.mxu0 0.0
      %458 = vmatprep.subr.mxu0 0.0
      %459 = vmatpush1.msra.mxu0 0.0
      %460 = vmatprep.subr.mxu0 0.0
      %461 = vmatpush1.msra.mxu0 0.0
      %462 = vmatprep.subr.mxu0 0.0
      %463 = vmatpush1.msra.mxu0 0.0
      %464 = vmatprep.subr.mxu0 0.0
      %465 = vmatpush1.msra.mxu0 0.0
      %466 = vmatprep.subr.mxu0 0.0
      %467 = vmatpush1.msra.mxu0 0.0
      %468 = vmatprep.subr.mxu0 0.0
      %469 = vmatpush1.msra.mxu0 0.0
      %470 = vmatprep.subr.mxu0 0.0
      %471 = vmatpush1.msra.mxu0 0.0
      %472 = vmatprep.subr.mxu0 0.0
      %473 = vmatpush1.msra.mxu0 0.0
      %474 = vmatprep.subr.mxu0 0.0
      %475 = vmatpush1.msra.mxu0 0.0
      %476 = vmatprep.subr.mxu0 0.0
      %477 = vmatpush1.msra.mxu0 0.0
      %478 = vmatprep.subr.mxu0 0.0
      %479 = vmatpush1.msra.mxu0 0.0
      %480 = vmatprep.subr.mxu0 0.0
      %481 = vmatpush1.msra.mxu0 %v279
      %482 = vmatprep.subr.mxu0 0.0
      %483 = vmatpush2.msra.mxu0 0.0
      %484 = vmatprep.subr.mxu0 0.0
      %485 = vmatpush2.msra.mxu0 0.0
      %486 = vmatprep.subr.mxu0 0.0
      %487 = vmatpush2.msra.mxu0 0.0
      %488 = vmatprep.subr.mxu0 0.0
      %489 = vmatpush2.msra.mxu0 0.0
      %490 = vmatprep.subr.mxu0 0.0
      %491 = vmatpush2.msra.mxu0 0.0
      %492 = vmatprep.subr.mxu0 0.0
      %493 = vmatpush2.msra.mxu0 0.0
      %494 = vmatprep.subr.mxu0 0.0
      %495 = vmatpush2.msra.mxu0 0.0
      %496 = vmatprep.subr.mxu0 0.0
      %497 = vmatpush2.msra.mxu0 0.0
      %498 = vmatprep.subr.mxu0 0.0
      %499 = vmatpush2.msra.mxu0 0.0
      %500 = vmatprep.subr.mxu0 0.0
      %501 = vmatpush2.msra.mxu0 0.0
      %502 = vmatprep.subr.mxu0 0.0
      %503 = vmatpush2.msra.mxu0 0.0
      %504 = vmatprep.subr.mxu0 0.0
      %505 = vmatpush2.msra.mxu0 0.0
      %506 = vmatprep.subr.mxu0 0.0
      %507 = vmatpush2.msra.mxu0 0.0
      %508 = vmatprep.subr.mxu0 0.0
      %509 = vmatpush2.msra.mxu0 0.0
      %510 = vmatprep.subr.mxu0 0.0
      %511 = vmatpush2.msra.mxu0 0.0
      %512 = vmatprep.subr.mxu0 0.0
      %513 = vmatpush2.msra.mxu0 0.0
      %514 = vmatprep.mubr.f32.mxu0 0.0
      %515 = vmatmul.mubr.f32.gmra.mxu0 %v289
      %v516 = vpop.f32.mrf.mxu0
      %v517 = vadd.f32 %v285, %v516
      %v518 = vpop.f32.mrf.mxu0
      %519 = vmatprep.mubr.f32.mxu0 0.0
      %520 = vmatmul.mubr.f32.gmra.mxu0 %v292
      %v521 = vpop.f32.mrf.mxu0
      %v522 = vadd.f32 %v285, %v521
      %v523 = vpop.f32.mrf.mxu0
      %524 = vmatprep.mubr.f32.mxu0 0.0
      %525 = vmatmul.mubr.f32.gmra.mxu0 %v295
      %v526 = vpop.f32.mrf.mxu0
      %v527 = vadd.f32 %v285, %v526
      %v528 = vpop.f32.mrf.mxu0
      %529 = vmatprep.mubr.f32.mxu0 0.0
      %530 = vmatmul.mubr.f32.gmra.mxu0 %v298
      %v531 = vpop.f32.mrf.mxu0
      %v532 = vadd.f32 %v285, %v531
      %v533 = vpop.f32.mrf.mxu0
      %534 = vmatprep.mubr.f32.mxu0 0.0
      %535 = vmatmul.mubr.f32.gmra.mxu0 %v301
      %v536 = vpop.f32.mrf.mxu0
      %v537 = vadd.f32 %v285, %v536
      %v538 = vpop.f32.mrf.mxu0
      %539 = vmatprep.mubr.f32.mxu0 0.0
      %540 = vmatmul.mubr.f32.gmra.mxu0 %v304
      %v541 = vpop.f32.mrf.mxu0
      %v542 = vadd.f32 %v285, %v541
      %v543 = vpop.f32.mrf.mxu0
      %544 = vmatprep.mubr.f32.mxu0 0.0
      %545 = vmatmul.mubr.f32.gmra.mxu0 %v307
      %v546 = vpop.f32.mrf.mxu0
      %v547 = vadd.f32 %v285, %v546
      %v548 = vpop.f32.mrf.mxu0
      %549 = vmatprep.mubr.f32.mxu0 0.0
      %550 = vmatmul.mubr.f32.gmra.mxu0 %v310
      %v551 = vpop.f32.mrf.mxu0
      %v552 = vadd.f32 %v285, %v551
      %v553 = vpop.f32.mrf.mxu0
      %554 = vmatprep.mubr.f32.mxu0 0.0
      %555 = vmatmul.mubr.f32.gmra.mxu0 %v313
      %v556 = vpop.f32.mrf.mxu0
      %v557 = vadd.f32 %v285, %v556
      %v558 = vpop.f32.mrf.mxu0
      %559 = vmatprep.mubr.f32.mxu0 0.0
      %560 = vmatmul.mubr.f32.gmra.mxu0 %v316
      %v561 = vpop.f32.mrf.mxu0
      %v562 = vadd.f32 %v285, %v561
      %v563 = vpop.f32.mrf.mxu0
      %564 = vmatprep.mubr.f32.mxu0 0.0
      %565 = vmatmul.mubr.f32.gmra.mxu0 %v319
      %v566 = vpop.f32.mrf.mxu0
      %v567 = vadd.f32 %v285, %v566
      %v568 = vpop.f32.mrf.mxu0
      %569 = vmatprep.mubr.f32.mxu0 0.0
      %570 = vmatmul.mubr.f32.gmra.mxu0 %v322
      %v571 = vpop.f32.mrf.mxu0
      %v572 = vadd.f32 %v285, %v571
      %v573 = vpop.f32.mrf.mxu0
      %574 = vmatprep.mubr.f32.mxu0 0.0
      %575 = vmatmul.mubr.f32.gmra.mxu0 %v325
      %v576 = vpop.f32.mrf.mxu0
      %v577 = vadd.f32 %v285, %v576
      %v578 = vpop.f32.mrf.mxu0
      %579 = vmatprep.mubr.f32.mxu0 0.0
      %580 = vmatmul.mubr.f32.gmra.mxu0 %v328
      %v581 = vpop.f32.mrf.mxu0
      %v582 = vadd.f32 %v285, %v581
      %v583 = vpop.f32.mrf.mxu0
      %584 = vmatprep.mubr.f32.mxu0 0.0
      %585 = vmatmul.mubr.f32.gmra.mxu0 %v331
      %v586 = vpop.f32.mrf.mxu0
      %v587 = vadd.f32 %v285, %v586
      %v588 = vpop.f32.mrf.mxu0
      %589 = vmatprep.mubr.f32.mxu0 0.0
      %590 = vmatmul.mubr.f32.gmra.mxu0 %v334
      %v591 = vpop.f32.mrf.mxu0
      %v592 = vadd.f32 %v285, %v591
      %v593 = vpop.f32.mrf.mxu0
      %594 = vmatprep.mubr.f32.mxu0 0.0
      %595 = vmatmul.mubr.f32.gmra.mxu0 %v337
      %v596 = vpop.f32.mrf.mxu0
      %v597 = vadd.f32 %v285, %v596
      %v598 = vpop.f32.mrf.mxu0
      %599 = vmatprep.mubr.f32.mxu0 0.0
      %600 = vmatmul.mubr.f32.gmra.mxu0 %v340
      %v601 = vpop.f32.mrf.mxu0
      %v602 = vadd.f32 %v285, %v601
      %v603 = vpop.f32.mrf.mxu0
      %604 = vmatprep.mubr.f32.mxu0 0.0
      %605 = vmatmul.mubr.f32.gmra.mxu0 %v343
      %v606 = vpop.f32.mrf.mxu0
      %v607 = vadd.f32 %v285, %v606
      %v608 = vpop.f32.mrf.mxu0
      %609 = vmatprep.mubr.f32.mxu0 0.0
      %610 = vmatmul.mubr.f32.gmra.mxu0 %v346
      %v611 = vpop.f32.mrf.mxu0
      %v612 = vadd.f32 %v285, %v611
      %v613 = vpop.f32.mrf.mxu0
      %614 = vmatprep.mubr.f32.mxu0 0.0
      %615 = vmatmul.mubr.f32.gmra.mxu0 %v349
      %v616 = vpop.f32.mrf.mxu0
      %v617 = vadd.f32 %v285, %v616
      %v618 = vpop.f32.mrf.mxu0
      %619 = vmatprep.mubr.f32.mxu0 0.0
      %620 = vmatmul.mubr.f32.gmra.mxu0 %v352
      %v621 = vpop.f32.mrf.mxu0
      %v622 = vadd.f32 %v285, %v621
      %v623 = vpop.f32.mrf.mxu0
      %624 = vmatprep.mubr.f32.mxu0 0.0
      %625 = vmatmul.mubr.f32.gmra.mxu0 %v355
      %v626 = vpop.f32.mrf.mxu0
      %v627 = vadd.f32 %v285, %v626
      %v628 = vpop.f32.mrf.mxu0
      %629 = vmatprep.mubr.f32.mxu0 0.0
      %630 = vmatmul.mubr.f32.gmra.mxu0 %v358
      %v631 = vpop.f32.mrf.mxu0
      %v632 = vadd.f32 %v285, %v631
      %v633 = vpop.f32.mrf.mxu0
      %634 = vmatprep.mubr.f32.mxu0 0.0
      %635 = vmatmul.mubr.f32.gmra.mxu0 %v361
      %v636 = vpop.f32.mrf.mxu0
      %v637 = vadd.f32 %v285, %v636
      %v638 = vpop.f32.mrf.mxu0
      %639 = vmatprep.mubr.f32.mxu0 0.0
      %640 = vmatmul.mubr.f32.gmra.mxu0 %v364
      %v641 = vpop.f32.mrf.mxu0
      %v642 = vadd.f32 %v285, %v641
      %v643 = vpop.f32.mrf.mxu0
      %644 = vmatprep.mubr.f32.mxu0 0.0
      %645 = vmatmul.mubr.f32.gmra.mxu0 %v367
      %v646 = vpop.f32.mrf.mxu0
      %v647 = vadd.f32 %v285, %v646
      %v648 = vpop.f32.mrf.mxu0
      %649 = vmatprep.mubr.f32.mxu0 0.0
      %650 = vmatmul.mubr.f32.gmra.mxu0 %v370
      %v651 = vpop.f32.mrf.mxu0
      %v652 = vadd.f32 %v285, %v651
      %v653 = vpop.f32.mrf.mxu0
      %654 = vmatprep.mubr.f32.mxu0 0.0
      %655 = vmatmul.mubr.f32.gmra.mxu0 %v373
      %v656 = vpop.f32.mrf.mxu0
      %v657 = vadd.f32 %v285, %v656
      %v658 = vpop.f32.mrf.mxu0
      %659 = vmatprep.mubr.f32.mxu0 0.0
      %660 = vmatmul.mubr.f32.gmra.mxu0 %v376
      %v661 = vpop.f32.mrf.mxu0
      %v662 = vadd.f32 %v285, %v661
      %v663 = vpop.f32.mrf.mxu0
      %664 = vmatprep.mubr.f32.mxu0 0.0
      %665 = vmatmul.mubr.f32.gmra.mxu0 %v379
      %v666 = vpop.f32.mrf.mxu0
      %v667 = vadd.f32 %v285, %v666
      %v668 = vpop.f32.mrf.mxu0
      %669 = vmatprep.mubr.f32.mxu0 0.0
      %670 = vmatmul.mubr.f32.gmra.mxu0 %v382
      %v671 = vpop.f32.mrf.mxu0
      %v672 = vadd.f32 %v285, %v671
      %v673 = vpop.f32.mrf.mxu0
      %674 = vmatprep.mubr.f32.mxu0 0.0
      %675 = vmatmul.mubr.f32.gmra.mxu0 %v385
      %v676 = vpop.f32.mrf.mxu0
      %v677 = vadd.f32 %v285, %v676
      %v678 = vpop.f32.mrf.mxu0
      %679 = vmatprep.mubr.f32.mxu0 0.0
      %680 = vmatmul.mubr.f32.gmra.mxu0 %v388
      %v681 = vpop.f32.mrf.mxu0
      %v682 = vadd.f32 %v285, %v681
      %v683 = vpop.f32.mrf.mxu0
      %684 = vmatprep.mubr.f32.mxu0 0.0
      %685 = vmatmul.mubr.f32.gmra.mxu0 %v391
      %v686 = vpop.f32.mrf.mxu0
      %v687 = vadd.f32 %v285, %v686
      %v688 = vpop.f32.mrf.mxu0
      %689 = vmatprep.mubr.f32.mxu0 0.0
      %690 = vmatmul.mubr.f32.gmra.mxu0 %v394
      %v691 = vpop.f32.mrf.mxu0
      %v692 = vadd.f32 %v285, %v691
      %v693 = vpop.f32.mrf.mxu0
      %694 = vmatprep.mubr.f32.mxu0 0.0
      %695 = vmatmul.mubr.f32.gmra.mxu0 %v397
      %v696 = vpop.f32.mrf.mxu0
      %v697 = vadd.f32 %v285, %v696
      %v698 = vpop.f32.mrf.mxu0
      %699 = vmatprep.mubr.f32.mxu0 0.0
      %700 = vmatmul.mubr.f32.gmra.mxu0 %v400
      %v701 = vpop.f32.mrf.mxu0
      %v702 = vadd.f32 %v285, %v701
      %v703 = vpop.f32.mrf.mxu0
      %704 = vmatprep.mubr.f32.mxu0 0.0
      %705 = vmatmul.mubr.f32.gmra.mxu0 %v403
      %v706 = vpop.f32.mrf.mxu0
      %v707 = vadd.f32 %v285, %v706
      %v708 = vpop.f32.mrf.mxu0
      %709 = vmatprep.mubr.f32.mxu0 0.0
      %710 = vmatmul.mubr.f32.gmra.mxu0 %v406
      %v711 = vpop.f32.mrf.mxu0
      %v712 = vadd.f32 %v285, %v711
      %v713 = vpop.f32.mrf.mxu0
      %714 = vmatprep.mubr.f32.mxu0 0.0
      %715 = vmatmul.mubr.f32.gmra.mxu0 %v409
      %v716 = vpop.f32.mrf.mxu0
      %v717 = vadd.f32 %v285, %v716
      %v718 = vpop.f32.mrf.mxu0
      %719 = vmatprep.mubr.f32.mxu0 0.0
      %720 = vmatmul.mubr.f32.gmra.mxu0 %v412
      %v721 = vpop.f32.mrf.mxu0
      %v722 = vadd.f32 %v285, %v721
      %v723 = vpop.f32.mrf.mxu0
      %724 = vmatprep.mubr.f32.mxu0 0.0
      %725 = vmatmul.mubr.f32.gmra.mxu0 %v415
      %v726 = vpop.f32.mrf.mxu0
      %v727 = vadd.f32 %v285, %v726
      %v728 = vpop.f32.mrf.mxu0
      %729 = vmatprep.mubr.f32.mxu0 0.0
      %730 = vmatmul.mubr.f32.gmra.mxu0 %v418
      %v731 = vpop.f32.mrf.mxu0
      %v732 = vadd.f32 %v285, %v731
      %v733 = vpop.f32.mrf.mxu0
      %734 = vmatprep.mubr.f32.mxu0 0.0
      %735 = vmatmul.mubr.f32.gmra.mxu0 %v421
      %v736 = vpop.f32.mrf.mxu0
      %v737 = vadd.f32 %v285, %v736
      %v738 = vpop.f32.mrf.mxu0
      %739 = vmatprep.mubr.f32.mxu0 0.0
      %740 = vmatmul.mubr.f32.gmra.mxu0 %v424
      %v741 = vpop.f32.mrf.mxu0
      %v742 = vadd.f32 %v285, %v741
      %v743 = vpop.f32.mrf.mxu0
      %744 = vmatprep.mubr.f32.mxu0 0.0
      %745 = vmatmul.mubr.f32.gmra.mxu0 %v427
      %v746 = vpop.f32.mrf.mxu0
      %v747 = vadd.f32 %v285, %v746
      %v748 = vpop.f32.mrf.mxu0
      %749 = vmatprep.mubr.f32.mxu0 0.0
      %750 = vmatmul.mubr.f32.gmra.mxu0 %v430
      %v751 = vpop.f32.mrf.mxu0
      %v752 = vadd.f32 %v285, %v751
      %v753 = vpop.f32.mrf.mxu0
      %754 = vmatprep.mubr.f32.mxu0 0.0
      %755 = vmatmul.mubr.f32.gmra.mxu0 %v433
      %v756 = vpop.f32.mrf.mxu0
      %v757 = vadd.f32 %v285, %v756
      %v758 = vpop.f32.mrf.mxu0
      %759 = vmatprep.mubr.f32.mxu0 0.0
      %760 = vmatmul.mubr.f32.gmra.mxu0 %v436
      %v761 = vpop.f32.mrf.mxu0
      %v762 = vadd.f32 %v285, %v761
      %v763 = vpop.f32.mrf.mxu0
      %764 = vmatprep.mubr.f32.mxu0 0.0
      %765 = vmatmul.mubr.f32.gmra.mxu0 %v439
      %v766 = vpop.f32.mrf.mxu0
      %v767 = vadd.f32 %v285, %v766
      %v768 = vpop.f32.mrf.mxu0
      %769 = vmatprep.mubr.f32.mxu0 0.0
      %770 = vmatmul.mubr.f32.gmra.mxu0 %v442
      %v771 = vpop.f32.mrf.mxu0
      %v772 = vadd.f32 %v285, %v771
      %v773 = vpop.f32.mrf.mxu0
      %774 = vmatprep.mubr.f32.mxu0 0.0
      %775 = vmatmul.mubr.f32.gmra.mxu0 %v445
      %v776 = vpop.f32.mrf.mxu0
      %v777 = vadd.f32 %v285, %v776
      %v778 = vpop.f32.mrf.mxu0
      %779 = vmatprep.mubr.f32.mxu0 0.0
      %780 = vmatmul.mubr.f32.gmra.mxu0 %v448
      %v781 = vpop.f32.mrf.mxu0
      %v782 = vadd.f32 %v285, %v781
      %v783 = vpop.f32.mrf.mxu0
      %784 = vdwg.mxu0
      %v785 = vmax.f32 %v517, 0.0
      %v786 = vmax.f32 %v522, 0.0
      %v787 = vmax.f32 %v527, 0.0
      %v788 = vmax.f32 %v532, 0.0
      %v789 = vmax.f32 %v537, 0.0
      %v790 = vmax.f32 %v542, 0.0
      %v791 = vmax.f32 %v547, 0.0
      %v792 = vmax.f32 %v552, 0.0
      %v793 = vmax.f32 %v557, 0.0
      %v794 = vmax.f32 %v562, 0.0
      %v795 = vmax.f32 %v567, 0.0
      %v796 = vmax.f32 %v572, 0.0
      %v797 = vmax.f32 %v577, 0.0
      %v798 = vmax.f32 %v582, 0.0
      %v799 = vmax.f32 %v587, 0.0
      %v800 = vmax.f32 %v592, 0.0
      %v801 = vmax.f32 %v597, 0.0
      %v802 = vmax.f32 %v602, 0.0
      %v803 = vmax.f32 %v607, 0.0
      %v804 = vmax.f32 %v612, 0.0
      %v805 = vmax.f32 %v617, 0.0
      %v806 = vmax.f32 %v622, 0.0
      %v807 = vmax.f32 %v627, 0.0
      %v808 = vmax.f32 %v632, 0.0
      %v809 = vmax.f32 %v637, 0.0
      %v810 = vmax.f32 %v642, 0.0
      %v811 = vmax.f32 %v647, 0.0
      %v812 = vmax.f32 %v652, 0.0
      %v813 = vmax.f32 %v657, 0.0
      %v814 = vmax.f32 %v662, 0.0
      %v815 = vmax.f32 %v667, 0.0
      %v816 = vmax.f32 %v672, 0.0
      %v817 = vmax.f32 %v677, 0.0
      %v818 = vmax.f32 %v682, 0.0
      %v819 = vmax.f32 %v687, 0.0
      %v820 = vmax.f32 %v692, 0.0
      %v821 = vmax.f32 %v697, 0.0
      %v822 = vmax.f32 %v702, 0.0
      %v823 = vmax.f32 %v707, 0.0
      %v824 = vmax.f32 %v712, 0.0
      %v825 = vmax.f32 %v717, 0.0
      %v826 = vmax.f32 %v722, 0.0
      %v827 = vmax.f32 %v727, 0.0
      %v828 = vmax.f32 %v732, 0.0
      %v829 = vmax.f32 %v737, 0.0
      %v830 = vmax.f32 %v742, 0.0
      %v831 = vmax.f32 %v747, 0.0
      %v832 = vmax.f32 %v752, 0.0
      %v833 = vmax.f32 %v757, 0.0
      %v834 = vmax.f32 %v762, 0.0
      %v835 = vmax.f32 %v767, 0.0
      %v836 = vmax.f32 %v772, 0.0
      %v837 = vmax.f32 %v777, 0.0
      %v838 = vmax.f32 %v782, 0.0
      %v839 = vand.u32 2147483647, %v517
      %v840 = vand.u32 2147483647, %v522
      %v841 = vand.u32 2147483647, %v527
      %v842 = vand.u32 2147483647, %v532
      %v843 = vand.u32 2147483647, %v537
      %v844 = vand.u32 2147483647, %v542
      %v845 = vand.u32 2147483647, %v547
      %v846 = vand.u32 2147483647, %v552
      %v847 = vand.u32 2147483647, %v557
      %v848 = vand.u32 2147483647, %v562
      %v849 = vand.u32 2147483647, %v567
      %v850 = vand.u32 2147483647, %v572
      %v851 = vand.u32 2147483647, %v577
      %v852 = vand.u32 2147483647, %v582
      %v853 = vand.u32 2147483647, %v587
      %v854 = vand.u32 2147483647, %v592
      %v855 = vand.u32 2147483647, %v597
      %v856 = vand.u32 2147483647, %v602
      %v857 = vand.u32 2147483647, %v607
      %v858 = vand.u32 2147483647, %v612
      %v859 = vand.u32 2147483647, %v617
      %v860 = vand.u32 2147483647, %v622
      %v861 = vand.u32 2147483647, %v627
      %v862 = vand.u32 2147483647, %v632
      %v863 = vand.u32 2147483647, %v637
      %v864 = vand.u32 2147483647, %v642
      %v865 = vand.u32 2147483647, %v647
      %v866 = vand.u32 2147483647, %v652
      %v867 = vand.u32 2147483647, %v657
      %v868 = vand.u32 2147483647, %v662
      %v869 = vand.u32 2147483647, %v667
      %v870 = vand.u32 2147483647, %v672
      %v871 = vand.u32 2147483647, %v677
      %v872 = vand.u32 2147483647, %v682
      %v873 = vand.u32 2147483647, %v687
      %v874 = vand.u32 2147483647, %v692
      %v875 = vand.u32 2147483647, %v697
      %v876 = vand.u32 2147483647, %v702
      %v877 = vand.u32 2147483647, %v707
      %v878 = vand.u32 2147483647, %v712
      %v879 = vand.u32 2147483647, %v717
      %v880 = vand.u32 2147483647, %v722
      %v881 = vand.u32 2147483647, %v727
      %v882 = vand.u32 2147483647, %v732
      %v883 = vand.u32 2147483647, %v737
      %v884 = vand.u32 2147483647, %v742
      %v885 = vand.u32 2147483647, %v747
      %v886 = vand.u32 2147483647, %v752
      %v887 = vand.u32 2147483647, %v757
      %v888 = vand.u32 2147483647, %v762
      %v889 = vand.u32 2147483647, %v767
      %v890 = vand.u32 2147483647, %v772
      %v891 = vand.u32 2147483647, %v777
      %v892 = vand.u32 2147483647, %v782
      %v893 = vsub.f32 0.0, %v839
      %v894 = vsub.f32 0.0, %v840
      %v895 = vsub.f32 0.0, %v841
      %v896 = vsub.f32 0.0, %v842
      %v897 = vsub.f32 0.0, %v843
      %v898 = vsub.f32 0.0, %v844
      %v899 = vsub.f32 0.0, %v845
      %v900 = vsub.f32 0.0, %v846
      %v901 = vsub.f32 0.0, %v847
      %v902 = vsub.f32 0.0, %v848
      %v903 = vsub.f32 0.0, %v849
      %v904 = vsub.f32 0.0, %v850
      %v905 = vsub.f32 0.0, %v851
      %v906 = vsub.f32 0.0, %v852
      %v907 = vsub.f32 0.0, %v853
      %v908 = vsub.f32 0.0, %v854
      %v909 = vsub.f32 0.0, %v855
      %v910 = vsub.f32 0.0, %v856
      %v911 = vsub.f32 0.0, %v857
      %v912 = vsub.f32 0.0, %v858
      %v913 = vsub.f32 0.0, %v859
      %v914 = vsub.f32 0.0, %v860
      %v915 = vsub.f32 0.0, %v861
      %v916 = vsub.f32 0.0, %v862
      %v917 = vsub.f32 0.0, %v863
      %v918 = vsub.f32 0.0, %v864
      %v919 = vsub.f32 0.0, %v865
      %v920 = vsub.f32 0.0, %v866
      %v921 = vsub.f32 0.0, %v867
      %v922 = vsub.f32 0.0, %v868
      %v923 = vsub.f32 0.0, %v869
      %v924 = vsub.f32 0.0, %v870
      %v925 = vsub.f32 0.0, %v871
      %v926 = vsub.f32 0.0, %v872
      %v927 = vsub.f32 0.0, %v873
      %v928 = vsub.f32 0.0, %v874
      %v929 = vsub.f32 0.0, %v875
      %v930 = vsub.f32 0.0, %v876
      %v931 = vsub.f32 0.0, %v877
      %v932 = vsub.f32 0.0, %v878
      %v933 = vsub.f32 0.0, %v879
      %v934 = vsub.f32 0.0, %v880
      %v935 = vsub.f32 0.0, %v881
      %v936 = vsub.f32 0.0, %v882
      %v937 = vsub.f32 0.0, %v883
      %v938 = vsub.f32 0.0, %v884
      %v939 = vsub.f32 0.0, %v885
      %v940 = vsub.f32 0.0, %v886
      %v941 = vsub.f32 0.0, %v887
      %v942 = vsub.f32 0.0, %v888
      %v943 = vsub.f32 0.0, %v889
      %v944 = vsub.f32 0.0, %v890
      %v945 = vsub.f32 0.0, %v891
      %v946 = vsub.f32 0.0, %v892
      %v947 = vmul.f32 %v893, 1.442695
      %v948 = vpow.pop %v947
      %v949 = vmul.f32 %v894, 1.442695
      %v950 = vpow.pop %v949
      %v951 = vmul.f32 %v895, 1.442695
      %v952 = vpow.pop %v951
      %v953 = vmul.f32 %v896, 1.442695
      %v954 = vpow.pop %v953
      %v955 = vmul.f32 %v897, 1.442695
      %v956 = vpow.pop %v955
      %v957 = vmul.f32 %v898, 1.442695
      %v958 = vpow.pop %v957
      %v959 = vmul.f32 %v899, 1.442695
      %v960 = vpow.pop %v959
      %v961 = vmul.f32 %v900, 1.442695
      %v962 = vpow.pop %v961
      %v963 = vmul.f32 %v901, 1.442695
      %v964 = vpow.pop %v963
      %v965 = vmul.f32 %v902, 1.442695
      %v966 = vpow.pop %v965
      %v967 = vmul.f32 %v903, 1.442695
      %v968 = vpow.pop %v967
      %v969 = vmul.f32 %v904, 1.442695
      %v970 = vpow.pop %v969
      %v971 = vmul.f32 %v905, 1.442695
      %v972 = vpow.pop %v971
      %v973 = vmul.f32 %v906, 1.442695
      %v974 = vpow.pop %v973
      %v975 = vmul.f32 %v907, 1.442695
      %v976 = vpow.pop %v975
      %v977 = vmul.f32 %v908, 1.442695
      %v978 = vpow.pop %v977
      %v979 = vmul.f32 %v909, 1.442695
      %v980 = vpow.pop %v979
      %v981 = vmul.f32 %v910, 1.442695
      %v982 = vpow.pop %v981
      %v983 = vmul.f32 %v911, 1.442695
      %v984 = vpow.pop %v983
      %v985 = vmul.f32 %v912, 1.442695
      %v986 = vpow.pop %v985
      %v987 = vmul.f32 %v913, 1.442695
      %v988 = vpow.pop %v987
      %v989 = vmul.f32 %v914, 1.442695
      %v990 = vpow.pop %v989
      %v991 = vmul.f32 %v915, 1.442695
      %v992 = vpow.pop %v991
      %v993 = vmul.f32 %v916, 1.442695
      %v994 = vpow.pop %v993
      %v995 = vmul.f32 %v917, 1.442695
      %v996 = vpow.pop %v995
      %v997 = vmul.f32 %v918, 1.442695
      %v998 = vpow.pop %v997
      %v999 = vmul.f32 %v919, 1.442695
      %v1000 = vpow.pop %v999
      %v1001 = vmul.f32 %v920, 1.442695
      %v1002 = vpow.pop %v1001
      %v1003 = vmul.f32 %v921, 1.442695
      %v1004 = vpow.pop %v1003
      %v1005 = vmul.f32 %v922, 1.442695
      %v1006 = vpow.pop %v1005
      %v1007 = vmul.f32 %v923, 1.442695
      %v1008 = vpow.pop %v1007
      %v1009 = vmul.f32 %v924, 1.442695
      %v1010 = vpow.pop %v1009
      %v1011 = vmul.f32 %v925, 1.442695
      %v1012 = vpow.pop %v1011
      %v1013 = vmul.f32 %v926, 1.442695
      %v1014 = vpow.pop %v1013
      %v1015 = vmul.f32 %v927, 1.442695
      %v1016 = vpow.pop %v1015
      %v1017 = vmul.f32 %v928, 1.442695
      %v1018 = vpow.pop %v1017
      %v1019 = vmul.f32 %v929, 1.442695
      %v1020 = vpow.pop %v1019
      %v1021 = vmul.f32 %v930, 1.442695
      %v1022 = vpow.pop %v1021
      %v1023 = vmul.f32 %v931, 1.442695
      %v1024 = vpow.pop %v1023
      %v1025 = vmul.f32 %v932, 1.442695
      %v1026 = vpow.pop %v1025
      %v1027 = vmul.f32 %v933, 1.442695
      %v1028 = vpow.pop %v1027
      %v1029 = vmul.f32 %v934, 1.442695
      %v1030 = vpow.pop %v1029
      %v1031 = vmul.f32 %v935, 1.442695
      %v1032 = vpow.pop %v1031
      %v1033 = vmul.f32 %v936, 1.442695
      %v1034 = vpow.pop %v1033
      %v1035 = vmul.f32 %v937, 1.442695
      %v1036 = vpow.pop %v1035
      %v1037 = vmul.f32 %v938, 1.442695
      %v1038 = vpow.pop %v1037
      %v1039 = vmul.f32 %v939, 1.442695
      %v1040 = vpow.pop %v1039
      %v1041 = vmul.f32 %v940, 1.442695
      %v1042 = vpow.pop %v1041
      %v1043 = vmul.f32 %v941, 1.442695
      %v1044 = vpow.pop %v1043
      %v1045 = vmul.f32 %v942, 1.442695
      %v1046 = vpow.pop %v1045
      %v1047 = vmul.f32 %v943, 1.442695
      %v1048 = vpow.pop %v1047
      %v1049 = vmul.f32 %v944, 1.442695
      %v1050 = vpow.pop %v1049
      %v1051 = vmul.f32 %v945, 1.442695
      %v1052 = vpow.pop %v1051
      %v1053 = vmul.f32 %v946, 1.442695
      %v1054 = vpow.pop %v1053
      %v1055 = vadd.f32 %v948, 1.0
      %v1056 = vadd.f32 %v950, 1.0
      %v1057 = vadd.f32 %v952, 1.0
      %v1058 = vadd.f32 %v954, 1.0
      %v1059 = vadd.f32 %v956, 1.0
      %v1060 = vadd.f32 %v958, 1.0
      %v1061 = vadd.f32 %v960, 1.0
      %v1062 = vadd.f32 %v962, 1.0
      %v1063 = vadd.f32 %v964, 1.0
      %v1064 = vadd.f32 %v966, 1.0
      %v1065 = vadd.f32 %v968, 1.0
      %v1066 = vadd.f32 %v970, 1.0
      %v1067 = vadd.f32 %v972, 1.0
      %v1068 = vadd.f32 %v974, 1.0
      %v1069 = vadd.f32 %v976, 1.0
      %v1070 = vadd.f32 %v978, 1.0
      %v1071 = vadd.f32 %v980, 1.0
      %v1072 = vadd.f32 %v982, 1.0
      %v1073 = vadd.f32 %v984, 1.0
      %v1074 = vadd.f32 %v986, 1.0
      %v1075 = vadd.f32 %v988, 1.0
      %v1076 = vadd.f32 %v990, 1.0
      %v1077 = vadd.f32 %v992, 1.0
      %v1078 = vadd.f32 %v994, 1.0
      %v1079 = vadd.f32 %v996, 1.0
      %v1080 = vadd.f32 %v998, 1.0
      %v1081 = vadd.f32 %v1000, 1.0
      %v1082 = vadd.f32 %v1002, 1.0
      %v1083 = vadd.f32 %v1004, 1.0
      %v1084 = vadd.f32 %v1006, 1.0
      %v1085 = vadd.f32 %v1008, 1.0
      %v1086 = vadd.f32 %v1010, 1.0
      %v1087 = vadd.f32 %v1012, 1.0
      %v1088 = vadd.f32 %v1014, 1.0
      %v1089 = vadd.f32 %v1016, 1.0
      %v1090 = vadd.f32 %v1018, 1.0
      %v1091 = vadd.f32 %v1020, 1.0
      %v1092 = vadd.f32 %v1022, 1.0
      %v1093 = vadd.f32 %v1024, 1.0
      %v1094 = vadd.f32 %v1026, 1.0
      %v1095 = vadd.f32 %v1028, 1.0
      %v1096 = vadd.f32 %v1030, 1.0
      %v1097 = vadd.f32 %v1032, 1.0
      %v1098 = vadd.f32 %v1034, 1.0
      %v1099 = vadd.f32 %v1036, 1.0
      %v1100 = vadd.f32 %v1038, 1.0
      %v1101 = vadd.f32 %v1040, 1.0
      %v1102 = vadd.f32 %v1042, 1.0
      %v1103 = vadd.f32 %v1044, 1.0
      %v1104 = vadd.f32 %v1046, 1.0
      %v1105 = vadd.f32 %v1048, 1.0
      %v1106 = vadd.f32 %v1050, 1.0
      %v1107 = vadd.f32 %v1052, 1.0
      %v1108 = vadd.f32 %v1054, 1.0
      %v1109 = vlog2.pop %v1055
      %v1110 = vmul.f32 %v1109, 0.6931472
      %v1111 = vlog2.pop %v1056
      %v1112 = vmul.f32 %v1111, 0.6931472
      %v1113 = vlog2.pop %v1057
      %v1114 = vmul.f32 %v1113, 0.6931472
      %v1115 = vlog2.pop %v1058
      %v1116 = vmul.f32 %v1115, 0.6931472
      %v1117 = vlog2.pop %v1059
      %v1118 = vmul.f32 %v1117, 0.6931472
      %v1119 = vlog2.pop %v1060
      %v1120 = vmul.f32 %v1119, 0.6931472
      %v1121 = vlog2.pop %v1061
      %v1122 = vmul.f32 %v1121, 0.6931472
      %v1123 = vlog2.pop %v1062
      %v1124 = vmul.f32 %v1123, 0.6931472
      %v1125 = vlog2.pop %v1063
      %v1126 = vmul.f32 %v1125, 0.6931472
      %v1127 = vlog2.pop %v1064
      %v1128 = vmul.f32 %v1127, 0.6931472
      %v1129 = vlog2.pop %v1065
      %v1130 = vmul.f32 %v1129, 0.6931472
      %v1131 = vlog2.pop %v1066
      %v1132 = vmul.f32 %v1131, 0.6931472
      %v1133 = vlog2.pop %v1067
      %v1134 = vmul.f32 %v1133, 0.6931472
      %v1135 = vlog2.pop %v1068
      %v1136 = vmul.f32 %v1135, 0.6931472
      %v1137 = vlog2.pop %v1069
      %v1138 = vmul.f32 %v1137, 0.6931472
      %v1139 = vlog2.pop %v1070
      %v1140 = vmul.f32 %v1139, 0.6931472
      %v1141 = vlog2.pop %v1071
      %v1142 = vmul.f32 %v1141, 0.6931472
      %v1143 = vlog2.pop %v1072
      %v1144 = vmul.f32 %v1143, 0.6931472
      %v1145 = vlog2.pop %v1073
      %v1146 = vmul.f32 %v1145, 0.6931472
      %v1147 = vlog2.pop %v1074
      %v1148 = vmul.f32 %v1147, 0.6931472
      %v1149 = vlog2.pop %v1075
      %v1150 = vmul.f32 %v1149, 0.6931472
      %v1151 = vlog2.pop %v1076
      %v1152 = vmul.f32 %v1151, 0.6931472
      %v1153 = vlog2.pop %v1077
      %v1154 = vmul.f32 %v1153, 0.6931472
      %v1155 = vlog2.pop %v1078
      %v1156 = vmul.f32 %v1155, 0.6931472
      %v1157 = vlog2.pop %v1079
      %v1158 = vmul.f32 %v1157, 0.6931472
      %v1159 = vlog2.pop %v1080
      %v1160 = vmul.f32 %v1159, 0.6931472
      %v1161 = vlog2.pop %v1081
      %v1162 = vmul.f32 %v1161, 0.6931472
      %v1163 = vlog2.pop %v1082
      %v1164 = vmul.f32 %v1163, 0.6931472
      %v1165 = vlog2.pop %v1083
      %v1166 = vmul.f32 %v1165, 0.6931472
      %v1167 = vlog2.pop %v1084
      %v1168 = vmul.f32 %v1167, 0.6931472
      %v1169 = vlog2.pop %v1085
      %v1170 = vmul.f32 %v1169, 0.6931472
      %v1171 = vlog2.pop %v1086
      %v1172 = vmul.f32 %v1171, 0.6931472
      %v1173 = vlog2.pop %v1087
      %v1174 = vmul.f32 %v1173, 0.6931472
      %v1175 = vlog2.pop %v1088
      %v1176 = vmul.f32 %v1175, 0.6931472
      %v1177 = vlog2.pop %v1089
      %v1178 = vmul.f32 %v1177, 0.6931472
      %v1179 = vlog2.pop %v1090
      %v1180 = vmul.f32 %v1179, 0.6931472
      %v1181 = vlog2.pop %v1091
      %v1182 = vmul.f32 %v1181, 0.6931472
      %v1183 = vlog2.pop %v1092
      %v1184 = vmul.f32 %v1183, 0.6931472
      %v1185 = vlog2.pop %v1093
      %v1186 = vmul.f32 %v1185, 0.6931472
      %v1187 = vlog2.pop %v1094
      %v1188 = vmul.f32 %v1187, 0.6931472
      %v1189 = vlog2.pop %v1095
      %v1190 = vmul.f32 %v1189, 0.6931472
      %v1191 = vlog2.pop %v1096
      %v1192 = vmul.f32 %v1191, 0.6931472
      %v1193 = vlog2.pop %v1097
      %v1194 = vmul.f32 %v1193, 0.6931472
      %v1195 = vlog2.pop %v1098
      %v1196 = vmul.f32 %v1195, 0.6931472
      %v1197 = vlog2.pop %v1099
      %v1198 = vmul.f32 %v1197, 0.6931472
      %v1199 = vlog2.pop %v1100
      %v1200 = vmul.f32 %v1199, 0.6931472
      %v1201 = vlog2.pop %v1101
      %v1202 = vmul.f32 %v1201, 0.6931472
      %v1203 = vlog2.pop %v1102
      %v1204 = vmul.f32 %v1203, 0.6931472
      %v1205 = vlog2.pop %v1103
      %v1206 = vmul.f32 %v1205, 0.6931472
      %v1207 = vlog2.pop %v1104
      %v1208 = vmul.f32 %v1207, 0.6931472
      %v1209 = vlog2.pop %v1105
      %v1210 = vmul.f32 %v1209, 0.6931472
      %v1211 = vlog2.pop %v1106
      %v1212 = vmul.f32 %v1211, 0.6931472
      %v1213 = vlog2.pop %v1107
      %v1214 = vmul.f32 %v1213, 0.6931472
      %v1215 = vlog2.pop %v1108
      %v1216 = vmul.f32 %v1215, 0.6931472
      %v1217 = vadd.f32 %v785, %v1110
      %v1218 = vadd.f32 %v786, %v1112
      %v1219 = vadd.f32 %v787, %v1114
      %v1220 = vadd.f32 %v788, %v1116
      %v1221 = vadd.f32 %v789, %v1118
      %v1222 = vadd.f32 %v790, %v1120
      %v1223 = vadd.f32 %v791, %v1122
      %v1224 = vadd.f32 %v792, %v1124
      %v1225 = vadd.f32 %v793, %v1126
      %v1226 = vadd.f32 %v794, %v1128
      %v1227 = vadd.f32 %v795, %v1130
      %v1228 = vadd.f32 %v796, %v1132
      %v1229 = vadd.f32 %v797, %v1134
      %v1230 = vadd.f32 %v798, %v1136
      %v1231 = vadd.f32 %v799, %v1138
      %v1232 = vadd.f32 %v800, %v1140
      %v1233 = vadd.f32 %v801, %v1142
      %v1234 = vadd.f32 %v802, %v1144
      %v1235 = vadd.f32 %v803, %v1146
      %v1236 = vadd.f32 %v804, %v1148
      %v1237 = vadd.f32 %v805, %v1150
      %v1238 = vadd.f32 %v806, %v1152
      %v1239 = vadd.f32 %v807, %v1154
      %v1240 = vadd.f32 %v808, %v1156
      %v1241 = vadd.f32 %v809, %v1158
      %v1242 = vadd.f32 %v810, %v1160
      %v1243 = vadd.f32 %v811, %v1162
      %v1244 = vadd.f32 %v812, %v1164
      %v1245 = vadd.f32 %v813, %v1166
      %v1246 = vadd.f32 %v814, %v1168
      %v1247 = vadd.f32 %v815, %v1170
      %v1248 = vadd.f32 %v816, %v1172
      %v1249 = vadd.f32 %v817, %v1174
      %v1250 = vadd.f32 %v818, %v1176
      %v1251 = vadd.f32 %v819, %v1178
      %v1252 = vadd.f32 %v820, %v1180
      %v1253 = vadd.f32 %v821, %v1182
      %v1254 = vadd.f32 %v822, %v1184
      %v1255 = vadd.f32 %v823, %v1186
      %v1256 = vadd.f32 %v824, %v1188
      %v1257 = vadd.f32 %v825, %v1190
      %v1258 = vadd.f32 %v826, %v1192
      %v1259 = vadd.f32 %v827, %v1194
      %v1260 = vadd.f32 %v828, %v1196
      %v1261 = vadd.f32 %v829, %v1198
      %v1262 = vadd.f32 %v830, %v1200
      %v1263 = vadd.f32 %v831, %v1202
      %v1264 = vadd.f32 %v832, %v1204
      %v1265 = vadd.f32 %v833, %v1206
      %v1266 = vadd.f32 %v834, %v1208
      %v1267 = vadd.f32 %v835, %v1210
      %v1268 = vadd.f32 %v836, %v1212
      %v1269 = vadd.f32 %v837, %v1214
      %v1270 = vadd.f32 %v838, %v1216
      %v1271 = vtanh.pop %v1217
      %v1272 = vtanh.pop %v1218
      %v1273 = vtanh.pop %v1219
      %v1274 = vtanh.pop %v1220
      %v1275 = vtanh.pop %v1221
      %v1276 = vtanh.pop %v1222
      %v1277 = vtanh.pop %v1223
      %v1278 = vtanh.pop %v1224
      %v1279 = vtanh.pop %v1225
      %v1280 = vtanh.pop %v1226
      %v1281 = vtanh.pop %v1227
      %v1282 = vtanh.pop %v1228
      %v1283 = vtanh.pop %v1229
      %v1284 = vtanh.pop %v1230
      %v1285 = vtanh.pop %v1231
      %v1286 = vtanh.pop %v1232
      %v1287 = vtanh.pop %v1233
      %v1288 = vtanh.pop %v1234
      %v1289 = vtanh.pop %v1235
      %v1290 = vtanh.pop %v1236
      %v1291 = vtanh.pop %v1237
      %v1292 = vtanh.pop %v1238
      %v1293 = vtanh.pop %v1239
      %v1294 = vtanh.pop %v1240
      %v1295 = vtanh.pop %v1241
      %v1296 = vtanh.pop %v1242
      %v1297 = vtanh.pop %v1243
      %v1298 = vtanh.pop %v1244
      %v1299 = vtanh.pop %v1245
      %v1300 = vtanh.pop %v1246
      %v1301 = vtanh.pop %v1247
      %v1302 = vtanh.pop %v1248
      %v1303 = vtanh.pop %v1249
      %v1304 = vtanh.pop %v1250
      %v1305 = vtanh.pop %v1251
      %v1306 = vtanh.pop %v1252
      %v1307 = vtanh.pop %v1253
      %v1308 = vtanh.pop %v1254
      %v1309 = vtanh.pop %v1255
      %v1310 = vtanh.pop %v1256
      %v1311 = vtanh.pop %v1257
      %v1312 = vtanh.pop %v1258
      %v1313 = vtanh.pop %v1259
      %v1314 = vtanh.pop %v1260
      %v1315 = vtanh.pop %v1261
      %v1316 = vtanh.pop %v1262
      %v1317 = vtanh.pop %v1263
      %v1318 = vtanh.pop %v1264
      %v1319 = vtanh.pop %v1265
      %v1320 = vtanh.pop %v1266
      %v1321 = vtanh.pop %v1267
      %v1322 = vtanh.pop %v1268
      %v1323 = vtanh.pop %v1269
      %v1324 = vtanh.pop %v1270
      %v1325 = vmul.f32 %v517, %v1271
      %v1326 = vmul.f32 %v522, %v1272
      %v1327 = vmul.f32 %v527, %v1273
      %v1328 = vmul.f32 %v532, %v1274
      %v1329 = vmul.f32 %v537, %v1275
      %v1330 = vmul.f32 %v542, %v1276
      %v1331 = vmul.f32 %v547, %v1277
      %v1332 = vmul.f32 %v552, %v1278
      %v1333 = vmul.f32 %v557, %v1279
      %v1334 = vmul.f32 %v562, %v1280
      %v1335 = vmul.f32 %v567, %v1281
      %v1336 = vmul.f32 %v572, %v1282
      %v1337 = vmul.f32 %v577, %v1283
      %v1338 = vmul.f32 %v582, %v1284
      %v1339 = vmul.f32 %v587, %v1285
      %v1340 = vmul.f32 %v592, %v1286
      %v1341 = vmul.f32 %v597, %v1287
      %v1342 = vmul.f32 %v602, %v1288
      %v1343 = vmul.f32 %v607, %v1289
      %v1344 = vmul.f32 %v612, %v1290
      %v1345 = vmul.f32 %v617, %v1291
      %v1346 = vmul.f32 %v622, %v1292
      %v1347 = vmul.f32 %v627, %v1293
      %v1348 = vmul.f32 %v632, %v1294
      %v1349 = vmul.f32 %v637, %v1295
      %v1350 = vmul.f32 %v642, %v1296
      %v1351 = vmul.f32 %v647, %v1297
      %v1352 = vmul.f32 %v652, %v1298
      %v1353 = vmul.f32 %v657, %v1299
      %v1354 = vmul.f32 %v662, %v1300
      %v1355 = vmul.f32 %v667, %v1301
      %v1356 = vmul.f32 %v672, %v1302
      %v1357 = vmul.f32 %v677, %v1303
      %v1358 = vmul.f32 %v682, %v1304
      %v1359 = vmul.f32 %v687, %v1305
      %v1360 = vmul.f32 %v692, %v1306
      %v1361 = vmul.f32 %v697, %v1307
      %v1362 = vmul.f32 %v702, %v1308
      %v1363 = vmul.f32 %v707, %v1309
      %v1364 = vmul.f32 %v712, %v1310
      %v1365 = vmul.f32 %v717, %v1311
      %v1366 = vmul.f32 %v722, %v1312
      %v1367 = vmul.f32 %v727, %v1313
      %v1368 = vmul.f32 %v732, %v1314
      %v1369 = vmul.f32 %v737, %v1315
      %v1370 = vmul.f32 %v742, %v1316
      %v1371 = vmul.f32 %v747, %v1317
      %v1372 = vmul.f32 %v752, %v1318
      %v1373 = vmul.f32 %v757, %v1319
      %v1374 = vmul.f32 %v762, %v1320
      %v1375 = vmul.f32 %v767, %v1321
      %v1376 = vmul.f32 %v772, %v1322
      %v1377 = vmul.f32 %v777, %v1323
      %v1378 = vmul.f32 %v782, %v1324
      %v1379 = vlaneseq
      %v1380 = vshrl.u32 %v1379, 7
      %v1381 = vadd.s32 %v1380, 8
      %v1382 = vadd.s32 %v1380, 16
      %vm1383 = vcmp.ge.s32.totalorder %v1380, 1
      %vm1384 = vcmp.ge.s32.totalorder %v1381, 1
      %vm1385 = vcmp.ge.s32.totalorder %v1382, 1
      %vm1386 = vmand 0, %vm1383
      %vm1387 = vmand 0, %vm1384
      %vm1388 = vmand 0, %vm1385
      %vm1389 = vmand 1, %vm1383
      %vm1390 = vmand 1, %vm1384
      %vm1391 = vmand 1, %vm1385
      %vm1392 = vcmp.le.s32.totalorder %v1380, 16
      %vm1393 = vcmp.le.s32.totalorder %v1381, 16
      %vm1394 = vcmp.le.s32.totalorder %v1382, 16
      %vm1395 = vmand %vm1386, %vm1392
      %vm1396 = vmand %vm1387, %vm1393
      %vm1397 = vmand %vm1388, %vm1394
      %vm1398 = vmand %vm1389, %vm1392
      %vm1399 = vmand %vm1390, %vm1393
      %vm1400 = vmand %vm1391, %vm1394
      %v1401 = vsel %vm1395, %v1325, 0.0
      %v1402 = vsel %vm1396, %v1326, 0.0
      %v1403 = vsel %vm1397, %v1327, 0.0
      %v1404 = vsel %vm1398, %v1328, 0.0
      %v1405 = vsel %vm1399, %v1329, 0.0
      %v1406 = vsel %vm1400, %v1330, 0.0
      %v1407 = vsel %vm1398, %v1331, 0.0
      %v1408 = vsel %vm1399, %v1332, 0.0
      %v1409 = vsel %vm1400, %v1333, 0.0
      %v1410 = vsel %vm1398, %v1334, 0.0
      %v1411 = vsel %vm1399, %v1335, 0.0
      %v1412 = vsel %vm1400, %v1336, 0.0
      %v1413 = vsel %vm1398, %v1337, 0.0
      %v1414 = vsel %vm1399, %v1338, 0.0
      %v1415 = vsel %vm1400, %v1339, 0.0
      %v1416 = vsel %vm1398, %v1340, 0.0
      %v1417 = vsel %vm1399, %v1341, 0.0
      %v1418 = vsel %vm1400, %v1342, 0.0
      %v1419 = vsel %vm1398, %v1343, 0.0
      %v1420 = vsel %vm1399, %v1344, 0.0
      %v1421 = vsel %vm1400, %v1345, 0.0
      %v1422 = vsel %vm1398, %v1346, 0.0
      %v1423 = vsel %vm1399, %v1347, 0.0
      %v1424 = vsel %vm1400, %v1348, 0.0
      %v1425 = vsel %vm1398, %v1349, 0.0
      %v1426 = vsel %vm1399, %v1350, 0.0
      %v1427 = vsel %vm1400, %v1351, 0.0
      %v1428 = vsel %vm1398, %v1352, 0.0
      %v1429 = vsel %vm1399, %v1353, 0.0
      %v1430 = vsel %vm1400, %v1354, 0.0
      %v1431 = vsel %vm1398, %v1355, 0.0
      %v1432 = vsel %vm1399, %v1356, 0.0
      %v1433 = vsel %vm1400, %v1357, 0.0
      %v1434 = vsel %vm1398, %v1358, 0.0
      %v1435 = vsel %vm1399, %v1359, 0.0
      %v1436 = vsel %vm1400, %v1360, 0.0
      %v1437 = vsel %vm1398, %v1361, 0.0
      %v1438 = vsel %vm1399, %v1362, 0.0
      %v1439 = vsel %vm1400, %v1363, 0.0
      %v1440 = vsel %vm1398, %v1364, 0.0
      %v1441 = vsel %vm1399, %v1365, 0.0
      %v1442 = vsel %vm1400, %v1366, 0.0
      %v1443 = vsel %vm1398, %v1367, 0.0
      %v1444 = vsel %vm1399, %v1368, 0.0
      %v1445 = vsel %vm1400, %v1369, 0.0
      %v1446 = vsel %vm1398, %v1370, 0.0
      %v1447 = vsel %vm1399, %v1371, 0.0
      %v1448 = vsel %vm1400, %v1372, 0.0
      %v1449 = vsel %vm1398, %v1373, 0.0
      %v1450 = vsel %vm1399, %v1374, 0.0
      %v1451 = vsel %vm1400, %v1375, 0.0
      %v1452 = vsel %vm1395, %v1376, 0.0
      %v1453 = vsel %vm1396, %v1377, 0.0
      %v1454 = vsel %vm1397, %v1378, 0.0
      %vm1455 = vcmask 31744
      %1456 = vst.msk [vmem:[#allocation2] sm:$0xff] %vm1455, %v1401
      %1457 = vst.msk [vmem:[#allocation2 + $0x8] sm:$0xff] %vm1455, %v1402
      %1458 = vst.msk [vmem:[#allocation2 + $0x10] sm:$0xff] %vm1455, %v1403
      %1459 = vst.msk [vmem:[#allocation2 + $0x18] sm:$0xff] %vm1455, %v1404
      %1460 = vst.msk [vmem:[#allocation2 + $0x20] sm:$0xff] %vm1455, %v1405
      %1461 = vst.msk [vmem:[#allocation2 + $0x28] sm:$0xff] %vm1455, %v1406
      %1462 = vst.msk [vmem:[#allocation2 + $0x30] sm:$0xff] %vm1455, %v1407
      %1463 = vst.msk [vmem:[#allocation2 + $0x38] sm:$0xff] %vm1455, %v1408
      %1464 = vst.msk [vmem:[#allocation2 + $0x40] sm:$0xff] %vm1455, %v1409
      %1465 = vst.msk [vmem:[#allocation2 + $0x48] sm:$0xff] %vm1455, %v1410
      %1466 = vst.msk [vmem:[#allocation2 + $0x50] sm:$0xff] %vm1455, %v1411
      %1467 = vst.msk [vmem:[#allocation2 + $0x58] sm:$0xff] %vm1455, %v1412
      %1468 = vst.msk [vmem:[#allocation2 + $0x60] sm:$0xff] %vm1455, %v1413
      %1469 = vst.msk [vmem:[#allocation2 + $0x68] sm:$0xff] %vm1455, %v1414
      %1470 = vst.msk [vmem:[#allocation2 + $0x70] sm:$0xff] %vm1455, %v1415
      %1471 = vst.msk [vmem:[#allocation2 + $0x78] sm:$0xff] %vm1455, %v1416
      %1472 = vst.msk [vmem:[#allocation2 + $0x80] sm:$0xff] %vm1455, %v1417
      %1473 = vst.msk [vmem:[#allocation2 + $0x88] sm:$0xff] %vm1455, %v1418
      %1474 = vst.msk [vmem:[#allocation2 + $0x90] sm:$0xff] %vm1455, %v1419
      %1475 = vst.msk [vmem:[#allocation2 + $0x98] sm:$0xff] %vm1455, %v1420
      %1476 = vst.msk [vmem:[#allocation2 + $0xa0] sm:$0xff] %vm1455, %v1421
      %1477 = vst.msk [vmem:[#allocation2 + $0xa8] sm:$0xff] %vm1455, %v1422
      %1478 = vst.msk [vmem:[#allocation2 + $0xb0] sm:$0xff] %vm1455, %v1423
      %1479 = vst.msk [vmem:[#allocation2 + $0xb8] sm:$0xff] %vm1455, %v1424
      %1480 = vst.msk [vmem:[#allocation2 + $0xc0] sm:$0xff] %vm1455, %v1425
      %1481 = vst.msk [vmem:[#allocation2 + $0xc8] sm:$0xff] %vm1455, %v1426
      %1482 = vst.msk [vmem:[#allocation2 + $0xd0] sm:$0xff] %vm1455, %v1427
      %1483 = vst.msk [vmem:[#allocation2 + $0xd8] sm:$0xff] %vm1455, %v1428
      %1484 = vst.msk [vmem:[#allocation2 + $0xe0] sm:$0xff] %vm1455, %v1429
      %1485 = vst.msk [vmem:[#allocation2 + $0xe8] sm:$0xff] %vm1455, %v1430
      %1486 = vst.msk [vmem:[#allocation2 + $0xf0] sm:$0xff] %vm1455, %v1431
      %1487 = vst.msk [vmem:[#allocation2 + $0xf8] sm:$0xff] %vm1455, %v1432
      %1488 = vst.msk [vmem:[#allocation2 + $0x100] sm:$0xff] %vm1455, %v1433
      %1489 = vst.msk [vmem:[#allocation2 + $0x108] sm:$0xff] %vm1455, %v1434
      %1490 = vst.msk [vmem:[#allocation2 + $0x110] sm:$0xff] %vm1455, %v1435
      %1491 = vst.msk [vmem:[#allocation2 + $0x118] sm:$0xff] %vm1455, %v1436
      %1492 = vst.msk [vmem:[#allocation2 + $0x120] sm:$0xff] %vm1455, %v1437
      %1493 = vst.msk [vmem:[#allocation2 + $0x128] sm:$0xff] %vm1455, %v1438
      %1494 = vst.msk [vmem:[#allocation2 + $0x130] sm:$0xff] %vm1455, %v1439
      %1495 = vst.msk [vmem:[#allocation2 + $0x138] sm:$0xff] %vm1455, %v1440
      %1496 = vst.msk [vmem:[#allocation2 + $0x140] sm:$0xff] %vm1455, %v1441
      %1497 = vst.msk [vmem:[#allocation2 + $0x148] sm:$0xff] %vm1455, %v1442
      %1498 = vst.msk [vmem:[#allocation2 + $0x150] sm:$0xff] %vm1455, %v1443
      %1499 = vst.msk [vmem:[#allocation2 + $0x158] sm:$0xff] %vm1455, %v1444
      %1500 = vst.msk [vmem:[#allocation2 + $0x160] sm:$0xff] %vm1455, %v1445
      %1501 = vst.msk [vmem:[#allocation2 + $0x168] sm:$0xff] %vm1455, %v1446
      %1502 = vst.msk [vmem:[#allocation2 + $0x170] sm:$0xff] %vm1455, %v1447
      %1503 = vst.msk [vmem:[#allocation2 + $0x178] sm:$0xff] %vm1455, %v1448
      %1504 = vst.msk [vmem:[#allocation2 + $0x180] sm:$0xff] %vm1455, %v1449
      %1505 = vst.msk [vmem:[#allocation2 + $0x188] sm:$0xff] %vm1455, %v1450
      %1506 = vst.msk [vmem:[#allocation2 + $0x190] sm:$0xff] %vm1455, %v1451
      %1507 = vst.msk [vmem:[#allocation2 + $0x198] sm:$0xff] %vm1455, %v1452
      %1508 = vst.msk [vmem:[#allocation2 + $0x1a0] sm:$0xff] %vm1455, %v1453
      %1509 = vst.msk [vmem:[#allocation2 + $0x1a8] sm:$0xff] %vm1455, %v1454
      %v1510 = vld [vmem:[%s4] sm:$0x1]
      %v1512 = vlaneseq
      %v1513 = vshrl.u32 %v1512, 7
      %v1514 = vsub.s32 0, %v1513
      %v1515 = vrot.slane %v1510, %v1514
      %v1517 = vadd.f32 %v1515, 0.0
      %v1518 = vld [vmem:[#allocation2] sm:$0xff]
      %v1519 = vld [vmem:[#allocation2 + $0x8] sm:$0xff]
      %v1520 = vld [vmem:[#allocation2 + $0x18] sm:$0xff]
      %v1521 = vld [vmem:[#allocation2 + $0x20] sm:$0xff]
      %v1522 = vld [vmem:[#allocation2 + $0x30] sm:$0xff]
      %v1523 = vld [vmem:[#allocation2 + $0x38] sm:$0xff]
      %v1524 = vld [vmem:[#allocation2 + $0x48] sm:$0xff]
      %v1525 = vld [vmem:[#allocation2 + $0x50] sm:$0xff]
      %v1526 = vld [vmem:[#allocation2 + $0x60] sm:$0xff]
      %v1527 = vld [vmem:[#allocation2 + $0x68] sm:$0xff]
      %v1528 = vld [vmem:[#allocation2 + $0x78] sm:$0xff]
      %v1529 = vld [vmem:[#allocation2 + $0x80] sm:$0xff]
      %v1530 = vld [vmem:[#allocation2 + $0x90] sm:$0xff]
      %v1531 = vld [vmem:[#allocation2 + $0x98] sm:$0xff]
      %v1532 = vld [vmem:[#allocation2 + $0xa8] sm:$0xff]
      %v1533 = vld [vmem:[#allocation2 + $0xb0] sm:$0xff]
      %v1534 = vld [vmem:[#allocation2 + $0xc0] sm:$0xff]
      %v1535 = vld [vmem:[#allocation2 + $0xc8] sm:$0xff]
      %v1536 = vld [vmem:[#allocation2 + $0xd8] sm:$0xff]
      %v1537 = vld [vmem:[#allocation2 + $0xe0] sm:$0xff]
      %v1538 = vld [vmem:[#allocation2 + $0xf0] sm:$0xff]
      %v1539 = vld [vmem:[#allocation2 + $0xf8] sm:$0xff]
      %v1540 = vld [vmem:[#allocation2 + $0x108] sm:$0xff]
      %v1541 = vld [vmem:[#allocation2 + $0x110] sm:$0xff]
      %v1542 = vld [vmem:[#allocation2 + $0x120] sm:$0xff]
      %v1543 = vld [vmem:[#allocation2 + $0x128] sm:$0xff]
      %v1544 = vld [vmem:[#allocation2 + $0x138] sm:$0xff]
      %v1545 = vld [vmem:[#allocation2 + $0x140] sm:$0xff]
      %v1546 = vld [vmem:[#allocation2 + $0x150] sm:$0xff]
      %v1547 = vld [vmem:[#allocation2 + $0x158] sm:$0xff]
      %v1548 = vld [vmem:[#allocation2 + $0x168] sm:$0xff]
      %v1549 = vld [vmem:[#allocation2 + $0x170] sm:$0xff]
      %v1550 = vld [vmem:[%s3] sm:$0xf]
      %v1552 = vsel %vm1455, %v1518, 0
      %v1555 = vsel %vm1455, %v1519, 0
      %v1558 = vsel %vm1455, %v1520, 0
      %v1561 = vsel %vm1455, %v1521, 0
      %v1564 = vsel %vm1455, %v1522, 0
      %v1567 = vsel %vm1455, %v1523, 0
      %v1570 = vsel %vm1455, %v1524, 0
      %v1573 = vsel %vm1455, %v1525, 0
      %v1576 = vsel %vm1455, %v1526, 0
      %v1579 = vsel %vm1455, %v1527, 0
      %v1582 = vsel %vm1455, %v1528, 0
      %v1585 = vsel %vm1455, %v1529, 0
      %v1588 = vsel %vm1455, %v1530, 0
      %v1591 = vsel %vm1455, %v1531, 0
      %v1594 = vsel %vm1455, %v1532, 0
      %v1597 = vsel %vm1455, %v1533, 0
      %v1600 = vsel %vm1455, %v1534, 0
      %v1603 = vsel %vm1455, %v1535, 0
      %v1606 = vsel %vm1455, %v1536, 0
      %v1609 = vsel %vm1455, %v1537, 0
      %v1612 = vsel %vm1455, %v1538, 0
      %v1615 = vsel %vm1455, %v1539, 0
      %v1618 = vsel %vm1455, %v1540, 0
      %v1621 = vsel %vm1455, %v1541, 0
      %v1624 = vsel %vm1455, %v1542, 0
      %v1627 = vsel %vm1455, %v1543, 0
      %v1630 = vsel %vm1455, %v1544, 0
      %v1633 = vsel %vm1455, %v1545, 0
      %v1636 = vsel %vm1455, %v1546, 0
      %v1639 = vsel %vm1455, %v1547, 0
      %v1642 = vsel %vm1455, %v1548, 0
      %v1645 = vsel %vm1455, %v1549, 0
      %vm1647 = vcmask 1043456
      %v1649 = vsel %vm1647, %v1550, 0
      %1651 = vmatprep.subr.mxu0 0.0
      %1652 = vmatpush1.msra.mxu0 0.0
      %1653 = vmatprep.subr.mxu0 0.0
      %1654 = vmatpush1.msra.mxu0 0.0
      %1655 = vmatprep.subr.mxu0 0.0
      %1656 = vmatpush1.msra.mxu0 0.0
      %1657 = vmatprep.subr.mxu0 0.0
      %1658 = vmatpush1.msra.mxu0 0.0
      %1659 = vmatprep.subr.mxu0 0.0
      %1660 = vmatpush1.msra.mxu0 0.0
      %1661 = vmatprep.subr.mxu0 0.0
      %1662 = vmatpush1.msra.mxu0 0.0
      %1663 = vmatprep.subr.mxu0 0.0
      %1664 = vmatpush1.msra.mxu0 0.0
      %1665 = vmatprep.subr.mxu0 0.0
      %1666 = vmatpush1.msra.mxu0 0.0
      %1667 = vmatprep.subr.mxu0 0.0
      %1668 = vmatpush1.msra.mxu0 0.0
      %1669 = vmatprep.subr.mxu0 0.0
      %1670 = vmatpush1.msra.mxu0 0.0
      %1671 = vmatprep.subr.mxu0 0.0
      %1672 = vmatpush1.msra.mxu0 0.0
      %1673 = vmatprep.subr.mxu0 0.0
      %1674 = vmatpush1.msra.mxu0 0.0
      %1675 = vmatprep.subr.mxu0 0.0
      %1676 = vmatpush1.msra.mxu0 0.0
      %1677 = vmatprep.subr.mxu0 0.0
      %1678 = vmatpush1.msra.mxu0 0.0
      %1679 = vmatprep.subr.mxu0 0.0
      %1680 = vmatpush1.msra.mxu0 0.0
      %1681 = vmatprep.subr.mxu0 0.0
      %1682 = vmatpush1.msra.mxu0 %v1649
      %1683 = vmatprep.subr.mxu0 0.0
      %1684 = vmatpush2.msra.mxu0 0.0
      %1685 = vmatprep.subr.mxu0 0.0
      %1686 = vmatpush2.msra.mxu0 0.0
      %1687 = vmatprep.subr.mxu0 0.0
      %1688 = vmatpush2.msra.mxu0 0.0
      %1689 = vmatprep.subr.mxu0 0.0
      %1690 = vmatpush2.msra.mxu0 0.0
      %1691 = vmatprep.subr.mxu0 0.0
      %1692 = vmatpush2.msra.mxu0 0.0
      %1693 = vmatprep.subr.mxu0 0.0
      %1694 = vmatpush2.msra.mxu0 0.0
      %1695 = vmatprep.subr.mxu0 0.0
      %1696 = vmatpush2.msra.mxu0 0.0
      %1697 = vmatprep.subr.mxu0 0.0
      %1698 = vmatpush2.msra.mxu0 0.0
      %1699 = vmatprep.subr.mxu0 0.0
      %1700 = vmatpush2.msra.mxu0 0.0
      %1701 = vmatprep.subr.mxu0 0.0
      %1702 = vmatpush2.msra.mxu0 0.0
      %1703 = vmatprep.subr.mxu0 0.0
      %1704 = vmatpush2.msra.mxu0 0.0
      %1705 = vmatprep.subr.mxu0 0.0
      %1706 = vmatpush2.msra.mxu0 0.0
      %1707 = vmatprep.subr.mxu0 0.0
      %1708 = vmatpush2.msra.mxu0 0.0
      %1709 = vmatprep.subr.mxu0 0.0
      %1710 = vmatpush2.msra.mxu0 0.0
      %1711 = vmatprep.subr.mxu0 0.0
      %1712 = vmatpush2.msra.mxu0 0.0
      %1713 = vmatprep.subr.mxu0 0.0
      %1714 = vmatpush2.msra.mxu0 0.0
      %1715 = vmatprep.mubr.f32.mxu0 0.0
      %1716 = vmatmul.mubr.f32.gmra.mxu0 %v1552
      %v1717 = vpop.f32.mrf.mxu0
      %v1718 = vadd.f32 0.0, %v1717
      %v1719 = vpop.f32.mrf.mxu0
      %1720 = vmatprep.mubr.f32.mxu0 0.0
      %1721 = vmatmul.mubr.f32.gmra.mxu0 %v1555
      %v1722 = vpop.f32.mrf.mxu0
      %v1723 = vadd.f32 0.0, %v1722
      %v1724 = vpop.f32.mrf.mxu0
      %1725 = vmatprep.mubr.f32.mxu0 0.0
      %1726 = vmatmul.mubr.f32.gmra.mxu0 %v1558
      %v1727 = vpop.f32.mrf.mxu0
      %v1728 = vadd.f32 0.0, %v1727
      %v1729 = vpop.f32.mrf.mxu0
      %1730 = vmatprep.mubr.f32.mxu0 0.0
      %1731 = vmatmul.mubr.f32.gmra.mxu0 %v1561
      %v1732 = vpop.f32.mrf.mxu0
      %v1733 = vadd.f32 0.0, %v1732
      %v1734 = vpop.f32.mrf.mxu0
      %1735 = vmatprep.mubr.f32.mxu0 0.0
      %1736 = vmatmul.mubr.f32.gmra.mxu0 %v1564
      %v1737 = vpop.f32.mrf.mxu0
      %v1738 = vadd.f32 0.0, %v1737
      %v1739 = vpop.f32.mrf.mxu0
      %1740 = vmatprep.mubr.f32.mxu0 0.0
      %1741 = vmatmul.mubr.f32.gmra.mxu0 %v1567
      %v1742 = vpop.f32.mrf.mxu0
      %v1743 = vadd.f32 0.0, %v1742
      %v1744 = vpop.f32.mrf.mxu0
      %1745 = vmatprep.mubr.f32.mxu0 0.0
      %1746 = vmatmul.mubr.f32.gmra.mxu0 %v1570
      %v1747 = vpop.f32.mrf.mxu0
      %v1748 = vadd.f32 0.0, %v1747
      %v1749 = vpop.f32.mrf.mxu0
      %1750 = vmatprep.mubr.f32.mxu0 0.0
      %1751 = vmatmul.mubr.f32.gmra.mxu0 %v1573
      %v1752 = vpop.f32.mrf.mxu0
      %v1753 = vadd.f32 0.0, %v1752
      %v1754 = vpop.f32.mrf.mxu0
      %1755 = vmatprep.mubr.f32.mxu0 0.0
      %1756 = vmatmul.mubr.f32.gmra.mxu0 %v1576
      %v1757 = vpop.f32.mrf.mxu0
      %v1758 = vadd.f32 0.0, %v1757
      %v1759 = vpop.f32.mrf.mxu0
      %1760 = vmatprep.mubr.f32.mxu0 0.0
      %1761 = vmatmul.mubr.f32.gmra.mxu0 %v1579
      %v1762 = vpop.f32.mrf.mxu0
      %v1763 = vadd.f32 0.0, %v1762
      %v1764 = vpop.f32.mrf.mxu0
      %1765 = vmatprep.mubr.f32.mxu0 0.0
      %1766 = vmatmul.mubr.f32.gmra.mxu0 %v1582
      %v1767 = vpop.f32.mrf.mxu0
      %v1768 = vadd.f32 0.0, %v1767
      %v1769 = vpop.f32.mrf.mxu0
      %1770 = vmatprep.mubr.f32.mxu0 0.0
      %1771 = vmatmul.mubr.f32.gmra.mxu0 %v1585
      %v1772 = vpop.f32.mrf.mxu0
      %v1773 = vadd.f32 0.0, %v1772
      %v1774 = vpop.f32.mrf.mxu0
      %1775 = vmatprep.mubr.f32.mxu0 0.0
      %1776 = vmatmul.mubr.f32.gmra.mxu0 %v1588
      %v1777 = vpop.f32.mrf.mxu0
      %v1778 = vadd.f32 0.0, %v1777
      %v1779 = vpop.f32.mrf.mxu0
      %1780 = vmatprep.mubr.f32.mxu0 0.0
      %1781 = vmatmul.mubr.f32.gmra.mxu0 %v1591
      %v1782 = vpop.f32.mrf.mxu0
      %v1783 = vadd.f32 0.0, %v1782
      %v1784 = vpop.f32.mrf.mxu0
      %1785 = vmatprep.mubr.f32.mxu0 0.0
      %1786 = vmatmul.mubr.f32.gmra.mxu0 %v1594
      %v1787 = vpop.f32.mrf.mxu0
      %v1788 = vadd.f32 0.0, %v1787
      %v1789 = vpop.f32.mrf.mxu0
      %1790 = vmatprep.mubr.f32.mxu0 0.0
      %1791 = vmatmul.mubr.f32.gmra.mxu0 %v1597
      %v1792 = vpop.f32.mrf.mxu0
      %v1793 = vadd.f32 0.0, %v1792
      %v1794 = vpop.f32.mrf.mxu0
      %1795 = vmatprep.mubr.f32.mxu0 0.0
      %1796 = vmatmul.mubr.f32.gmra.mxu0 %v1600
      %v1797 = vpop.f32.mrf.mxu0
      %v1798 = vadd.f32 0.0, %v1797
      %v1799 = vpop.f32.mrf.mxu0
      %1800 = vmatprep.mubr.f32.mxu0 0.0
      %1801 = vmatmul.mubr.f32.gmra.mxu0 %v1603
      %v1802 = vpop.f32.mrf.mxu0
      %v1803 = vadd.f32 0.0, %v1802
      %v1804 = vpop.f32.mrf.mxu0
      %1805 = vmatprep.mubr.f32.mxu0 0.0
      %1806 = vmatmul.mubr.f32.gmra.mxu0 %v1606
      %v1807 = vpop.f32.mrf.mxu0
      %v1808 = vadd.f32 0.0, %v1807
      %v1809 = vpop.f32.mrf.mxu0
      %1810 = vmatprep.mubr.f32.mxu0 0.0
      %1811 = vmatmul.mubr.f32.gmra.mxu0 %v1609
      %v1812 = vpop.f32.mrf.mxu0
      %v1813 = vadd.f32 0.0, %v1812
      %v1814 = vpop.f32.mrf.mxu0
      %1815 = vmatprep.mubr.f32.mxu0 0.0
      %1816 = vmatmul.mubr.f32.gmra.mxu0 %v1612
      %v1817 = vpop.f32.mrf.mxu0
      %v1818 = vadd.f32 0.0, %v1817
      %v1819 = vpop.f32.mrf.mxu0
      %1820 = vmatprep.mubr.f32.mxu0 0.0
      %1821 = vmatmul.mubr.f32.gmra.mxu0 %v1615
      %v1822 = vpop.f32.mrf.mxu0
      %v1823 = vadd.f32 0.0, %v1822
      %v1824 = vpop.f32.mrf.mxu0
      %1825 = vmatprep.mubr.f32.mxu0 0.0
      %1826 = vmatmul.mubr.f32.gmra.mxu0 %v1618
      %v1827 = vpop.f32.mrf.mxu0
      %v1828 = vadd.f32 0.0, %v1827
      %v1829 = vpop.f32.mrf.mxu0
      %1830 = vmatprep.mubr.f32.mxu0 0.0
      %1831 = vmatmul.mubr.f32.gmra.mxu0 %v1621
      %v1832 = vpop.f32.mrf.mxu0
      %v1833 = vadd.f32 0.0, %v1832
      %v1834 = vpop.f32.mrf.mxu0
      %1835 = vmatprep.mubr.f32.mxu0 0.0
      %1836 = vmatmul.mubr.f32.gmra.mxu0 %v1624
      %v1837 = vpop.f32.mrf.mxu0
      %v1838 = vadd.f32 0.0, %v1837
      %v1839 = vpop.f32.mrf.mxu0
      %1840 = vmatprep.mubr.f32.mxu0 0.0
      %1841 = vmatmul.mubr.f32.gmra.mxu0 %v1627
      %v1842 = vpop.f32.mrf.mxu0
      %v1843 = vadd.f32 0.0, %v1842
      %v1844 = vpop.f32.mrf.mxu0
      %1845 = vmatprep.mubr.f32.mxu0 0.0
      %1846 = vmatmul.mubr.f32.gmra.mxu0 %v1630
      %v1847 = vpop.f32.mrf.mxu0
      %v1848 = vadd.f32 0.0, %v1847
      %v1849 = vpop.f32.mrf.mxu0
      %1850 = vmatprep.mubr.f32.mxu0 0.0
      %1851 = vmatmul.mubr.f32.gmra.mxu0 %v1633
      %v1852 = vpop.f32.mrf.mxu0
      %v1853 = vadd.f32 0.0, %v1852
      %v1854 = vpop.f32.mrf.mxu0
      %1855 = vmatprep.mubr.f32.mxu0 0.0
      %1856 = vmatmul.mubr.f32.gmra.mxu0 %v1636
      %v1857 = vpop.f32.mrf.mxu0
      %v1858 = vadd.f32 0.0, %v1857
      %v1859 = vpop.f32.mrf.mxu0
      %1860 = vmatprep.mubr.f32.mxu0 0.0
      %1861 = vmatmul.mubr.f32.gmra.mxu0 %v1639
      %v1862 = vpop.f32.mrf.mxu0
      %v1863 = vadd.f32 0.0, %v1862
      %v1864 = vpop.f32.mrf.mxu0
      %1865 = vmatprep.mubr.f32.mxu0 0.0
      %1866 = vmatmul.mubr.f32.gmra.mxu0 %v1642
      %v1867 = vpop.f32.mrf.mxu0
      %v1868 = vadd.f32 0.0, %v1867
      %v1869 = vpop.f32.mrf.mxu0
      %1870 = vmatprep.mubr.f32.mxu0 0.0
      %1871 = vmatmul.mubr.f32.gmra.mxu0 %v1645
      %v1872 = vpop.f32.mrf.mxu0
      %v1873 = vadd.f32 0.0, %v1872
      %v1874 = vpop.f32.mrf.mxu0
      %1875 = vdwg.mxu0
      %v1876 = vadd.f32 %v1517, %v1718
      %v1877 = vadd.f32 %v1517, %v1723
      %v1878 = vadd.f32 %v1517, %v1728
      %v1879 = vadd.f32 %v1517, %v1733
      %v1880 = vadd.f32 %v1517, %v1738
      %v1881 = vadd.f32 %v1517, %v1743
      %v1882 = vadd.f32 %v1517, %v1748
      %v1883 = vadd.f32 %v1517, %v1753
      %v1884 = vadd.f32 %v1517, %v1758
      %v1885 = vadd.f32 %v1517, %v1763
      %v1886 = vadd.f32 %v1517, %v1768
      %v1887 = vadd.f32 %v1517, %v1773
      %v1888 = vadd.f32 %v1517, %v1778
      %v1889 = vadd.f32 %v1517, %v1783
      %v1890 = vadd.f32 %v1517, %v1788
      %v1891 = vadd.f32 %v1517, %v1793
      %v1892 = vadd.f32 %v1517, %v1798
      %v1893 = vadd.f32 %v1517, %v1803
      %v1894 = vadd.f32 %v1517, %v1808
      %v1895 = vadd.f32 %v1517, %v1813
      %v1896 = vadd.f32 %v1517, %v1818
      %v1897 = vadd.f32 %v1517, %v1823
      %v1898 = vadd.f32 %v1517, %v1828
      %v1899 = vadd.f32 %v1517, %v1833
      %v1900 = vadd.f32 %v1517, %v1838
      %v1901 = vadd.f32 %v1517, %v1843
      %v1902 = vadd.f32 %v1517, %v1848
      %v1903 = vadd.f32 %v1517, %v1853
      %v1904 = vadd.f32 %v1517, %v1858
      %v1905 = vadd.f32 %v1517, %v1863
      %v1906 = vadd.f32 %v1517, %v1868
      %v1907 = vadd.f32 %v1517, %v1873
      %v1908 = vld [vmem:[#allocation2 + $0x1] sm:$0xff]
      %v1909 = vld [vmem:[#allocation2 + $0x9] sm:$0xff]
      %v1910 = vld [vmem:[#allocation2 + $0x19] sm:$0xff]
      %v1911 = vld [vmem:[#allocation2 + $0x21] sm:$0xff]
      %v1912 = vld [vmem:[#allocation2 + $0x31] sm:$0xff]
      %v1913 = vld [vmem:[#allocation2 + $0x39] sm:$0xff]
      %v1914 = vld [vmem:[#allocation2 + $0x49] sm:$0xff]
      %v1915 = vld [vmem:[#allocation2 + $0x51] sm:$0xff]
      %v1916 = vld [vmem:[#allocation2 + $0x61] sm:$0xff]
      %v1917 = vld [vmem:[#allocation2 + $0x69] sm:$0xff]
      %v1918 = vld [vmem:[#allocation2 + $0x79] sm:$0xff]
      %v1919 = vld [vmem:[#allocation2 + $0x81] sm:$0xff]
      %v1920 = vld [vmem:[#allocation2 + $0x91] sm:$0xff]
      %v1921 = vld [vmem:[#allocation2 + $0x99] sm:$0xff]
      %v1922 = vld [vmem:[#allocation2 + $0xa9] sm:$0xff]
      %v1923 = vld [vmem:[#allocation2 + $0xb1] sm:$0xff]
      %v1924 = vld [vmem:[#allocation2 + $0xc1] sm:$0xff]
      %v1925 = vld [vmem:[#allocation2 + $0xc9] sm:$0xff]
      %v1926 = vld [vmem:[#allocation2 + $0xd9] sm:$0xff]
      %v1927 = vld [vmem:[#allocation2 + $0xe1] sm:$0xff]
      %v1928 = vld [vmem:[#allocation2 + $0xf1] sm:$0xff]
      %v1929 = vld [vmem:[#allocation2 + $0xf9] sm:$0xff]
      %v1930 = vld [vmem:[#allocation2 + $0x109] sm:$0xff]
      %v1931 = vld [vmem:[#allocation2 + $0x111] sm:$0xff]
      %v1932 = vld [vmem:[#allocation2 + $0x121] sm:$0xff]
      %v1933 = vld [vmem:[#allocation2 + $0x129] sm:$0xff]
      %v1934 = vld [vmem:[#allocation2 + $0x139] sm:$0xff]
      %v1935 = vld [vmem:[#allocation2 + $0x141] sm:$0xff]
      %v1936 = vld [vmem:[#allocation2 + $0x151] sm:$0xff]
      %v1937 = vld [vmem:[#allocation2 + $0x159] sm:$0xff]
      %v1938 = vld [vmem:[#allocation2 + $0x169] sm:$0xff]
      %v1939 = vld [vmem:[#allocation2 + $0x171] sm:$0xff]
      %s1940 = scalar_lea.vmem %s3, 4
      %v1941 = vld [vmem:[%s1940] sm:$0xf]
      %v1943 = vsel %vm1455, %v1908, 0
      %v1946 = vsel %vm1455, %v1909, 0
      %v1949 = vsel %vm1455, %v1910, 0
      %v1952 = vsel %vm1455, %v1911, 0
      %v1955 = vsel %vm1455, %v1912, 0
      %v1958 = vsel %vm1455, %v1913, 0
      %v1961 = vsel %vm1455, %v1914, 0
      %v1964 = vsel %vm1455, %v1915, 0
      %v1967 = vsel %vm1455, %v1916, 0
      %v1970 = vsel %vm1455, %v1917, 0
      %v1973 = vsel %vm1455, %v1918, 0
      %v1976 = vsel %vm1455, %v1919, 0
      %v1979 = vsel %vm1455, %v1920, 0
      %v1982 = vsel %vm1455, %v1921, 0
      %v1985 = vsel %vm1455, %v1922, 0
      %v1988 = vsel %vm1455, %v1923, 0
      %v1991 = vsel %vm1455, %v1924, 0
      %v1994 = vsel %vm1455, %v1925, 0
      %v1997 = vsel %vm1455, %v1926, 0
      %v2000 = vsel %vm1455, %v1927, 0
      %v2003 = vsel %vm1455, %v1928, 0
      %v2006 = vsel %vm1455, %v1929, 0
      %v2009 = vsel %vm1455, %v1930, 0
      %v2012 = vsel %vm1455, %v1931, 0
      %v2015 = vsel %vm1455, %v1932, 0
      %v2018 = vsel %vm1455, %v1933, 0
      %v2021 = vsel %vm1455, %v1934, 0
      %v2024 = vsel %vm1455, %v1935, 0
      %v2027 = vsel %vm1455, %v1936, 0
      %v2030 = vsel %vm1455, %v1937, 0
      %v2033 = vsel %vm1455, %v1938, 0
      %v2036 = vsel %vm1455, %v1939, 0
      %v2039 = vsel %vm1647, %v1941, 0
      %2041 = vmatprep.subr.mxu0 0.0
      %2042 = vmatpush1.msra.mxu0 0.0
      %2043 = vmatprep.subr.mxu0 0.0
      %2044 = vmatpush1.msra.mxu0 0.0
      %2045 = vmatprep.subr.mxu0 0.0
      %2046 = vmatpush1.msra.mxu0 0.0
      %2047 = vmatprep.subr.mxu0 0.0
      %2048 = vmatpush1.msra.mxu0 0.0
      %2049 = vmatprep.subr.mxu0 0.0
      %2050 = vmatpush1.msra.mxu0 0.0
      %2051 = vmatprep.subr.mxu0 0.0
      %2052 = vmatpush1.msra.mxu0 0.0
      %2053 = vmatprep.subr.mxu0 0.0
      %2054 = vmatpush1.msra.mxu0 0.0
      %2055 = vmatprep.subr.mxu0 0.0
      %2056 = vmatpush1.msra.mxu0 0.0
      %2057 = vmatprep.subr.mxu0 0.0
      %2058 = vmatpush1.msra.mxu0 0.0
      %2059 = vmatprep.subr.mxu0 0.0
      %2060 = vmatpush1.msra.mxu0 0.0
      %2061 = vmatprep.subr.mxu0 0.0
      %2062 = vmatpush1.msra.mxu0 0.0
      %2063 = vmatprep.subr.mxu0 0.0
      %2064 = vmatpush1.msra.mxu0 0.0
      %2065 = vmatprep.subr.mxu0 0.0
      %2066 = vmatpush1.msra.mxu0 0.0
      %2067 = vmatprep.subr.mxu0 0.0
      %2068 = vmatpush1.msra.mxu0 0.0
      %2069 = vmatprep.subr.mxu0 0.0
      %2070 = vmatpush1.msra.mxu0 0.0
      %2071 = vmatprep.subr.mxu0 0.0
      %2072 = vmatpush1.msra.mxu0 %v2039
      %2073 = vmatprep.subr.mxu0 0.0
      %2074 = vmatpush2.msra.mxu0 0.0
      %2075 = vmatprep.subr.mxu0 0.0
      %2076 = vmatpush2.msra.mxu0 0.0
      %2077 = vmatprep.subr.mxu0 0.0
      %2078 = vmatpush2.msra.mxu0 0.0
      %2079 = vmatprep.subr.mxu0 0.0
      %2080 = vmatpush2.msra.mxu0 0.0
      %2081 = vmatprep.subr.mxu0 0.0
      %2082 = vmatpush2.msra.mxu0 0.0
      %2083 = vmatprep.subr.mxu0 0.0
      %2084 = vmatpush2.msra.mxu0 0.0
      %2085 = vmatprep.subr.mxu0 0.0
      %2086 = vmatpush2.msra.mxu0 0.0
      %2087 = vmatprep.subr.mxu0 0.0
      %2088 = vmatpush2.msra.mxu0 0.0
      %2089 = vmatprep.subr.mxu0 0.0
      %2090 = vmatpush2.msra.mxu0 0.0
      %2091 = vmatprep.subr.mxu0 0.0
      %2092 = vmatpush2.msra.mxu0 0.0
      %2093 = vmatprep.subr.mxu0 0.0
      %2094 = vmatpush2.msra.mxu0 0.0
      %2095 = vmatprep.subr.mxu0 0.0
      %2096 = vmatpush2.msra.mxu0 0.0
      %2097 = vmatprep.subr.mxu0 0.0
      %2098 = vmatpush2.msra.mxu0 0.0
      %2099 = vmatprep.subr.mxu0 0.0
      %2100 = vmatpush2.msra.mxu0 0.0
      %2101 = vmatprep.subr.mxu0 0.0
      %2102 = vmatpush2.msra.mxu0 0.0
      %2103 = vmatprep.subr.mxu0 0.0
      %2104 = vmatpush2.msra.mxu0 0.0
      %2105 = vmatprep.mubr.f32.mxu0 0.0
      %2106 = vmatmul.mubr.f32.gmra.mxu0 %v1943
      %v2107 = vpop.f32.mrf.mxu0
      %v2108 = vadd.f32 0.0, %v2107
      %v2109 = vpop.f32.mrf.mxu0
      %2110 = vmatprep.mubr.f32.mxu0 0.0
      %2111 = vmatmul.mubr.f32.gmra.mxu0 %v1946
      %v2112 = vpop.f32.mrf.mxu0
      %v2113 = vadd.f32 0.0, %v2112
      %v2114 = vpop.f32.mrf.mxu0
      %2115 = vmatprep.mubr.f32.mxu0 0.0
      %2116 = vmatmul.mubr.f32.gmra.mxu0 %v1949
      %v2117 = vpop.f32.mrf.mxu0
      %v2118 = vadd.f32 0.0, %v2117
      %v2119 = vpop.f32.mrf.mxu0
      %2120 = vmatprep.mubr.f32.mxu0 0.0
      %2121 = vmatmul.mubr.f32.gmra.mxu0 %v1952
      %v2122 = vpop.f32.mrf.mxu0
      %v2123 = vadd.f32 0.0, %v2122
      %v2124 = vpop.f32.mrf.mxu0
      %2125 = vmatprep.mubr.f32.mxu0 0.0
      %2126 = vmatmul.mubr.f32.gmra.mxu0 %v1955
      %v2127 = vpop.f32.mrf.mxu0
      %v2128 = vadd.f32 0.0, %v2127
      %v2129 = vpop.f32.mrf.mxu0
      %2130 = vmatprep.mubr.f32.mxu0 0.0
      %2131 = vmatmul.mubr.f32.gmra.mxu0 %v1958
      %v2132 = vpop.f32.mrf.mxu0
      %v2133 = vadd.f32 0.0, %v2132
      %v2134 = vpop.f32.mrf.mxu0
      %2135 = vmatprep.mubr.f32.mxu0 0.0
      %2136 = vmatmul.mubr.f32.gmra.mxu0 %v1961
      %v2137 = vpop.f32.mrf.mxu0
      %v2138 = vadd.f32 0.0, %v2137
      %v2139 = vpop.f32.mrf.mxu0
      %2140 = vmatprep.mubr.f32.mxu0 0.0
      %2141 = vmatmul.mubr.f32.gmra.mxu0 %v1964
      %v2142 = vpop.f32.mrf.mxu0
      %v2143 = vadd.f32 0.0, %v2142
      %v2144 = vpop.f32.mrf.mxu0
      %2145 = vmatprep.mubr.f32.mxu0 0.0
      %2146 = vmatmul.mubr.f32.gmra.mxu0 %v1967
      %v2147 = vpop.f32.mrf.mxu0
      %v2148 = vadd.f32 0.0, %v2147
      %v2149 = vpop.f32.mrf.mxu0
      %2150 = vmatprep.mubr.f32.mxu0 0.0
      %2151 = vmatmul.mubr.f32.gmra.mxu0 %v1970
      %v2152 = vpop.f32.mrf.mxu0
      %v2153 = vadd.f32 0.0, %v2152
      %v2154 = vpop.f32.mrf.mxu0
      %2155 = vmatprep.mubr.f32.mxu0 0.0
      %2156 = vmatmul.mubr.f32.gmra.mxu0 %v1973
      %v2157 = vpop.f32.mrf.mxu0
      %v2158 = vadd.f32 0.0, %v2157
      %v2159 = vpop.f32.mrf.mxu0
      %2160 = vmatprep.mubr.f32.mxu0 0.0
      %2161 = vmatmul.mubr.f32.gmra.mxu0 %v1976
      %v2162 = vpop.f32.mrf.mxu0
      %v2163 = vadd.f32 0.0, %v2162
      %v2164 = vpop.f32.mrf.mxu0
      %2165 = vmatprep.mubr.f32.mxu0 0.0
      %2166 = vmatmul.mubr.f32.gmra.mxu0 %v1979
      %v2167 = vpop.f32.mrf.mxu0
      %v2168 = vadd.f32 0.0, %v2167
      %v2169 = vpop.f32.mrf.mxu0
      %2170 = vmatprep.mubr.f32.mxu0 0.0
      %2171 = vmatmul.mubr.f32.gmra.mxu0 %v1982
      %v2172 = vpop.f32.mrf.mxu0
      %v2173 = vadd.f32 0.0, %v2172
      %v2174 = vpop.f32.mrf.mxu0
      %2175 = vmatprep.mubr.f32.mxu0 0.0
      %2176 = vmatmul.mubr.f32.gmra.mxu0 %v1985
      %v2177 = vpop.f32.mrf.mxu0
      %v2178 = vadd.f32 0.0, %v2177
      %v2179 = vpop.f32.mrf.mxu0
      %2180 = vmatprep.mubr.f32.mxu0 0.0
      %2181 = vmatmul.mubr.f32.gmra.mxu0 %v1988
      %v2182 = vpop.f32.mrf.mxu0
      %v2183 = vadd.f32 0.0, %v2182
      %v2184 = vpop.f32.mrf.mxu0
      %2185 = vmatprep.mubr.f32.mxu0 0.0
      %2186 = vmatmul.mubr.f32.gmra.mxu0 %v1991
      %v2187 = vpop.f32.mrf.mxu0
      %v2188 = vadd.f32 0.0, %v2187
      %v2189 = vpop.f32.mrf.mxu0
      %2190 = vmatprep.mubr.f32.mxu0 0.0
      %2191 = vmatmul.mubr.f32.gmra.mxu0 %v1994
      %v2192 = vpop.f32.mrf.mxu0
      %v2193 = vadd.f32 0.0, %v2192
      %v2194 = vpop.f32.mrf.mxu0
      %2195 = vmatprep.mubr.f32.mxu0 0.0
      %2196 = vmatmul.mubr.f32.gmra.mxu0 %v1997
      %v2197 = vpop.f32.mrf.mxu0
      %v2198 = vadd.f32 0.0, %v2197
      %v2199 = vpop.f32.mrf.mxu0
      %2200 = vmatprep.mubr.f32.mxu0 0.0
      %2201 = vmatmul.mubr.f32.gmra.mxu0 %v2000
      %v2202 = vpop.f32.mrf.mxu0
      %v2203 = vadd.f32 0.0, %v2202
      %v2204 = vpop.f32.mrf.mxu0
      %2205 = vmatprep.mubr.f32.mxu0 0.0
      %2206 = vmatmul.mubr.f32.gmra.mxu0 %v2003
      %v2207 = vpop.f32.mrf.mxu0
      %v2208 = vadd.f32 0.0, %v2207
      %v2209 = vpop.f32.mrf.mxu0
      %2210 = vmatprep.mubr.f32.mxu0 0.0
      %2211 = vmatmul.mubr.f32.gmra.mxu0 %v2006
      %v2212 = vpop.f32.mrf.mxu0
      %v2213 = vadd.f32 0.0, %v2212
      %v2214 = vpop.f32.mrf.mxu0
      %2215 = vmatprep.mubr.f32.mxu0 0.0
      %2216 = vmatmul.mubr.f32.gmra.mxu0 %v2009
      %v2217 = vpop.f32.mrf.mxu0
      %v2218 = vadd.f32 0.0, %v2217
      %v2219 = vpop.f32.mrf.mxu0
      %2220 = vmatprep.mubr.f32.mxu0 0.0
      %2221 = vmatmul.mubr.f32.gmra.mxu0 %v2012
      %v2222 = vpop.f32.mrf.mxu0
      %v2223 = vadd.f32 0.0, %v2222
      %v2224 = vpop.f32.mrf.mxu0
      %2225 = vmatprep.mubr.f32.mxu0 0.0
      %2226 = vmatmul.mubr.f32.gmra.mxu0 %v2015
      %v2227 = vpop.f32.mrf.mxu0
      %v2228 = vadd.f32 0.0, %v2227
      %v2229 = vpop.f32.mrf.mxu0
      %2230 = vmatprep.mubr.f32.mxu0 0.0
      %2231 = vmatmul.mubr.f32.gmra.mxu0 %v2018
      %v2232 = vpop.f32.mrf.mxu0
      %v2233 = vadd.f32 0.0, %v2232
      %v2234 = vpop.f32.mrf.mxu0
      %2235 = vmatprep.mubr.f32.mxu0 0.0
      %2236 = vmatmul.mubr.f32.gmra.mxu0 %v2021
      %v2237 = vpop.f32.mrf.mxu0
      %v2238 = vadd.f32 0.0, %v2237
      %v2239 = vpop.f32.mrf.mxu0
      %2240 = vmatprep.mubr.f32.mxu0 0.0
      %2241 = vmatmul.mubr.f32.gmra.mxu0 %v2024
      %v2242 = vpop.f32.mrf.mxu0
      %v2243 = vadd.f32 0.0, %v2242
      %v2244 = vpop.f32.mrf.mxu0
      %2245 = vmatprep.mubr.f32.mxu0 0.0
      %2246 = vmatmul.mubr.f32.gmra.mxu0 %v2027
      %v2247 = vpop.f32.mrf.mxu0
      %v2248 = vadd.f32 0.0, %v2247
      %v2249 = vpop.f32.mrf.mxu0
      %2250 = vmatprep.mubr.f32.mxu0 0.0
      %2251 = vmatmul.mubr.f32.gmra.mxu0 %v2030
      %v2252 = vpop.f32.mrf.mxu0
      %v2253 = vadd.f32 0.0, %v2252
      %v2254 = vpop.f32.mrf.mxu0
      %2255 = vmatprep.mubr.f32.mxu0 0.0
      %2256 = vmatmul.mubr.f32.gmra.mxu0 %v2033
      %v2257 = vpop.f32.mrf.mxu0
      %v2258 = vadd.f32 0.0, %v2257
      %v2259 = vpop.f32.mrf.mxu0
      %2260 = vmatprep.mubr.f32.mxu0 0.0
      %2261 = vmatmul.mubr.f32.gmra.mxu0 %v2036
      %v2262 = vpop.f32.mrf.mxu0
      %v2263 = vadd.f32 0.0, %v2262
      %v2264 = vpop.f32.mrf.mxu0
      %2265 = vdwg.mxu0
      %v2266 = vadd.f32 %v1876, %v2108
      %v2267 = vadd.f32 %v1877, %v2113
      %v2268 = vadd.f32 %v1878, %v2118
      %v2269 = vadd.f32 %v1879, %v2123
      %v2270 = vadd.f32 %v1880, %v2128
      %v2271 = vadd.f32 %v1881, %v2133
      %v2272 = vadd.f32 %v1882, %v2138
      %v2273 = vadd.f32 %v1883, %v2143
      %v2274 = vadd.f32 %v1884, %v2148
      %v2275 = vadd.f32 %v1885, %v2153
      %v2276 = vadd.f32 %v1886, %v2158
      %v2277 = vadd.f32 %v1887, %v2163
      %v2278 = vadd.f32 %v1888, %v2168
      %v2279 = vadd.f32 %v1889, %v2173
      %v2280 = vadd.f32 %v1890, %v2178
      %v2281 = vadd.f32 %v1891, %v2183
      %v2282 = vadd.f32 %v1892, %v2188
      %v2283 = vadd.f32 %v1893, %v2193
      %v2284 = vadd.f32 %v1894, %v2198
      %v2285 = vadd.f32 %v1895, %v2203
      %v2286 = vadd.f32 %v1896, %v2208
      %v2287 = vadd.f32 %v1897, %v2213
      %v2288 = vadd.f32 %v1898, %v2218
      %v2289 = vadd.f32 %v1899, %v2223
      %v2290 = vadd.f32 %v1900, %v2228
      %v2291 = vadd.f32 %v1901, %v2233
      %v2292 = vadd.f32 %v1902, %v2238
      %v2293 = vadd.f32 %v1903, %v2243
      %v2294 = vadd.f32 %v1904, %v2248
      %v2295 = vadd.f32 %v1905, %v2253
      %v2296 = vadd.f32 %v1906, %v2258
      %v2297 = vadd.f32 %v1907, %v2263
      %v2298 = vld [vmem:[#allocation2 + $0x2] sm:$0xff]
      %v2299 = vld [vmem:[#allocation2 + $0xa] sm:$0xff]
      %v2300 = vld [vmem:[#allocation2 + $0x1a] sm:$0xff]
      %v2301 = vld [vmem:[#allocation2 + $0x22] sm:$0xff]
      %v2302 = vld [vmem:[#allocation2 + $0x32] sm:$0xff]
      %v2303 = vld [vmem:[#allocation2 + $0x3a] sm:$0xff]
      %v2304 = vld [vmem:[#allocation2 + $0x4a] sm:$0xff]
      %v2305 = vld [vmem:[#allocation2 + $0x52] sm:$0xff]
      %v2306 = vld [vmem:[#allocation2 + $0x62] sm:$0xff]
      %v2307 = vld [vmem:[#allocation2 + $0x6a] sm:$0xff]
      %v2308 = vld [vmem:[#allocation2 + $0x7a] sm:$0xff]
      %v2309 = vld [vmem:[#allocation2 + $0x82] sm:$0xff]
      %v2310 = vld [vmem:[#allocation2 + $0x92] sm:$0xff]
      %v2311 = vld [vmem:[#allocation2 + $0x9a] sm:$0xff]
      %v2312 = vld [vmem:[#allocation2 + $0xaa] sm:$0xff]
      %v2313 = vld [vmem:[#allocation2 + $0xb2] sm:$0xff]
      %v2314 = vld [vmem:[#allocation2 + $0xc2] sm:$0xff]
      %v2315 = vld [vmem:[#allocation2 + $0xca] sm:$0xff]
      %v2316 = vld [vmem:[#allocation2 + $0xda] sm:$0xff]
      %v2317 = vld [vmem:[#allocation2 + $0xe2] sm:$0xff]
      %v2318 = vld [vmem:[#allocation2 + $0xf2] sm:$0xff]
      %v2319 = vld [vmem:[#allocation2 + $0xfa] sm:$0xff]
      %v2320 = vld [vmem:[#allocation2 + $0x10a] sm:$0xff]
      %v2321 = vld [vmem:[#allocation2 + $0x112] sm:$0xff]
      %v2322 = vld [vmem:[#allocation2 + $0x122] sm:$0xff]
      %v2323 = vld [vmem:[#allocation2 + $0x12a] sm:$0xff]
      %v2324 = vld [vmem:[#allocation2 + $0x13a] sm:$0xff]
      %v2325 = vld [vmem:[#allocation2 + $0x142] sm:$0xff]
      %v2326 = vld [vmem:[#allocation2 + $0x152] sm:$0xff]
      %v2327 = vld [vmem:[#allocation2 + $0x15a] sm:$0xff]
      %v2328 = vld [vmem:[#allocation2 + $0x16a] sm:$0xff]
      %v2329 = vld [vmem:[#allocation2 + $0x172] sm:$0xff]
      %s2330 = scalar_lea.vmem %s3, 8
      %v2331 = vld [vmem:[%s2330] sm:$0xf]
      %v2333 = vsel %vm1455, %v2298, 0
      %v2336 = vsel %vm1455, %v2299, 0
      %v2339 = vsel %vm1455, %v2300, 0
      %v2342 = vsel %vm1455, %v2301, 0
      %v2345 = vsel %vm1455, %v2302, 0
      %v2348 = vsel %vm1455, %v2303, 0
      %v2351 = vsel %vm1455, %v2304, 0
      %v2354 = vsel %vm1455, %v2305, 0
      %v2357 = vsel %vm1455, %v2306, 0
      %v2360 = vsel %vm1455, %v2307, 0
      %v2363 = vsel %vm1455, %v2308, 0
      %v2366 = vsel %vm1455, %v2309, 0
      %v2369 = vsel %vm1455, %v2310, 0
      %v2372 = vsel %vm1455, %v2311, 0
      %v2375 = vsel %vm1455, %v2312, 0
      %v2378 = vsel %vm1455, %v2313, 0
      %v2381 = vsel %vm1455, %v2314, 0
      %v2384 = vsel %vm1455, %v2315, 0
      %v2387 = vsel %vm1455, %v2316, 0
      %v2390 = vsel %vm1455, %v2317, 0
      %v2393 = vsel %vm1455, %v2318, 0
      %v2396 = vsel %vm1455, %v2319, 0
      %v2399 = vsel %vm1455, %v2320, 0
      %v2402 = vsel %vm1455, %v2321, 0
      %v2405 = vsel %vm1455, %v2322, 0
      %v2408 = vsel %vm1455, %v2323, 0
      %v2411 = vsel %vm1455, %v2324, 0
      %v2414 = vsel %vm1455, %v2325, 0
      %v2417 = vsel %vm1455, %v2326, 0
      %v2420 = vsel %vm1455, %v2327, 0
      %v2423 = vsel %vm1455, %v2328, 0
      %v2426 = vsel %vm1455, %v2329, 0
      %v2429 = vsel %vm1647, %v2331, 0
      %2431 = vmatprep.subr.mxu0 0.0
      %2432 = vmatpush1.msra.mxu0 0.0
      %2433 = vmatprep.subr.mxu0 0.0
      %2434 = vmatpush1.msra.mxu0 0.0
      %2435 = vmatprep.subr.mxu0 0.0
      %2436 = vmatpush1.msra.mxu0 0.0
      %2437 = vmatprep.subr.mxu0 0.0
      %2438 = vmatpush1.msra.mxu0 0.0
      %2439 = vmatprep.subr.mxu0 0.0
      %2440 = vmatpush1.msra.mxu0 0.0
      %2441 = vmatprep.subr.mxu0 0.0
      %2442 = vmatpush1.msra.mxu0 0.0
      %2443 = vmatprep.subr.mxu0 0.0
      %2444 = vmatpush1.msra.mxu0 0.0
      %2445 = vmatprep.subr.mxu0 0.0
      %2446 = vmatpush1.msra.mxu0 0.0
      %2447 = vmatprep.subr.mxu0 0.0
      %2448 = vmatpush1.msra.mxu0 0.0
      %2449 = vmatprep.subr.mxu0 0.0
      %2450 = vmatpush1.msra.mxu0 0.0
      %2451 = vmatprep.subr.mxu0 0.0
      %2452 = vmatpush1.msra.mxu0 0.0
      %2453 = vmatprep.subr.mxu0 0.0
      %2454 = vmatpush1.msra.mxu0 0.0
      %2455 = vmatprep.subr.mxu0 0.0
      %2456 = vmatpush1.msra.mxu0 0.0
      %2457 = vmatprep.subr.mxu0 0.0
      %2458 = vmatpush1.msra.mxu0 0.0
      %2459 = vmatprep.subr.mxu0 0.0
      %2460 = vmatpush1.msra.mxu0 0.0
      %2461 = vmatprep.subr.mxu0 0.0
      %2462 = vmatpush1.msra.mxu0 %v2429
      %2463 = vmatprep.subr.mxu0 0.0
      %2464 = vmatpush2.msra.mxu0 0.0
      %2465 = vmatprep.subr.mxu0 0.0
      %2466 = vmatpush2.msra.mxu0 0.0
      %2467 = vmatprep.subr.mxu0 0.0
      %2468 = vmatpush2.msra.mxu0 0.0
      %2469 = vmatprep.subr.mxu0 0.0
      %2470 = vmatpush2.msra.mxu0 0.0
      %2471 = vmatprep.subr.mxu0 0.0
      %2472 = vmatpush2.msra.mxu0 0.0
      %2473 = vmatprep.subr.mxu0 0.0
      %2474 = vmatpush2.msra.mxu0 0.0
      %2475 = vmatprep.subr.mxu0 0.0
      %2476 = vmatpush2.msra.mxu0 0.0
      %2477 = vmatprep.subr.mxu0 0.0
      %2478 = vmatpush2.msra.mxu0 0.0
      %2479 = vmatprep.subr.mxu0 0.0
      %2480 = vmatpush2.msra.mxu0 0.0
      %2481 = vmatprep.subr.mxu0 0.0
      %2482 = vmatpush2.msra.mxu0 0.0
      %2483 = vmatprep.subr.mxu0 0.0
      %2484 = vmatpush2.msra.mxu0 0.0
      %2485 = vmatprep.subr.mxu0 0.0
      %2486 = vmatpush2.msra.mxu0 0.0
      %2487 = vmatprep.subr.mxu0 0.0
      %2488 = vmatpush2.msra.mxu0 0.0
      %2489 = vmatprep.subr.mxu0 0.0
      %2490 = vmatpush2.msra.mxu0 0.0
      %2491 = vmatprep.subr.mxu0 0.0
      %2492 = vmatpush2.msra.mxu0 0.0
      %2493 = vmatprep.subr.mxu0 0.0
      %2494 = vmatpush2.msra.mxu0 0.0
      %2495 = vmatprep.mubr.f32.mxu0 0.0
      %2496 = vmatmul.mubr.f32.gmra.mxu0 %v2333
      %v2497 = vpop.f32.mrf.mxu0
      %v2498 = vadd.f32 0.0, %v2497
      %v2499 = vpop.f32.mrf.mxu0
      %2500 = vmatprep.mubr.f32.mxu0 0.0
      %2501 = vmatmul.mubr.f32.gmra.mxu0 %v2336
      %v2502 = vpop.f32.mrf.mxu0
      %v2503 = vadd.f32 0.0, %v2502
      %v2504 = vpop.f32.mrf.mxu0
      %2505 = vmatprep.mubr.f32.mxu0 0.0
      %2506 = vmatmul.mubr.f32.gmra.mxu0 %v2339
      %v2507 = vpop.f32.mrf.mxu0
      %v2508 = vadd.f32 0.0, %v2507
      %v2509 = vpop.f32.mrf.mxu0
      %2510 = vmatprep.mubr.f32.mxu0 0.0
      %2511 = vmatmul.mubr.f32.gmra.mxu0 %v2342
      %v2512 = vpop.f32.mrf.mxu0
      %v2513 = vadd.f32 0.0, %v2512
      %v2514 = vpop.f32.mrf.mxu0
      %2515 = vmatprep.mubr.f32.mxu0 0.0
      %2516 = vmatmul.mubr.f32.gmra.mxu0 %v2345
      %v2517 = vpop.f32.mrf.mxu0
      %v2518 = vadd.f32 0.0, %v2517
      %v2519 = vpop.f32.mrf.mxu0
      %2520 = vmatprep.mubr.f32.mxu0 0.0
      %2521 = vmatmul.mubr.f32.gmra.mxu0 %v2348
      %v2522 = vpop.f32.mrf.mxu0
      %v2523 = vadd.f32 0.0, %v2522
      %v2524 = vpop.f32.mrf.mxu0
      %2525 = vmatprep.mubr.f32.mxu0 0.0
      %2526 = vmatmul.mubr.f32.gmra.mxu0 %v2351
      %v2527 = vpop.f32.mrf.mxu0
      %v2528 = vadd.f32 0.0, %v2527
      %v2529 = vpop.f32.mrf.mxu0
      %2530 = vmatprep.mubr.f32.mxu0 0.0
      %2531 = vmatmul.mubr.f32.gmra.mxu0 %v2354
      %v2532 = vpop.f32.mrf.mxu0
      %v2533 = vadd.f32 0.0, %v2532
      %v2534 = vpop.f32.mrf.mxu0
      %2535 = vmatprep.mubr.f32.mxu0 0.0
      %2536 = vmatmul.mubr.f32.gmra.mxu0 %v2357
      %v2537 = vpop.f32.mrf.mxu0
      %v2538 = vadd.f32 0.0, %v2537
      %v2539 = vpop.f32.mrf.mxu0
      %2540 = vmatprep.mubr.f32.mxu0 0.0
      %2541 = vmatmul.mubr.f32.gmra.mxu0 %v2360
      %v2542 = vpop.f32.mrf.mxu0
      %v2543 = vadd.f32 0.0, %v2542
      %v2544 = vpop.f32.mrf.mxu0
      %2545 = vmatprep.mubr.f32.mxu0 0.0
      %2546 = vmatmul.mubr.f32.gmra.mxu0 %v2363
      %v2547 = vpop.f32.mrf.mxu0
      %v2548 = vadd.f32 0.0, %v2547
      %v2549 = vpop.f32.mrf.mxu0
      %2550 = vmatprep.mubr.f32.mxu0 0.0
      %2551 = vmatmul.mubr.f32.gmra.mxu0 %v2366
      %v2552 = vpop.f32.mrf.mxu0
      %v2553 = vadd.f32 0.0, %v2552
      %v2554 = vpop.f32.mrf.mxu0
      %2555 = vmatprep.mubr.f32.mxu0 0.0
      %2556 = vmatmul.mubr.f32.gmra.mxu0 %v2369
      %v2557 = vpop.f32.mrf.mxu0
      %v2558 = vadd.f32 0.0, %v2557
      %v2559 = vpop.f32.mrf.mxu0
      %2560 = vmatprep.mubr.f32.mxu0 0.0
      %2561 = vmatmul.mubr.f32.gmra.mxu0 %v2372
      %v2562 = vpop.f32.mrf.mxu0
      %v2563 = vadd.f32 0.0, %v2562
      %v2564 = vpop.f32.mrf.mxu0
      %2565 = vmatprep.mubr.f32.mxu0 0.0
      %2566 = vmatmul.mubr.f32.gmra.mxu0 %v2375
      %v2567 = vpop.f32.mrf.mxu0
      %v2568 = vadd.f32 0.0, %v2567
      %v2569 = vpop.f32.mrf.mxu0
      %2570 = vmatprep.mubr.f32.mxu0 0.0
      %2571 = vmatmul.mubr.f32.gmra.mxu0 %v2378
      %v2572 = vpop.f32.mrf.mxu0
      %v2573 = vadd.f32 0.0, %v2572
      %v2574 = vpop.f32.mrf.mxu0
      %2575 = vmatprep.mubr.f32.mxu0 0.0
      %2576 = vmatmul.mubr.f32.gmra.mxu0 %v2381
      %v2577 = vpop.f32.mrf.mxu0
      %v2578 = vadd.f32 0.0, %v2577
      %v2579 = vpop.f32.mrf.mxu0
      %2580 = vmatprep.mubr.f32.mxu0 0.0
      %2581 = vmatmul.mubr.f32.gmra.mxu0 %v2384
      %v2582 = vpop.f32.mrf.mxu0
      %v2583 = vadd.f32 0.0, %v2582
      %v2584 = vpop.f32.mrf.mxu0
      %2585 = vmatprep.mubr.f32.mxu0 0.0
      %2586 = vmatmul.mubr.f32.gmra.mxu0 %v2387
      %v2587 = vpop.f32.mrf.mxu0
      %v2588 = vadd.f32 0.0, %v2587
      %v2589 = vpop.f32.mrf.mxu0
      %2590 = vmatprep.mubr.f32.mxu0 0.0
      %2591 = vmatmul.mubr.f32.gmra.mxu0 %v2390
      %v2592 = vpop.f32.mrf.mxu0
      %v2593 = vadd.f32 0.0, %v2592
      %v2594 = vpop.f32.mrf.mxu0
      %2595 = vmatprep.mubr.f32.mxu0 0.0
      %2596 = vmatmul.mubr.f32.gmra.mxu0 %v2393
      %v2597 = vpop.f32.mrf.mxu0
      %v2598 = vadd.f32 0.0, %v2597
      %v2599 = vpop.f32.mrf.mxu0
      %2600 = vmatprep.mubr.f32.mxu0 0.0
      %2601 = vmatmul.mubr.f32.gmra.mxu0 %v2396
      %v2602 = vpop.f32.mrf.mxu0
      %v2603 = vadd.f32 0.0, %v2602
      %v2604 = vpop.f32.mrf.mxu0
      %2605 = vmatprep.mubr.f32.mxu0 0.0
      %2606 = vmatmul.mubr.f32.gmra.mxu0 %v2399
      %v2607 = vpop.f32.mrf.mxu0
      %v2608 = vadd.f32 0.0, %v2607
      %v2609 = vpop.f32.mrf.mxu0
      %2610 = vmatprep.mubr.f32.mxu0 0.0
      %2611 = vmatmul.mubr.f32.gmra.mxu0 %v2402
      %v2612 = vpop.f32.mrf.mxu0
      %v2613 = vadd.f32 0.0, %v2612
      %v2614 = vpop.f32.mrf.mxu0
      %2615 = vmatprep.mubr.f32.mxu0 0.0
      %2616 = vmatmul.mubr.f32.gmra.mxu0 %v2405
      %v2617 = vpop.f32.mrf.mxu0
      %v2618 = vadd.f32 0.0, %v2617
      %v2619 = vpop.f32.mrf.mxu0
      %2620 = vmatprep.mubr.f32.mxu0 0.0
      %2621 = vmatmul.mubr.f32.gmra.mxu0 %v2408
      %v2622 = vpop.f32.mrf.mxu0
      %v2623 = vadd.f32 0.0, %v2622
      %v2624 = vpop.f32.mrf.mxu0
      %2625 = vmatprep.mubr.f32.mxu0 0.0
      %2626 = vmatmul.mubr.f32.gmra.mxu0 %v2411
      %v2627 = vpop.f32.mrf.mxu0
      %v2628 = vadd.f32 0.0, %v2627
      %v2629 = vpop.f32.mrf.mxu0
      %2630 = vmatprep.mubr.f32.mxu0 0.0
      %2631 = vmatmul.mubr.f32.gmra.mxu0 %v2414
      %v2632 = vpop.f32.mrf.mxu0
      %v2633 = vadd.f32 0.0, %v2632
      %v2634 = vpop.f32.mrf.mxu0
      %2635 = vmatprep.mubr.f32.mxu0 0.0
      %2636 = vmatmul.mubr.f32.gmra.mxu0 %v2417
      %v2637 = vpop.f32.mrf.mxu0
      %v2638 = vadd.f32 0.0, %v2637
      %v2639 = vpop.f32.mrf.mxu0
      %2640 = vmatprep.mubr.f32.mxu0 0.0
      %2641 = vmatmul.mubr.f32.gmra.mxu0 %v2420
      %v2642 = vpop.f32.mrf.mxu0
      %v2643 = vadd.f32 0.0, %v2642
      %v2644 = vpop.f32.mrf.mxu0
      %2645 = vmatprep.mubr.f32.mxu0 0.0
      %2646 = vmatmul.mubr.f32.gmra.mxu0 %v2423
      %v2647 = vpop.f32.mrf.mxu0
      %v2648 = vadd.f32 0.0, %v2647
      %v2649 = vpop.f32.mrf.mxu0
      %2650 = vmatprep.mubr.f32.mxu0 0.0
      %2651 = vmatmul.mubr.f32.gmra.mxu0 %v2426
      %v2652 = vpop.f32.mrf.mxu0
      %v2653 = vadd.f32 0.0, %v2652
      %v2654 = vpop.f32.mrf.mxu0
      %2655 = vdwg.mxu0
      %v2656 = vadd.f32 %v2266, %v2498
      %v2657 = vadd.f32 %v2267, %v2503
      %v2658 = vadd.f32 %v2268, %v2508
      %v2659 = vadd.f32 %v2269, %v2513
      %v2660 = vadd.f32 %v2270, %v2518
      %v2661 = vadd.f32 %v2271, %v2523
      %v2662 = vadd.f32 %v2272, %v2528
      %v2663 = vadd.f32 %v2273, %v2533
      %v2664 = vadd.f32 %v2274, %v2538
      %v2665 = vadd.f32 %v2275, %v2543
      %v2666 = vadd.f32 %v2276, %v2548
      %v2667 = vadd.f32 %v2277, %v2553
      %v2668 = vadd.f32 %v2278, %v2558
      %v2669 = vadd.f32 %v2279, %v2563
      %v2670 = vadd.f32 %v2280, %v2568
      %v2671 = vadd.f32 %v2281, %v2573
      %v2672 = vadd.f32 %v2282, %v2578
      %v2673 = vadd.f32 %v2283, %v2583
      %v2674 = vadd.f32 %v2284, %v2588
      %v2675 = vadd.f32 %v2285, %v2593
      %v2676 = vadd.f32 %v2286, %v2598
      %v2677 = vadd.f32 %v2287, %v2603
      %v2678 = vadd.f32 %v2288, %v2608
      %v2679 = vadd.f32 %v2289, %v2613
      %v2680 = vadd.f32 %v2290, %v2618
      %v2681 = vadd.f32 %v2291, %v2623
      %v2682 = vadd.f32 %v2292, %v2628
      %v2683 = vadd.f32 %v2293, %v2633
      %v2684 = vadd.f32 %v2294, %v2638
      %v2685 = vadd.f32 %v2295, %v2643
      %v2686 = vadd.f32 %v2296, %v2648
      %v2687 = vadd.f32 %v2297, %v2653
      %s2688 = scalar_lea.vmem [#allocation2], 24
      %v2689 = vld [vmem:[%s2688] sm:$0xff]
      %v2690 = vld [vmem:[%s2688 + $0x8] sm:$0xff]
      %v2691 = vld [vmem:[%s2688 + $0x18] sm:$0xff]
      %v2692 = vld [vmem:[%s2688 + $0x20] sm:$0xff]
      %v2693 = vld [vmem:[%s2688 + $0x30] sm:$0xff]
      %v2694 = vld [vmem:[%s2688 + $0x38] sm:$0xff]
      %v2695 = vld [vmem:[%s2688 + $0x48] sm:$0xff]
      %v2696 = vld [vmem:[%s2688 + $0x50] sm:$0xff]
      %v2697 = vld [vmem:[%s2688 + $0x60] sm:$0xff]
      %v2698 = vld [vmem:[%s2688 + $0x68] sm:$0xff]
      %v2699 = vld [vmem:[%s2688 + $0x78] sm:$0xff]
      %v2700 = vld [vmem:[%s2688 + $0x80] sm:$0xff]
      %v2701 = vld [vmem:[%s2688 + $0x90] sm:$0xff]
      %v2702 = vld [vmem:[%s2688 + $0x98] sm:$0xff]
      %v2703 = vld [vmem:[%s2688 + $0xa8] sm:$0xff]
      %v2704 = vld [vmem:[%s2688 + $0xb0] sm:$0xff]
      %v2705 = vld [vmem:[%s2688 + $0xc0] sm:$0xff]
      %v2706 = vld [vmem:[%s2688 + $0xc8] sm:$0xff]
      %v2707 = vld [vmem:[%s2688 + $0xd8] sm:$0xff]
      %v2708 = vld [vmem:[%s2688 + $0xe0] sm:$0xff]
      %v2709 = vld [vmem:[%s2688 + $0xf0] sm:$0xff]
      %v2710 = vld [vmem:[%s2688 + $0xf8] sm:$0xff]
      %v2711 = vld [vmem:[%s2688 + $0x108] sm:$0xff]
      %v2712 = vld [vmem:[%s2688 + $0x110] sm:$0xff]
      %v2713 = vld [vmem:[%s2688 + $0x120] sm:$0xff]
      %v2714 = vld [vmem:[%s2688 + $0x128] sm:$0xff]
      %v2715 = vld [vmem:[%s2688 + $0x138] sm:$0xff]
      %v2716 = vld [vmem:[%s2688 + $0x140] sm:$0xff]
      %v2717 = vld [vmem:[%s2688 + $0x150] sm:$0xff]
      %v2718 = vld [vmem:[%s2688 + $0x158] sm:$0xff]
      %v2719 = vld [vmem:[%s2688 + $0x168] sm:$0xff]
      %v2720 = vld [vmem:[%s2688 + $0x170] sm:$0xff]
      %s2721 = scalar_lea.vmem %s3, 12
      %v2722 = vld [vmem:[%s2721] sm:$0xf]
      %v2724 = vsel %vm1455, %v2689, 0
      %v2727 = vsel %vm1455, %v2690, 0
      %v2730 = vsel %vm1455, %v2691, 0
      %v2733 = vsel %vm1455, %v2692, 0
      %v2736 = vsel %vm1455, %v2693, 0
      %v2739 = vsel %vm1455, %v2694, 0
      %v2742 = vsel %vm1455, %v2695, 0
      %v2745 = vsel %vm1455, %v2696, 0
      %v2748 = vsel %vm1455, %v2697, 0
      %v2751 = vsel %vm1455, %v2698, 0
      %v2754 = vsel %vm1455, %v2699, 0
      %v2757 = vsel %vm1455, %v2700, 0
      %v2760 = vsel %vm1455, %v2701, 0
      %v2763 = vsel %vm1455, %v2702, 0
      %v2766 = vsel %vm1455, %v2703, 0
      %v2769 = vsel %vm1455, %v2704, 0
      %v2772 = vsel %vm1455, %v2705, 0
      %v2775 = vsel %vm1455, %v2706, 0
      %v2778 = vsel %vm1455, %v2707, 0
      %v2781 = vsel %vm1455, %v2708, 0
      %v2784 = vsel %vm1455, %v2709, 0
      %v2787 = vsel %vm1455, %v2710, 0
      %v2790 = vsel %vm1455, %v2711, 0
      %v2793 = vsel %vm1455, %v2712, 0
      %v2796 = vsel %vm1455, %v2713, 0
      %v2799 = vsel %vm1455, %v2714, 0
      %v2802 = vsel %vm1455, %v2715, 0
      %v2805 = vsel %vm1455, %v2716, 0
      %v2808 = vsel %vm1455, %v2717, 0
      %v2811 = vsel %vm1455, %v2718, 0
      %v2814 = vsel %vm1455, %v2719, 0
      %v2817 = vsel %vm1455, %v2720, 0
      %v2820 = vsel %vm1647, %v2722, 0
      %2822 = vmatprep.subr.mxu0 0.0
      %2823 = vmatpush1.msra.mxu0 0.0
      %2824 = vmatprep.subr.mxu0 0.0
      %2825 = vmatpush1.msra.mxu0 0.0
      %2826 = vmatprep.subr.mxu0 0.0
      %2827 = vmatpush1.msra.mxu0 0.0
      %2828 = vmatprep.subr.mxu0 0.0
      %2829 = vmatpush1.msra.mxu0 0.0
      %2830 = vmatprep.subr.mxu0 0.0
      %2831 = vmatpush1.msra.mxu0 0.0
      %2832 = vmatprep.subr.mxu0 0.0
      %2833 = vmatpush1.msra.mxu0 0.0
      %2834 = vmatprep.subr.mxu0 0.0
      %2835 = vmatpush1.msra.mxu0 0.0
      %2836 = vmatprep.subr.mxu0 0.0
      %2837 = vmatpush1.msra.mxu0 0.0
      %2838 = vmatprep.subr.mxu0 0.0
      %2839 = vmatpush1.msra.mxu0 0.0
      %2840 = vmatprep.subr.mxu0 0.0
      %2841 = vmatpush1.msra.mxu0 0.0
      %2842 = vmatprep.subr.mxu0 0.0
      %2843 = vmatpush1.msra.mxu0 0.0
      %2844 = vmatprep.subr.mxu0 0.0
      %2845 = vmatpush1.msra.mxu0 0.0
      %2846 = vmatprep.subr.mxu0 0.0
      %2847 = vmatpush1.msra.mxu0 0.0
      %2848 = vmatprep.subr.mxu0 0.0
      %2849 = vmatpush1.msra.mxu0 0.0
      %2850 = vmatprep.subr.mxu0 0.0
      %2851 = vmatpush1.msra.mxu0 0.0
      %2852 = vmatprep.subr.mxu0 0.0
      %2853 = vmatpush1.msra.mxu0 %v2820
      %2854 = vmatprep.subr.mxu0 0.0
      %2855 = vmatpush2.msra.mxu0 0.0
      %2856 = vmatprep.subr.mxu0 0.0
      %2857 = vmatpush2.msra.mxu0 0.0
      %2858 = vmatprep.subr.mxu0 0.0
      %2859 = vmatpush2.msra.mxu0 0.0
      %2860 = vmatprep.subr.mxu0 0.0
      %2861 = vmatpush2.msra.mxu0 0.0
      %2862 = vmatprep.subr.mxu0 0.0
      %2863 = vmatpush2.msra.mxu0 0.0
      %2864 = vmatprep.subr.mxu0 0.0
      %2865 = vmatpush2.msra.mxu0 0.0
      %2866 = vmatprep.subr.mxu0 0.0
      %2867 = vmatpush2.msra.mxu0 0.0
      %2868 = vmatprep.subr.mxu0 0.0
      %2869 = vmatpush2.msra.mxu0 0.0
      %2870 = vmatprep.subr.mxu0 0.0
      %2871 = vmatpush2.msra.mxu0 0.0
      %2872 = vmatprep.subr.mxu0 0.0
      %2873 = vmatpush2.msra.mxu0 0.0
      %2874 = vmatprep.subr.mxu0 0.0
      %2875 = vmatpush2.msra.mxu0 0.0
      %2876 = vmatprep.subr.mxu0 0.0
      %2877 = vmatpush2.msra.mxu0 0.0
      %2878 = vmatprep.subr.mxu0 0.0
      %2879 = vmatpush2.msra.mxu0 0.0
      %2880 = vmatprep.subr.mxu0 0.0
      %2881 = vmatpush2.msra.mxu0 0.0
      %2882 = vmatprep.subr.mxu0 0.0
      %2883 = vmatpush2.msra.mxu0 0.0
      %2884 = vmatprep.subr.mxu0 0.0
      %2885 = vmatpush2.msra.mxu0 0.0
      %2886 = vmatprep.mubr.f32.mxu0 0.0
      %2887 = vmatmul.mubr.f32.gmra.mxu0 %v2724
      %v2888 = vpop.f32.mrf.mxu0
      %v2889 = vadd.f32 0.0, %v2888
      %v2890 = vpop.f32.mrf.mxu0
      %2891 = vmatprep.mubr.f32.mxu0 0.0
      %2892 = vmatmul.mubr.f32.gmra.mxu0 %v2727
      %v2893 = vpop.f32.mrf.mxu0
      %v2894 = vadd.f32 0.0, %v2893
      %v2895 = vpop.f32.mrf.mxu0
      %2896 = vmatprep.mubr.f32.mxu0 0.0
      %2897 = vmatmul.mubr.f32.gmra.mxu0 %v2730
      %v2898 = vpop.f32.mrf.mxu0
      %v2899 = vadd.f32 0.0, %v2898
      %v2900 = vpop.f32.mrf.mxu0
      %2901 = vmatprep.mubr.f32.mxu0 0.0
      %2902 = vmatmul.mubr.f32.gmra.mxu0 %v2733
      %v2903 = vpop.f32.mrf.mxu0
      %v2904 = vadd.f32 0.0, %v2903
      %v2905 = vpop.f32.mrf.mxu0
      %2906 = vmatprep.mubr.f32.mxu0 0.0
      %2907 = vmatmul.mubr.f32.gmra.mxu0 %v2736
      %v2908 = vpop.f32.mrf.mxu0
      %v2909 = vadd.f32 0.0, %v2908
      %v2910 = vpop.f32.mrf.mxu0
      %2911 = vmatprep.mubr.f32.mxu0 0.0
      %2912 = vmatmul.mubr.f32.gmra.mxu0 %v2739
      %v2913 = vpop.f32.mrf.mxu0
      %v2914 = vadd.f32 0.0, %v2913
      %v2915 = vpop.f32.mrf.mxu0
      %2916 = vmatprep.mubr.f32.mxu0 0.0
      %2917 = vmatmul.mubr.f32.gmra.mxu0 %v2742
      %v2918 = vpop.f32.mrf.mxu0
      %v2919 = vadd.f32 0.0, %v2918
      %v2920 = vpop.f32.mrf.mxu0
      %2921 = vmatprep.mubr.f32.mxu0 0.0
      %2922 = vmatmul.mubr.f32.gmra.mxu0 %v2745
      %v2923 = vpop.f32.mrf.mxu0
      %v2924 = vadd.f32 0.0, %v2923
      %v2925 = vpop.f32.mrf.mxu0
      %2926 = vmatprep.mubr.f32.mxu0 0.0
      %2927 = vmatmul.mubr.f32.gmra.mxu0 %v2748
      %v2928 = vpop.f32.mrf.mxu0
      %v2929 = vadd.f32 0.0, %v2928
      %v2930 = vpop.f32.mrf.mxu0
      %2931 = vmatprep.mubr.f32.mxu0 0.0
      %2932 = vmatmul.mubr.f32.gmra.mxu0 %v2751
      %v2933 = vpop.f32.mrf.mxu0
      %v2934 = vadd.f32 0.0, %v2933
      %v2935 = vpop.f32.mrf.mxu0
      %2936 = vmatprep.mubr.f32.mxu0 0.0
      %2937 = vmatmul.mubr.f32.gmra.mxu0 %v2754
      %v2938 = vpop.f32.mrf.mxu0
      %v2939 = vadd.f32 0.0, %v2938
      %v2940 = vpop.f32.mrf.mxu0
      %2941 = vmatprep.mubr.f32.mxu0 0.0
      %2942 = vmatmul.mubr.f32.gmra.mxu0 %v2757
      %v2943 = vpop.f32.mrf.mxu0
      %v2944 = vadd.f32 0.0, %v2943
      %v2945 = vpop.f32.mrf.mxu0
      %2946 = vmatprep.mubr.f32.mxu0 0.0
      %2947 = vmatmul.mubr.f32.gmra.mxu0 %v2760
      %v2948 = vpop.f32.mrf.mxu0
      %v2949 = vadd.f32 0.0, %v2948
      %v2950 = vpop.f32.mrf.mxu0
      %2951 = vmatprep.mubr.f32.mxu0 0.0
      %2952 = vmatmul.mubr.f32.gmra.mxu0 %v2763
      %v2953 = vpop.f32.mrf.mxu0
      %v2954 = vadd.f32 0.0, %v2953
      %v2955 = vpop.f32.mrf.mxu0
      %2956 = vmatprep.mubr.f32.mxu0 0.0
      %2957 = vmatmul.mubr.f32.gmra.mxu0 %v2766
      %v2958 = vpop.f32.mrf.mxu0
      %v2959 = vadd.f32 0.0, %v2958
      %v2960 = vpop.f32.mrf.mxu0
      %2961 = vmatprep.mubr.f32.mxu0 0.0
      %2962 = vmatmul.mubr.f32.gmra.mxu0 %v2769
      %v2963 = vpop.f32.mrf.mxu0
      %v2964 = vadd.f32 0.0, %v2963
      %v2965 = vpop.f32.mrf.mxu0
      %2966 = vmatprep.mubr.f32.mxu0 0.0
      %2967 = vmatmul.mubr.f32.gmra.mxu0 %v2772
      %v2968 = vpop.f32.mrf.mxu0
      %v2969 = vadd.f32 0.0, %v2968
      %v2970 = vpop.f32.mrf.mxu0
      %2971 = vmatprep.mubr.f32.mxu0 0.0
      %2972 = vmatmul.mubr.f32.gmra.mxu0 %v2775
      %v2973 = vpop.f32.mrf.mxu0
      %v2974 = vadd.f32 0.0, %v2973
      %v2975 = vpop.f32.mrf.mxu0
      %2976 = vmatprep.mubr.f32.mxu0 0.0
      %2977 = vmatmul.mubr.f32.gmra.mxu0 %v2778
      %v2978 = vpop.f32.mrf.mxu0
      %v2979 = vadd.f32 0.0, %v2978
      %v2980 = vpop.f32.mrf.mxu0
      %2981 = vmatprep.mubr.f32.mxu0 0.0
      %2982 = vmatmul.mubr.f32.gmra.mxu0 %v2781
      %v2983 = vpop.f32.mrf.mxu0
      %v2984 = vadd.f32 0.0, %v2983
      %v2985 = vpop.f32.mrf.mxu0
      %2986 = vmatprep.mubr.f32.mxu0 0.0
      %2987 = vmatmul.mubr.f32.gmra.mxu0 %v2784
      %v2988 = vpop.f32.mrf.mxu0
      %v2989 = vadd.f32 0.0, %v2988
      %v2990 = vpop.f32.mrf.mxu0
      %2991 = vmatprep.mubr.f32.mxu0 0.0
      %2992 = vmatmul.mubr.f32.gmra.mxu0 %v2787
      %v2993 = vpop.f32.mrf.mxu0
      %v2994 = vadd.f32 0.0, %v2993
      %v2995 = vpop.f32.mrf.mxu0
      %2996 = vmatprep.mubr.f32.mxu0 0.0
      %2997 = vmatmul.mubr.f32.gmra.mxu0 %v2790
      %v2998 = vpop.f32.mrf.mxu0
      %v2999 = vadd.f32 0.0, %v2998
      %v3000 = vpop.f32.mrf.mxu0
      %3001 = vmatprep.mubr.f32.mxu0 0.0
      %3002 = vmatmul.mubr.f32.gmra.mxu0 %v2793
      %v3003 = vpop.f32.mrf.mxu0
      %v3004 = vadd.f32 0.0, %v3003
      %v3005 = vpop.f32.mrf.mxu0
      %3006 = vmatprep.mubr.f32.mxu0 0.0
      %3007 = vmatmul.mubr.f32.gmra.mxu0 %v2796
      %v3008 = vpop.f32.mrf.mxu0
      %v3009 = vadd.f32 0.0, %v3008
      %v3010 = vpop.f32.mrf.mxu0
      %3011 = vmatprep.mubr.f32.mxu0 0.0
      %3012 = vmatmul.mubr.f32.gmra.mxu0 %v2799
      %v3013 = vpop.f32.mrf.mxu0
      %v3014 = vadd.f32 0.0, %v3013
      %v3015 = vpop.f32.mrf.mxu0
      %3016 = vmatprep.mubr.f32.mxu0 0.0
      %3017 = vmatmul.mubr.f32.gmra.mxu0 %v2802
      %v3018 = vpop.f32.mrf.mxu0
      %v3019 = vadd.f32 0.0, %v3018
      %v3020 = vpop.f32.mrf.mxu0
      %3021 = vmatprep.mubr.f32.mxu0 0.0
      %3022 = vmatmul.mubr.f32.gmra.mxu0 %v2805
      %v3023 = vpop.f32.mrf.mxu0
      %v3024 = vadd.f32 0.0, %v3023
      %v3025 = vpop.f32.mrf.mxu0
      %3026 = vmatprep.mubr.f32.mxu0 0.0
      %3027 = vmatmul.mubr.f32.gmra.mxu0 %v2808
      %v3028 = vpop.f32.mrf.mxu0
      %v3029 = vadd.f32 0.0, %v3028
      %v3030 = vpop.f32.mrf.mxu0
      %3031 = vmatprep.mubr.f32.mxu0 0.0
      %3032 = vmatmul.mubr.f32.gmra.mxu0 %v2811
      %v3033 = vpop.f32.mrf.mxu0
      %v3034 = vadd.f32 0.0, %v3033
      %v3035 = vpop.f32.mrf.mxu0
      %3036 = vmatprep.mubr.f32.mxu0 0.0
      %3037 = vmatmul.mubr.f32.gmra.mxu0 %v2814
      %v3038 = vpop.f32.mrf.mxu0
      %v3039 = vadd.f32 0.0, %v3038
      %v3040 = vpop.f32.mrf.mxu0
      %3041 = vmatprep.mubr.f32.mxu0 0.0
      %3042 = vmatmul.mubr.f32.gmra.mxu0 %v2817
      %v3043 = vpop.f32.mrf.mxu0
      %v3044 = vadd.f32 0.0, %v3043
      %v3045 = vpop.f32.mrf.mxu0
      %3046 = vdwg.mxu0
      %v3047 = vadd.f32 %v2656, %v2889
      %v3048 = vadd.f32 %v2657, %v2894
      %v3049 = vadd.f32 %v2658, %v2899
      %v3050 = vadd.f32 %v2659, %v2904
      %v3051 = vadd.f32 %v2660, %v2909
      %v3052 = vadd.f32 %v2661, %v2914
      %v3053 = vadd.f32 %v2662, %v2919
      %v3054 = vadd.f32 %v2663, %v2924
      %v3055 = vadd.f32 %v2664, %v2929
      %v3056 = vadd.f32 %v2665, %v2934
      %v3057 = vadd.f32 %v2666, %v2939
      %v3058 = vadd.f32 %v2667, %v2944
      %v3059 = vadd.f32 %v2668, %v2949
      %v3060 = vadd.f32 %v2669, %v2954
      %v3061 = vadd.f32 %v2670, %v2959
      %v3062 = vadd.f32 %v2671, %v2964
      %v3063 = vadd.f32 %v2672, %v2969
      %v3064 = vadd.f32 %v2673, %v2974
      %v3065 = vadd.f32 %v2674, %v2979
      %v3066 = vadd.f32 %v2675, %v2984
      %v3067 = vadd.f32 %v2676, %v2989
      %v3068 = vadd.f32 %v2677, %v2994
      %v3069 = vadd.f32 %v2678, %v2999
      %v3070 = vadd.f32 %v2679, %v3004
      %v3071 = vadd.f32 %v2680, %v3009
      %v3072 = vadd.f32 %v2681, %v3014
      %v3073 = vadd.f32 %v2682, %v3019
      %v3074 = vadd.f32 %v2683, %v3024
      %v3075 = vadd.f32 %v2684, %v3029
      %v3076 = vadd.f32 %v2685, %v3034
      %v3077 = vadd.f32 %v2686, %v3039
      %v3078 = vadd.f32 %v2687, %v3044
      %v3079 = vld [vmem:[%s2688 + $0x1] sm:$0xff]
      %v3080 = vld [vmem:[%s2688 + $0x9] sm:$0xff]
      %v3081 = vld [vmem:[%s2688 + $0x19] sm:$0xff]
      %v3082 = vld [vmem:[%s2688 + $0x21] sm:$0xff]
      %v3083 = vld [vmem:[%s2688 + $0x31] sm:$0xff]
      %v3084 = vld [vmem:[%s2688 + $0x39] sm:$0xff]
      %v3085 = vld [vmem:[%s2688 + $0x49] sm:$0xff]
      %v3086 = vld [vmem:[%s2688 + $0x51] sm:$0xff]
      %v3087 = vld [vmem:[%s2688 + $0x61] sm:$0xff]
      %v3088 = vld [vmem:[%s2688 + $0x69] sm:$0xff]
      %v3089 = vld [vmem:[%s2688 + $0x79] sm:$0xff]
      %v3090 = vld [vmem:[%s2688 + $0x81] sm:$0xff]
      %v3091 = vld [vmem:[%s2688 + $0x91] sm:$0xff]
      %v3092 = vld [vmem:[%s2688 + $0x99] sm:$0xff]
      %v3093 = vld [vmem:[%s2688 + $0xa9] sm:$0xff]
      %v3094 = vld [vmem:[%s2688 + $0xb1] sm:$0xff]
      %v3095 = vld [vmem:[%s2688 + $0xc1] sm:$0xff]
      %v3096 = vld [vmem:[%s2688 + $0xc9] sm:$0xff]
      %v3097 = vld [vmem:[%s2688 + $0xd9] sm:$0xff]
      %v3098 = vld [vmem:[%s2688 + $0xe1] sm:$0xff]
      %v3099 = vld [vmem:[%s2688 + $0xf1] sm:$0xff]
      %v3100 = vld [vmem:[%s2688 + $0xf9] sm:$0xff]
      %v3101 = vld [vmem:[%s2688 + $0x109] sm:$0xff]
      %v3102 = vld [vmem:[%s2688 + $0x111] sm:$0xff]
      %v3103 = vld [vmem:[%s2688 + $0x121] sm:$0xff]
      %v3104 = vld [vmem:[%s2688 + $0x129] sm:$0xff]
      %v3105 = vld [vmem:[%s2688 + $0x139] sm:$0xff]
      %v3106 = vld [vmem:[%s2688 + $0x141] sm:$0xff]
      %v3107 = vld [vmem:[%s2688 + $0x151] sm:$0xff]
      %v3108 = vld [vmem:[%s2688 + $0x159] sm:$0xff]
      %v3109 = vld [vmem:[%s2688 + $0x169] sm:$0xff]
      %v3110 = vld [vmem:[%s2688 + $0x171] sm:$0xff]
      %s3111 = scalar_lea.vmem %s3, 16
      %v3112 = vld [vmem:[%s3111] sm:$0xf]
      %v3114 = vsel %vm1455, %v3079, 0
      %v3117 = vsel %vm1455, %v3080, 0
      %v3120 = vsel %vm1455, %v3081, 0
      %v3123 = vsel %vm1455, %v3082, 0
      %v3126 = vsel %vm1455, %v3083, 0
      %v3129 = vsel %vm1455, %v3084, 0
      %v3132 = vsel %vm1455, %v3085, 0
      %v3135 = vsel %vm1455, %v3086, 0
      %v3138 = vsel %vm1455, %v3087, 0
      %v3141 = vsel %vm1455, %v3088, 0
      %v3144 = vsel %vm1455, %v3089, 0
      %v3147 = vsel %vm1455, %v3090, 0
      %v3150 = vsel %vm1455, %v3091, 0
      %v3153 = vsel %vm1455, %v3092, 0
      %v3156 = vsel %vm1455, %v3093, 0
      %v3159 = vsel %vm1455, %v3094, 0
      %v3162 = vsel %vm1455, %v3095, 0
      %v3165 = vsel %vm1455, %v3096, 0
      %v3168 = vsel %vm1455, %v3097, 0
      %v3171 = vsel %vm1455, %v3098, 0
      %v3174 = vsel %vm1455, %v3099, 0
      %v3177 = vsel %vm1455, %v3100, 0
      %v3180 = vsel %vm1455, %v3101, 0
      %v3183 = vsel %vm1455, %v3102, 0
      %v3186 = vsel %vm1455, %v3103, 0
      %v3189 = vsel %vm1455, %v3104, 0
      %v3192 = vsel %vm1455, %v3105, 0
      %v3195 = vsel %vm1455, %v3106, 0
      %v3198 = vsel %vm1455, %v3107, 0
      %v3201 = vsel %vm1455, %v3108, 0
      %v3204 = vsel %vm1455, %v3109, 0
      %v3207 = vsel %vm1455, %v3110, 0
      %v3210 = vsel %vm1647, %v3112, 0
      %3212 = vmatprep.subr.mxu0 0.0
      %3213 = vmatpush1.msra.mxu0 0.0
      %3214 = vmatprep.subr.mxu0 0.0
      %3215 = vmatpush1.msra.mxu0 0.0
      %3216 = vmatprep.subr.mxu0 0.0
      %3217 = vmatpush1.msra.mxu0 0.0
      %3218 = vmatprep.subr.mxu0 0.0
      %3219 = vmatpush1.msra.mxu0 0.0
      %3220 = vmatprep.subr.mxu0 0.0
      %3221 = vmatpush1.msra.mxu0 0.0
      %3222 = vmatprep.subr.mxu0 0.0
      %3223 = vmatpush1.msra.mxu0 0.0
      %3224 = vmatprep.subr.mxu0 0.0
      %3225 = vmatpush1.msra.mxu0 0.0
      %3226 = vmatprep.subr.mxu0 0.0
      %3227 = vmatpush1.msra.mxu0 0.0
      %3228 = vmatprep.subr.mxu0 0.0
      %3229 = vmatpush1.msra.mxu0 0.0
      %3230 = vmatprep.subr.mxu0 0.0
      %3231 = vmatpush1.msra.mxu0 0.0
      %3232 = vmatprep.subr.mxu0 0.0
      %3233 = vmatpush1.msra.mxu0 0.0
      %3234 = vmatprep.subr.mxu0 0.0
      %3235 = vmatpush1.msra.mxu0 0.0
      %3236 = vmatprep.subr.mxu0 0.0
      %3237 = vmatpush1.msra.mxu0 0.0
      %3238 = vmatprep.subr.mxu0 0.0
      %3239 = vmatpush1.msra.mxu0 0.0
      %3240 = vmatprep.subr.mxu0 0.0
      %3241 = vmatpush1.msra.mxu0 0.0
      %3242 = vmatprep.subr.mxu0 0.0
      %3243 = vmatpush1.msra.mxu0 %v3210
      %3244 = vmatprep.subr.mxu0 0.0
      %3245 = vmatpush2.msra.mxu0 0.0
      %3246 = vmatprep.subr.mxu0 0.0
      %3247 = vmatpush2.msra.mxu0 0.0
      %3248 = vmatprep.subr.mxu0 0.0
      %3249 = vmatpush2.msra.mxu0 0.0
      %3250 = vmatprep.subr.mxu0 0.0
      %3251 = vmatpush2.msra.mxu0 0.0
      %3252 = vmatprep.subr.mxu0 0.0
      %3253 = vmatpush2.msra.mxu0 0.0
      %3254 = vmatprep.subr.mxu0 0.0
      %3255 = vmatpush2.msra.mxu0 0.0
      %3256 = vmatprep.subr.mxu0 0.0
      %3257 = vmatpush2.msra.mxu0 0.0
      %3258 = vmatprep.subr.mxu0 0.0
      %3259 = vmatpush2.msra.mxu0 0.0
      %3260 = vmatprep.subr.mxu0 0.0
      %3261 = vmatpush2.msra.mxu0 0.0
      %3262 = vmatprep.subr.mxu0 0.0
      %3263 = vmatpush2.msra.mxu0 0.0
      %3264 = vmatprep.subr.mxu0 0.0
      %3265 = vmatpush2.msra.mxu0 0.0
      %3266 = vmatprep.subr.mxu0 0.0
      %3267 = vmatpush2.msra.mxu0 0.0
      %3268 = vmatprep.subr.mxu0 0.0
      %3269 = vmatpush2.msra.mxu0 0.0
      %3270 = vmatprep.subr.mxu0 0.0
      %3271 = vmatpush2.msra.mxu0 0.0
      %3272 = vmatprep.subr.mxu0 0.0
      %3273 = vmatpush2.msra.mxu0 0.0
      %3274 = vmatprep.subr.mxu0 0.0
      %3275 = vmatpush2.msra.mxu0 0.0
      %3276 = vmatprep.mubr.f32.mxu0 0.0
      %3277 = vmatmul.mubr.f32.gmra.mxu0 %v3114
      %v3278 = vpop.f32.mrf.mxu0
      %v3279 = vadd.f32 0.0, %v3278
      %v3280 = vpop.f32.mrf.mxu0
      %3281 = vmatprep.mubr.f32.mxu0 0.0
      %3282 = vmatmul.mubr.f32.gmra.mxu0 %v3117
      %v3283 = vpop.f32.mrf.mxu0
      %v3284 = vadd.f32 0.0, %v3283
      %v3285 = vpop.f32.mrf.mxu0
      %3286 = vmatprep.mubr.f32.mxu0 0.0
      %3287 = vmatmul.mubr.f32.gmra.mxu0 %v3120
      %v3288 = vpop.f32.mrf.mxu0
      %v3289 = vadd.f32 0.0, %v3288
      %v3290 = vpop.f32.mrf.mxu0
      %3291 = vmatprep.mubr.f32.mxu0 0.0
      %3292 = vmatmul.mubr.f32.gmra.mxu0 %v3123
      %v3293 = vpop.f32.mrf.mxu0
      %v3294 = vadd.f32 0.0, %v3293
      %v3295 = vpop.f32.mrf.mxu0
      %3296 = vmatprep.mubr.f32.mxu0 0.0
      %3297 = vmatmul.mubr.f32.gmra.mxu0 %v3126
      %v3298 = vpop.f32.mrf.mxu0
      %v3299 = vadd.f32 0.0, %v3298
      %v3300 = vpop.f32.mrf.mxu0
      %3301 = vmatprep.mubr.f32.mxu0 0.0
      %3302 = vmatmul.mubr.f32.gmra.mxu0 %v3129
      %v3303 = vpop.f32.mrf.mxu0
      %v3304 = vadd.f32 0.0, %v3303
      %v3305 = vpop.f32.mrf.mxu0
      %3306 = vmatprep.mubr.f32.mxu0 0.0
      %3307 = vmatmul.mubr.f32.gmra.mxu0 %v3132
      %v3308 = vpop.f32.mrf.mxu0
      %v3309 = vadd.f32 0.0, %v3308
      %v3310 = vpop.f32.mrf.mxu0
      %3311 = vmatprep.mubr.f32.mxu0 0.0
      %3312 = vmatmul.mubr.f32.gmra.mxu0 %v3135
      %v3313 = vpop.f32.mrf.mxu0
      %v3314 = vadd.f32 0.0, %v3313
      %v3315 = vpop.f32.mrf.mxu0
      %3316 = vmatprep.mubr.f32.mxu0 0.0
      %3317 = vmatmul.mubr.f32.gmra.mxu0 %v3138
      %v3318 = vpop.f32.mrf.mxu0
      %v3319 = vadd.f32 0.0, %v3318
      %v3320 = vpop.f32.mrf.mxu0
      %3321 = vmatprep.mubr.f32.mxu0 0.0
      %3322 = vmatmul.mubr.f32.gmra.mxu0 %v3141
      %v3323 = vpop.f32.mrf.mxu0
      %v3324 = vadd.f32 0.0, %v3323
      %v3325 = vpop.f32.mrf.mxu0
      %3326 = vmatprep.mubr.f32.mxu0 0.0
      %3327 = vmatmul.mubr.f32.gmra.mxu0 %v3144
      %v3328 = vpop.f32.mrf.mxu0
      %v3329 = vadd.f32 0.0, %v3328
      %v3330 = vpop.f32.mrf.mxu0
      %3331 = vmatprep.mubr.f32.mxu0 0.0
      %3332 = vmatmul.mubr.f32.gmra.mxu0 %v3147
      %v3333 = vpop.f32.mrf.mxu0
      %v3334 = vadd.f32 0.0, %v3333
      %v3335 = vpop.f32.mrf.mxu0
      %3336 = vmatprep.mubr.f32.mxu0 0.0
      %3337 = vmatmul.mubr.f32.gmra.mxu0 %v3150
      %v3338 = vpop.f32.mrf.mxu0
      %v3339 = vadd.f32 0.0, %v3338
      %v3340 = vpop.f32.mrf.mxu0
      %3341 = vmatprep.mubr.f32.mxu0 0.0
      %3342 = vmatmul.mubr.f32.gmra.mxu0 %v3153
      %v3343 = vpop.f32.mrf.mxu0
      %v3344 = vadd.f32 0.0, %v3343
      %v3345 = vpop.f32.mrf.mxu0
      %3346 = vmatprep.mubr.f32.mxu0 0.0
      %3347 = vmatmul.mubr.f32.gmra.mxu0 %v3156
      %v3348 = vpop.f32.mrf.mxu0
      %v3349 = vadd.f32 0.0, %v3348
      %v3350 = vpop.f32.mrf.mxu0
      %3351 = vmatprep.mubr.f32.mxu0 0.0
      %3352 = vmatmul.mubr.f32.gmra.mxu0 %v3159
      %v3353 = vpop.f32.mrf.mxu0
      %v3354 = vadd.f32 0.0, %v3353
      %v3355 = vpop.f32.mrf.mxu0
      %3356 = vmatprep.mubr.f32.mxu0 0.0
      %3357 = vmatmul.mubr.f32.gmra.mxu0 %v3162
      %v3358 = vpop.f32.mrf.mxu0
      %v3359 = vadd.f32 0.0, %v3358
      %v3360 = vpop.f32.mrf.mxu0
      %3361 = vmatprep.mubr.f32.mxu0 0.0
      %3362 = vmatmul.mubr.f32.gmra.mxu0 %v3165
      %v3363 = vpop.f32.mrf.mxu0
      %v3364 = vadd.f32 0.0, %v3363
      %v3365 = vpop.f32.mrf.mxu0
      %3366 = vmatprep.mubr.f32.mxu0 0.0
      %3367 = vmatmul.mubr.f32.gmra.mxu0 %v3168
      %v3368 = vpop.f32.mrf.mxu0
      %v3369 = vadd.f32 0.0, %v3368
      %v3370 = vpop.f32.mrf.mxu0
      %3371 = vmatprep.mubr.f32.mxu0 0.0
      %3372 = vmatmul.mubr.f32.gmra.mxu0 %v3171
      %v3373 = vpop.f32.mrf.mxu0
      %v3374 = vadd.f32 0.0, %v3373
      %v3375 = vpop.f32.mrf.mxu0
      %3376 = vmatprep.mubr.f32.mxu0 0.0
      %3377 = vmatmul.mubr.f32.gmra.mxu0 %v3174
      %v3378 = vpop.f32.mrf.mxu0
      %v3379 = vadd.f32 0.0, %v3378
      %v3380 = vpop.f32.mrf.mxu0
      %3381 = vmatprep.mubr.f32.mxu0 0.0
      %3382 = vmatmul.mubr.f32.gmra.mxu0 %v3177
      %v3383 = vpop.f32.mrf.mxu0
      %v3384 = vadd.f32 0.0, %v3383
      %v3385 = vpop.f32.mrf.mxu0
      %3386 = vmatprep.mubr.f32.mxu0 0.0
      %3387 = vmatmul.mubr.f32.gmra.mxu0 %v3180
      %v3388 = vpop.f32.mrf.mxu0
      %v3389 = vadd.f32 0.0, %v3388
      %v3390 = vpop.f32.mrf.mxu0
      %3391 = vmatprep.mubr.f32.mxu0 0.0
      %3392 = vmatmul.mubr.f32.gmra.mxu0 %v3183
      %v3393 = vpop.f32.mrf.mxu0
      %v3394 = vadd.f32 0.0, %v3393
      %v3395 = vpop.f32.mrf.mxu0
      %3396 = vmatprep.mubr.f32.mxu0 0.0
      %3397 = vmatmul.mubr.f32.gmra.mxu0 %v3186
      %v3398 = vpop.f32.mrf.mxu0
      %v3399 = vadd.f32 0.0, %v3398
      %v3400 = vpop.f32.mrf.mxu0
      %3401 = vmatprep.mubr.f32.mxu0 0.0
      %3402 = vmatmul.mubr.f32.gmra.mxu0 %v3189
      %v3403 = vpop.f32.mrf.mxu0
      %v3404 = vadd.f32 0.0, %v3403
      %v3405 = vpop.f32.mrf.mxu0
      %3406 = vmatprep.mubr.f32.mxu0 0.0
      %3407 = vmatmul.mubr.f32.gmra.mxu0 %v3192
      %v3408 = vpop.f32.mrf.mxu0
      %v3409 = vadd.f32 0.0, %v3408
      %v3410 = vpop.f32.mrf.mxu0
      %3411 = vmatprep.mubr.f32.mxu0 0.0
      %3412 = vmatmul.mubr.f32.gmra.mxu0 %v3195
      %v3413 = vpop.f32.mrf.mxu0
      %v3414 = vadd.f32 0.0, %v3413
      %v3415 = vpop.f32.mrf.mxu0
      %3416 = vmatprep.mubr.f32.mxu0 0.0
      %3417 = vmatmul.mubr.f32.gmra.mxu0 %v3198
      %v3418 = vpop.f32.mrf.mxu0
      %v3419 = vadd.f32 0.0, %v3418
      %v3420 = vpop.f32.mrf.mxu0
      %3421 = vmatprep.mubr.f32.mxu0 0.0
      %3422 = vmatmul.mubr.f32.gmra.mxu0 %v3201
      %v3423 = vpop.f32.mrf.mxu0
      %v3424 = vadd.f32 0.0, %v3423
      %v3425 = vpop.f32.mrf.mxu0
      %3426 = vmatprep.mubr.f32.mxu0 0.0
      %3427 = vmatmul.mubr.f32.gmra.mxu0 %v3204
      %v3428 = vpop.f32.mrf.mxu0
      %v3429 = vadd.f32 0.0, %v3428
      %v3430 = vpop.f32.mrf.mxu0
      %3431 = vmatprep.mubr.f32.mxu0 0.0
      %3432 = vmatmul.mubr.f32.gmra.mxu0 %v3207
      %v3433 = vpop.f32.mrf.mxu0
      %v3434 = vadd.f32 0.0, %v3433
      %v3435 = vpop.f32.mrf.mxu0
      %3436 = vdwg.mxu0
      %v3437 = vadd.f32 %v3047, %v3279
      %v3438 = vadd.f32 %v3048, %v3284
      %v3439 = vadd.f32 %v3049, %v3289
      %v3440 = vadd.f32 %v3050, %v3294
      %v3441 = vadd.f32 %v3051, %v3299
      %v3442 = vadd.f32 %v3052, %v3304
      %v3443 = vadd.f32 %v3053, %v3309
      %v3444 = vadd.f32 %v3054, %v3314
      %v3445 = vadd.f32 %v3055, %v3319
      %v3446 = vadd.f32 %v3056, %v3324
      %v3447 = vadd.f32 %v3057, %v3329
      %v3448 = vadd.f32 %v3058, %v3334
      %v3449 = vadd.f32 %v3059, %v3339
      %v3450 = vadd.f32 %v3060, %v3344
      %v3451 = vadd.f32 %v3061, %v3349
      %v3452 = vadd.f32 %v3062, %v3354
      %v3453 = vadd.f32 %v3063, %v3359
      %v3454 = vadd.f32 %v3064, %v3364
      %v3455 = vadd.f32 %v3065, %v3369
      %v3456 = vadd.f32 %v3066, %v3374
      %v3457 = vadd.f32 %v3067, %v3379
      %v3458 = vadd.f32 %v3068, %v3384
      %v3459 = vadd.f32 %v3069, %v3389
      %v3460 = vadd.f32 %v3070, %v3394
      %v3461 = vadd.f32 %v3071, %v3399
      %v3462 = vadd.f32 %v3072, %v3404
      %v3463 = vadd.f32 %v3073, %v3409
      %v3464 = vadd.f32 %v3074, %v3414
      %v3465 = vadd.f32 %v3075, %v3419
      %v3466 = vadd.f32 %v3076, %v3424
      %v3467 = vadd.f32 %v3077, %v3429
      %v3468 = vadd.f32 %v3078, %v3434
      %v3469 = vld [vmem:[%s2688 + $0x2] sm:$0xff]
      %v3470 = vld [vmem:[%s2688 + $0xa] sm:$0xff]
      %v3471 = vld [vmem:[%s2688 + $0x1a] sm:$0xff]
      %v3472 = vld [vmem:[%s2688 + $0x22] sm:$0xff]
      %v3473 = vld [vmem:[%s2688 + $0x32] sm:$0xff]
      %v3474 = vld [vmem:[%s2688 + $0x3a] sm:$0xff]
      %v3475 = vld [vmem:[%s2688 + $0x4a] sm:$0xff]
      %v3476 = vld [vmem:[%s2688 + $0x52] sm:$0xff]
      %v3477 = vld [vmem:[%s2688 + $0x62] sm:$0xff]
      %v3478 = vld [vmem:[%s2688 + $0x6a] sm:$0xff]
      %v3479 = vld [vmem:[%s2688 + $0x7a] sm:$0xff]
      %v3480 = vld [vmem:[%s2688 + $0x82] sm:$0xff]
      %v3481 = vld [vmem:[%s2688 + $0x92] sm:$0xff]
      %v3482 = vld [vmem:[%s2688 + $0x9a] sm:$0xff]
      %v3483 = vld [vmem:[%s2688 + $0xaa] sm:$0xff]
      %v3484 = vld [vmem:[%s2688 + $0xb2] sm:$0xff]
      %v3485 = vld [vmem:[%s2688 + $0xc2] sm:$0xff]
      %v3486 = vld [vmem:[%s2688 + $0xca] sm:$0xff]
      %v3487 = vld [vmem:[%s2688 + $0xda] sm:$0xff]
      %v3488 = vld [vmem:[%s2688 + $0xe2] sm:$0xff]
      %v3489 = vld [vmem:[%s2688 + $0xf2] sm:$0xff]
      %v3490 = vld [vmem:[%s2688 + $0xfa] sm:$0xff]
      %v3491 = vld [vmem:[%s2688 + $0x10a] sm:$0xff]
      %v3492 = vld [vmem:[%s2688 + $0x112] sm:$0xff]
      %v3493 = vld [vmem:[%s2688 + $0x122] sm:$0xff]
      %v3494 = vld [vmem:[%s2688 + $0x12a] sm:$0xff]
      %v3495 = vld [vmem:[%s2688 + $0x13a] sm:$0xff]
      %v3496 = vld [vmem:[%s2688 + $0x142] sm:$0xff]
      %v3497 = vld [vmem:[%s2688 + $0x152] sm:$0xff]
      %v3498 = vld [vmem:[%s2688 + $0x15a] sm:$0xff]
      %v3499 = vld [vmem:[%s2688 + $0x16a] sm:$0xff]
      %v3500 = vld [vmem:[%s2688 + $0x172] sm:$0xff]
      %s3501 = scalar_lea.vmem %s3, 20
      %v3502 = vld [vmem:[%s3501] sm:$0xf]
      %v3504 = vsel %vm1455, %v3469, 0
      %v3507 = vsel %vm1455, %v3470, 0
      %v3510 = vsel %vm1455, %v3471, 0
      %v3513 = vsel %vm1455, %v3472, 0
      %v3516 = vsel %vm1455, %v3473, 0
      %v3519 = vsel %vm1455, %v3474, 0
      %v3522 = vsel %vm1455, %v3475, 0
      %v3525 = vsel %vm1455, %v3476, 0
      %v3528 = vsel %vm1455, %v3477, 0
      %v3531 = vsel %vm1455, %v3478, 0
      %v3534 = vsel %vm1455, %v3479, 0
      %v3537 = vsel %vm1455, %v3480, 0
      %v3540 = vsel %vm1455, %v3481, 0
      %v3543 = vsel %vm1455, %v3482, 0
      %v3546 = vsel %vm1455, %v3483, 0
      %v3549 = vsel %vm1455, %v3484, 0
      %v3552 = vsel %vm1455, %v3485, 0
      %v3555 = vsel %vm1455, %v3486, 0
      %v3558 = vsel %vm1455, %v3487, 0
      %v3561 = vsel %vm1455, %v3488, 0
      %v3564 = vsel %vm1455, %v3489, 0
      %v3567 = vsel %vm1455, %v3490, 0
      %v3570 = vsel %vm1455, %v3491, 0
      %v3573 = vsel %vm1455, %v3492, 0
      %v3576 = vsel %vm1455, %v3493, 0
      %v3579 = vsel %vm1455, %v3494, 0
      %v3582 = vsel %vm1455, %v3495, 0
      %v3585 = vsel %vm1455, %v3496, 0
      %v3588 = vsel %vm1455, %v3497, 0
      %v3591 = vsel %vm1455, %v3498, 0
      %v3594 = vsel %vm1455, %v3499, 0
      %v3597 = vsel %vm1455, %v3500, 0
      %v3600 = vsel %vm1647, %v3502, 0
      %3602 = vmatprep.subr.mxu0 0.0
      %3603 = vmatpush1.msra.mxu0 0.0
      %3604 = vmatprep.subr.mxu0 0.0
      %3605 = vmatpush1.msra.mxu0 0.0
      %3606 = vmatprep.subr.mxu0 0.0
      %3607 = vmatpush1.msra.mxu0 0.0
      %3608 = vmatprep.subr.mxu0 0.0
      %3609 = vmatpush1.msra.mxu0 0.0
      %3610 = vmatprep.subr.mxu0 0.0
      %3611 = vmatpush1.msra.mxu0 0.0
      %3612 = vmatprep.subr.mxu0 0.0
      %3613 = vmatpush1.msra.mxu0 0.0
      %3614 = vmatprep.subr.mxu0 0.0
      %3615 = vmatpush1.msra.mxu0 0.0
      %3616 = vmatprep.subr.mxu0 0.0
      %3617 = vmatpush1.msra.mxu0 0.0
      %3618 = vmatprep.subr.mxu0 0.0
      %3619 = vmatpush1.msra.mxu0 0.0
      %3620 = vmatprep.subr.mxu0 0.0
      %3621 = vmatpush1.msra.mxu0 0.0
      %3622 = vmatprep.subr.mxu0 0.0
      %3623 = vmatpush1.msra.mxu0 0.0
      %3624 = vmatprep.subr.mxu0 0.0
      %3625 = vmatpush1.msra.mxu0 0.0
      %3626 = vmatprep.subr.mxu0 0.0
      %3627 = vmatpush1.msra.mxu0 0.0
      %3628 = vmatprep.subr.mxu0 0.0
      %3629 = vmatpush1.msra.mxu0 0.0
      %3630 = vmatprep.subr.mxu0 0.0
      %3631 = vmatpush1.msra.mxu0 0.0
      %3632 = vmatprep.subr.mxu0 0.0
      %3633 = vmatpush1.msra.mxu0 %v3600
      %3634 = vmatprep.subr.mxu0 0.0
      %3635 = vmatpush2.msra.mxu0 0.0
      %3636 = vmatprep.subr.mxu0 0.0
      %3637 = vmatpush2.msra.mxu0 0.0
      %3638 = vmatprep.subr.mxu0 0.0
      %3639 = vmatpush2.msra.mxu0 0.0
      %3640 = vmatprep.subr.mxu0 0.0
      %3641 = vmatpush2.msra.mxu0 0.0
      %3642 = vmatprep.subr.mxu0 0.0
      %3643 = vmatpush2.msra.mxu0 0.0
      %3644 = vmatprep.subr.mxu0 0.0
      %3645 = vmatpush2.msra.mxu0 0.0
      %3646 = vmatprep.subr.mxu0 0.0
      %3647 = vmatpush2.msra.mxu0 0.0
      %3648 = vmatprep.subr.mxu0 0.0
      %3649 = vmatpush2.msra.mxu0 0.0
      %3650 = vmatprep.subr.mxu0 0.0
      %3651 = vmatpush2.msra.mxu0 0.0
      %3652 = vmatprep.subr.mxu0 0.0
      %3653 = vmatpush2.msra.mxu0 0.0
      %3654 = vmatprep.subr.mxu0 0.0
      %3655 = vmatpush2.msra.mxu0 0.0
      %3656 = vmatprep.subr.mxu0 0.0
      %3657 = vmatpush2.msra.mxu0 0.0
      %3658 = vmatprep.subr.mxu0 0.0
      %3659 = vmatpush2.msra.mxu0 0.0
      %3660 = vmatprep.subr.mxu0 0.0
      %3661 = vmatpush2.msra.mxu0 0.0
      %3662 = vmatprep.subr.mxu0 0.0
      %3663 = vmatpush2.msra.mxu0 0.0
      %3664 = vmatprep.subr.mxu0 0.0
      %3665 = vmatpush2.msra.mxu0 0.0
      %3666 = vmatprep.mubr.f32.mxu0 0.0
      %3667 = vmatmul.mubr.f32.gmra.mxu0 %v3504
      %v3668 = vpop.f32.mrf.mxu0
      %v3669 = vadd.f32 0.0, %v3668
      %v3670 = vpop.f32.mrf.mxu0
      %3671 = vmatprep.mubr.f32.mxu0 0.0
      %3672 = vmatmul.mubr.f32.gmra.mxu0 %v3507
      %v3673 = vpop.f32.mrf.mxu0
      %v3674 = vadd.f32 0.0, %v3673
      %v3675 = vpop.f32.mrf.mxu0
      %3676 = vmatprep.mubr.f32.mxu0 0.0
      %3677 = vmatmul.mubr.f32.gmra.mxu0 %v3510
      %v3678 = vpop.f32.mrf.mxu0
      %v3679 = vadd.f32 0.0, %v3678
      %v3680 = vpop.f32.mrf.mxu0
      %3681 = vmatprep.mubr.f32.mxu0 0.0
      %3682 = vmatmul.mubr.f32.gmra.mxu0 %v3513
      %v3683 = vpop.f32.mrf.mxu0
      %v3684 = vadd.f32 0.0, %v3683
      %v3685 = vpop.f32.mrf.mxu0
      %3686 = vmatprep.mubr.f32.mxu0 0.0
      %3687 = vmatmul.mubr.f32.gmra.mxu0 %v3516
      %v3688 = vpop.f32.mrf.mxu0
      %v3689 = vadd.f32 0.0, %v3688
      %v3690 = vpop.f32.mrf.mxu0
      %3691 = vmatprep.mubr.f32.mxu0 0.0
      %3692 = vmatmul.mubr.f32.gmra.mxu0 %v3519
      %v3693 = vpop.f32.mrf.mxu0
      %v3694 = vadd.f32 0.0, %v3693
      %v3695 = vpop.f32.mrf.mxu0
      %3696 = vmatprep.mubr.f32.mxu0 0.0
      %3697 = vmatmul.mubr.f32.gmra.mxu0 %v3522
      %v3698 = vpop.f32.mrf.mxu0
      %v3699 = vadd.f32 0.0, %v3698
      %v3700 = vpop.f32.mrf.mxu0
      %3701 = vmatprep.mubr.f32.mxu0 0.0
      %3702 = vmatmul.mubr.f32.gmra.mxu0 %v3525
      %v3703 = vpop.f32.mrf.mxu0
      %v3704 = vadd.f32 0.0, %v3703
      %v3705 = vpop.f32.mrf.mxu0
      %3706 = vmatprep.mubr.f32.mxu0 0.0
      %3707 = vmatmul.mubr.f32.gmra.mxu0 %v3528
      %v3708 = vpop.f32.mrf.mxu0
      %v3709 = vadd.f32 0.0, %v3708
      %v3710 = vpop.f32.mrf.mxu0
      %3711 = vmatprep.mubr.f32.mxu0 0.0
      %3712 = vmatmul.mubr.f32.gmra.mxu0 %v3531
      %v3713 = vpop.f32.mrf.mxu0
      %v3714 = vadd.f32 0.0, %v3713
      %v3715 = vpop.f32.mrf.mxu0
      %3716 = vmatprep.mubr.f32.mxu0 0.0
      %3717 = vmatmul.mubr.f32.gmra.mxu0 %v3534
      %v3718 = vpop.f32.mrf.mxu0
      %v3719 = vadd.f32 0.0, %v3718
      %v3720 = vpop.f32.mrf.mxu0
      %3721 = vmatprep.mubr.f32.mxu0 0.0
      %3722 = vmatmul.mubr.f32.gmra.mxu0 %v3537
      %v3723 = vpop.f32.mrf.mxu0
      %v3724 = vadd.f32 0.0, %v3723
      %v3725 = vpop.f32.mrf.mxu0
      %3726 = vmatprep.mubr.f32.mxu0 0.0
      %3727 = vmatmul.mubr.f32.gmra.mxu0 %v3540
      %v3728 = vpop.f32.mrf.mxu0
      %v3729 = vadd.f32 0.0, %v3728
      %v3730 = vpop.f32.mrf.mxu0
      %3731 = vmatprep.mubr.f32.mxu0 0.0
      %3732 = vmatmul.mubr.f32.gmra.mxu0 %v3543
      %v3733 = vpop.f32.mrf.mxu0
      %v3734 = vadd.f32 0.0, %v3733
      %v3735 = vpop.f32.mrf.mxu0
      %3736 = vmatprep.mubr.f32.mxu0 0.0
      %3737 = vmatmul.mubr.f32.gmra.mxu0 %v3546
      %v3738 = vpop.f32.mrf.mxu0
      %v3739 = vadd.f32 0.0, %v3738
      %v3740 = vpop.f32.mrf.mxu0
      %3741 = vmatprep.mubr.f32.mxu0 0.0
      %3742 = vmatmul.mubr.f32.gmra.mxu0 %v3549
      %v3743 = vpop.f32.mrf.mxu0
      %v3744 = vadd.f32 0.0, %v3743
      %v3745 = vpop.f32.mrf.mxu0
      %3746 = vmatprep.mubr.f32.mxu0 0.0
      %3747 = vmatmul.mubr.f32.gmra.mxu0 %v3552
      %v3748 = vpop.f32.mrf.mxu0
      %v3749 = vadd.f32 0.0, %v3748
      %v3750 = vpop.f32.mrf.mxu0
      %3751 = vmatprep.mubr.f32.mxu0 0.0
      %3752 = vmatmul.mubr.f32.gmra.mxu0 %v3555
      %v3753 = vpop.f32.mrf.mxu0
      %v3754 = vadd.f32 0.0, %v3753
      %v3755 = vpop.f32.mrf.mxu0
      %3756 = vmatprep.mubr.f32.mxu0 0.0
      %3757 = vmatmul.mubr.f32.gmra.mxu0 %v3558
      %v3758 = vpop.f32.mrf.mxu0
      %v3759 = vadd.f32 0.0, %v3758
      %v3760 = vpop.f32.mrf.mxu0
      %3761 = vmatprep.mubr.f32.mxu0 0.0
      %3762 = vmatmul.mubr.f32.gmra.mxu0 %v3561
      %v3763 = vpop.f32.mrf.mxu0
      %v3764 = vadd.f32 0.0, %v3763
      %v3765 = vpop.f32.mrf.mxu0
      %3766 = vmatprep.mubr.f32.mxu0 0.0
      %3767 = vmatmul.mubr.f32.gmra.mxu0 %v3564
      %v3768 = vpop.f32.mrf.mxu0
      %v3769 = vadd.f32 0.0, %v3768
      %v3770 = vpop.f32.mrf.mxu0
      %3771 = vmatprep.mubr.f32.mxu0 0.0
      %3772 = vmatmul.mubr.f32.gmra.mxu0 %v3567
      %v3773 = vpop.f32.mrf.mxu0
      %v3774 = vadd.f32 0.0, %v3773
      %v3775 = vpop.f32.mrf.mxu0
      %3776 = vmatprep.mubr.f32.mxu0 0.0
      %3777 = vmatmul.mubr.f32.gmra.mxu0 %v3570
      %v3778 = vpop.f32.mrf.mxu0
      %v3779 = vadd.f32 0.0, %v3778
      %v3780 = vpop.f32.mrf.mxu0
      %3781 = vmatprep.mubr.f32.mxu0 0.0
      %3782 = vmatmul.mubr.f32.gmra.mxu0 %v3573
      %v3783 = vpop.f32.mrf.mxu0
      %v3784 = vadd.f32 0.0, %v3783
      %v3785 = vpop.f32.mrf.mxu0
      %3786 = vmatprep.mubr.f32.mxu0 0.0
      %3787 = vmatmul.mubr.f32.gmra.mxu0 %v3576
      %v3788 = vpop.f32.mrf.mxu0
      %v3789 = vadd.f32 0.0, %v3788
      %v3790 = vpop.f32.mrf.mxu0
      %3791 = vmatprep.mubr.f32.mxu0 0.0
      %3792 = vmatmul.mubr.f32.gmra.mxu0 %v3579
      %v3793 = vpop.f32.mrf.mxu0
      %v3794 = vadd.f32 0.0, %v3793
      %v3795 = vpop.f32.mrf.mxu0
      %3796 = vmatprep.mubr.f32.mxu0 0.0
      %3797 = vmatmul.mubr.f32.gmra.mxu0 %v3582
      %v3798 = vpop.f32.mrf.mxu0
      %v3799 = vadd.f32 0.0, %v3798
      %v3800 = vpop.f32.mrf.mxu0
      %3801 = vmatprep.mubr.f32.mxu0 0.0
      %3802 = vmatmul.mubr.f32.gmra.mxu0 %v3585
      %v3803 = vpop.f32.mrf.mxu0
      %v3804 = vadd.f32 0.0, %v3803
      %v3805 = vpop.f32.mrf.mxu0
      %3806 = vmatprep.mubr.f32.mxu0 0.0
      %3807 = vmatmul.mubr.f32.gmra.mxu0 %v3588
      %v3808 = vpop.f32.mrf.mxu0
      %v3809 = vadd.f32 0.0, %v3808
      %v3810 = vpop.f32.mrf.mxu0
      %3811 = vmatprep.mubr.f32.mxu0 0.0
      %3812 = vmatmul.mubr.f32.gmra.mxu0 %v3591
      %v3813 = vpop.f32.mrf.mxu0
      %v3814 = vadd.f32 0.0, %v3813
      %v3815 = vpop.f32.mrf.mxu0
      %3816 = vmatprep.mubr.f32.mxu0 0.0
      %3817 = vmatmul.mubr.f32.gmra.mxu0 %v3594
      %v3818 = vpop.f32.mrf.mxu0
      %v3819 = vadd.f32 0.0, %v3818
      %v3820 = vpop.f32.mrf.mxu0
      %3821 = vmatprep.mubr.f32.mxu0 0.0
      %3822 = vmatmul.mubr.f32.gmra.mxu0 %v3597
      %v3823 = vpop.f32.mrf.mxu0
      %v3824 = vadd.f32 0.0, %v3823
      %v3825 = vpop.f32.mrf.mxu0
      %3826 = vdwg.mxu0
      %v3827 = vadd.f32 %v3437, %v3669
      %v3828 = vadd.f32 %v3438, %v3674
      %v3829 = vadd.f32 %v3439, %v3679
      %v3830 = vadd.f32 %v3440, %v3684
      %v3831 = vadd.f32 %v3441, %v3689
      %v3832 = vadd.f32 %v3442, %v3694
      %v3833 = vadd.f32 %v3443, %v3699
      %v3834 = vadd.f32 %v3444, %v3704
      %v3835 = vadd.f32 %v3445, %v3709
      %v3836 = vadd.f32 %v3446, %v3714
      %v3837 = vadd.f32 %v3447, %v3719
      %v3838 = vadd.f32 %v3448, %v3724
      %v3839 = vadd.f32 %v3449, %v3729
      %v3840 = vadd.f32 %v3450, %v3734
      %v3841 = vadd.f32 %v3451, %v3739
      %v3842 = vadd.f32 %v3452, %v3744
      %v3843 = vadd.f32 %v3453, %v3749
      %v3844 = vadd.f32 %v3454, %v3754
      %v3845 = vadd.f32 %v3455, %v3759
      %v3846 = vadd.f32 %v3456, %v3764
      %v3847 = vadd.f32 %v3457, %v3769
      %v3848 = vadd.f32 %v3458, %v3774
      %v3849 = vadd.f32 %v3459, %v3779
      %v3850 = vadd.f32 %v3460, %v3784
      %v3851 = vadd.f32 %v3461, %v3789
      %v3852 = vadd.f32 %v3462, %v3794
      %v3853 = vadd.f32 %v3463, %v3799
      %v3854 = vadd.f32 %v3464, %v3804
      %v3855 = vadd.f32 %v3465, %v3809
      %v3856 = vadd.f32 %v3466, %v3814
      %v3857 = vadd.f32 %v3467, %v3819
      %v3858 = vadd.f32 %v3468, %v3824
      %s3859 = scalar_lea.vmem [#allocation2], 48
      %v3860 = vld [vmem:[%s3859] sm:$0xff]
      %v3861 = vld [vmem:[%s3859 + $0x8] sm:$0xff]
      %v3862 = vld [vmem:[%s3859 + $0x18] sm:$0xff]
      %v3863 = vld [vmem:[%s3859 + $0x20] sm:$0xff]
      %v3864 = vld [vmem:[%s3859 + $0x30] sm:$0xff]
      %v3865 = vld [vmem:[%s3859 + $0x38] sm:$0xff]
      %v3866 = vld [vmem:[%s3859 + $0x48] sm:$0xff]
      %v3867 = vld [vmem:[%s3859 + $0x50] sm:$0xff]
      %v3868 = vld [vmem:[%s3859 + $0x60] sm:$0xff]
      %v3869 = vld [vmem:[%s3859 + $0x68] sm:$0xff]
      %v3870 = vld [vmem:[%s3859 + $0x78] sm:$0xff]
      %v3871 = vld [vmem:[%s3859 + $0x80] sm:$0xff]
      %v3872 = vld [vmem:[%s3859 + $0x90] sm:$0xff]
      %v3873 = vld [vmem:[%s3859 + $0x98] sm:$0xff]
      %v3874 = vld [vmem:[%s3859 + $0xa8] sm:$0xff]
      %v3875 = vld [vmem:[%s3859 + $0xb0] sm:$0xff]
      %v3876 = vld [vmem:[%s3859 + $0xc0] sm:$0xff]
      %v3877 = vld [vmem:[%s3859 + $0xc8] sm:$0xff]
      %v3878 = vld [vmem:[%s3859 + $0xd8] sm:$0xff]
      %v3879 = vld [vmem:[%s3859 + $0xe0] sm:$0xff]
      %v3880 = vld [vmem:[%s3859 + $0xf0] sm:$0xff]
      %v3881 = vld [vmem:[%s3859 + $0xf8] sm:$0xff]
      %v3882 = vld [vmem:[%s3859 + $0x108] sm:$0xff]
      %v3883 = vld [vmem:[%s3859 + $0x110] sm:$0xff]
      %v3884 = vld [vmem:[%s3859 + $0x120] sm:$0xff]
      %v3885 = vld [vmem:[%s3859 + $0x128] sm:$0xff]
      %v3886 = vld [vmem:[%s3859 + $0x138] sm:$0xff]
      %v3887 = vld [vmem:[%s3859 + $0x140] sm:$0xff]
      %v3888 = vld [vmem:[%s3859 + $0x150] sm:$0xff]
      %v3889 = vld [vmem:[%s3859 + $0x158] sm:$0xff]
      %v3890 = vld [vmem:[%s3859 + $0x168] sm:$0xff]
      %v3891 = vld [vmem:[%s3859 + $0x170] sm:$0xff]
      %s3892 = scalar_lea.vmem %s3, 24
      %v3893 = vld [vmem:[%s3892] sm:$0xf]
      %v3895 = vsel %vm1455, %v3860, 0
      %v3898 = vsel %vm1455, %v3861, 0
      %v3901 = vsel %vm1455, %v3862, 0
      %v3904 = vsel %vm1455, %v3863, 0
      %v3907 = vsel %vm1455, %v3864, 0
      %v3910 = vsel %vm1455, %v3865, 0
      %v3913 = vsel %vm1455, %v3866, 0
      %v3916 = vsel %vm1455, %v3867, 0
      %v3919 = vsel %vm1455, %v3868, 0
      %v3922 = vsel %vm1455, %v3869, 0
      %v3925 = vsel %vm1455, %v3870, 0
      %v3928 = vsel %vm1455, %v3871, 0
      %v3931 = vsel %vm1455, %v3872, 0
      %v3934 = vsel %vm1455, %v3873, 0
      %v3937 = vsel %vm1455, %v3874, 0
      %v3940 = vsel %vm1455, %v3875, 0
      %v3943 = vsel %vm1455, %v3876, 0
      %v3946 = vsel %vm1455, %v3877, 0
      %v3949 = vsel %vm1455, %v3878, 0
      %v3952 = vsel %vm1455, %v3879, 0
      %v3955 = vsel %vm1455, %v3880, 0
      %v3958 = vsel %vm1455, %v3881, 0
      %v3961 = vsel %vm1455, %v3882, 0
      %v3964 = vsel %vm1455, %v3883, 0
      %v3967 = vsel %vm1455, %v3884, 0
      %v3970 = vsel %vm1455, %v3885, 0
      %v3973 = vsel %vm1455, %v3886, 0
      %v3976 = vsel %vm1455, %v3887, 0
      %v3979 = vsel %vm1455, %v3888, 0
      %v3982 = vsel %vm1455, %v3889, 0
      %v3985 = vsel %vm1455, %v3890, 0
      %v3988 = vsel %vm1455, %v3891, 0
      %v3991 = vsel %vm1647, %v3893, 0
      %3993 = vmatprep.subr.mxu0 0.0
      %3994 = vmatpush1.msra.mxu0 0.0
      %3995 = vmatprep.subr.mxu0 0.0
      %3996 = vmatpush1.msra.mxu0 0.0
      %3997 = vmatprep.subr.mxu0 0.0
      %3998 = vmatpush1.msra.mxu0 0.0
      %3999 = vmatprep.subr.mxu0 0.0
      %4000 = vmatpush1.msra.mxu0 0.0
      %4001 = vmatprep.subr.mxu0 0.0
      %4002 = vmatpush1.msra.mxu0 0.0
      %4003 = vmatprep.subr.mxu0 0.0
      %4004 = vmatpush1.msra.mxu0 0.0
      %4005 = vmatprep.subr.mxu0 0.0
      %4006 = vmatpush1.msra.mxu0 0.0
      %4007 = vmatprep.subr.mxu0 0.0
      %4008 = vmatpush1.msra.mxu0 0.0
      %4009 = vmatprep.subr.mxu0 0.0
      %4010 = vmatpush1.msra.mxu0 0.0
      %4011 = vmatprep.subr.mxu0 0.0
      %4012 = vmatpush1.msra.mxu0 0.0
      %4013 = vmatprep.subr.mxu0 0.0
      %4014 = vmatpush1.msra.mxu0 0.0
      %4015 = vmatprep.subr.mxu0 0.0
      %4016 = vmatpush1.msra.mxu0 0.0
      %4017 = vmatprep.subr.mxu0 0.0
      %4018 = vmatpush1.msra.mxu0 0.0
      %4019 = vmatprep.subr.mxu0 0.0
      %4020 = vmatpush1.msra.mxu0 0.0
      %4021 = vmatprep.subr.mxu0 0.0
      %4022 = vmatpush1.msra.mxu0 0.0
      %4023 = vmatprep.subr.mxu0 0.0
      %4024 = vmatpush1.msra.mxu0 %v3991
      %4025 = vmatprep.subr.mxu0 0.0
      %4026 = vmatpush2.msra.mxu0 0.0
      %4027 = vmatprep.subr.mxu0 0.0
      %4028 = vmatpush2.msra.mxu0 0.0
      %4029 = vmatprep.subr.mxu0 0.0
      %4030 = vmatpush2.msra.mxu0 0.0
      %4031 = vmatprep.subr.mxu0 0.0
      %4032 = vmatpush2.msra.mxu0 0.0
      %4033 = vmatprep.subr.mxu0 0.0
      %4034 = vmatpush2.msra.mxu0 0.0
      %4035 = vmatprep.subr.mxu0 0.0
      %4036 = vmatpush2.msra.mxu0 0.0
      %4037 = vmatprep.subr.mxu0 0.0
      %4038 = vmatpush2.msra.mxu0 0.0
      %4039 = vmatprep.subr.mxu0 0.0
      %4040 = vmatpush2.msra.mxu0 0.0
      %4041 = vmatprep.subr.mxu0 0.0
      %4042 = vmatpush2.msra.mxu0 0.0
      %4043 = vmatprep.subr.mxu0 0.0
      %4044 = vmatpush2.msra.mxu0 0.0
      %4045 = vmatprep.subr.mxu0 0.0
      %4046 = vmatpush2.msra.mxu0 0.0
      %4047 = vmatprep.subr.mxu0 0.0
      %4048 = vmatpush2.msra.mxu0 0.0
      %4049 = vmatprep.subr.mxu0 0.0
      %4050 = vmatpush2.msra.mxu0 0.0
      %4051 = vmatprep.subr.mxu0 0.0
      %4052 = vmatpush2.msra.mxu0 0.0
      %4053 = vmatprep.subr.mxu0 0.0
      %4054 = vmatpush2.msra.mxu0 0.0
      %4055 = vmatprep.subr.mxu0 0.0
      %4056 = vmatpush2.msra.mxu0 0.0
      %4057 = vmatprep.mubr.f32.mxu0 0.0
      %4058 = vmatmul.mubr.f32.gmra.mxu0 %v3895
      %v4059 = vpop.f32.mrf.mxu0
      %v4060 = vadd.f32 0.0, %v4059
      %v4061 = vpop.f32.mrf.mxu0
      %4062 = vmatprep.mubr.f32.mxu0 0.0
      %4063 = vmatmul.mubr.f32.gmra.mxu0 %v3898
      %v4064 = vpop.f32.mrf.mxu0
      %v4065 = vadd.f32 0.0, %v4064
      %v4066 = vpop.f32.mrf.mxu0
      %4067 = vmatprep.mubr.f32.mxu0 0.0
      %4068 = vmatmul.mubr.f32.gmra.mxu0 %v3901
      %v4069 = vpop.f32.mrf.mxu0
      %v4070 = vadd.f32 0.0, %v4069
      %v4071 = vpop.f32.mrf.mxu0
      %4072 = vmatprep.mubr.f32.mxu0 0.0
      %4073 = vmatmul.mubr.f32.gmra.mxu0 %v3904
      %v4074 = vpop.f32.mrf.mxu0
      %v4075 = vadd.f32 0.0, %v4074
      %v4076 = vpop.f32.mrf.mxu0
      %4077 = vmatprep.mubr.f32.mxu0 0.0
      %4078 = vmatmul.mubr.f32.gmra.mxu0 %v3907
      %v4079 = vpop.f32.mrf.mxu0
      %v4080 = vadd.f32 0.0, %v4079
      %v4081 = vpop.f32.mrf.mxu0
      %4082 = vmatprep.mubr.f32.mxu0 0.0
      %4083 = vmatmul.mubr.f32.gmra.mxu0 %v3910
      %v4084 = vpop.f32.mrf.mxu0
      %v4085 = vadd.f32 0.0, %v4084
      %v4086 = vpop.f32.mrf.mxu0
      %4087 = vmatprep.mubr.f32.mxu0 0.0
      %4088 = vmatmul.mubr.f32.gmra.mxu0 %v3913
      %v4089 = vpop.f32.mrf.mxu0
      %v4090 = vadd.f32 0.0, %v4089
      %v4091 = vpop.f32.mrf.mxu0
      %4092 = vmatprep.mubr.f32.mxu0 0.0
      %4093 = vmatmul.mubr.f32.gmra.mxu0 %v3916
      %v4094 = vpop.f32.mrf.mxu0
      %v4095 = vadd.f32 0.0, %v4094
      %v4096 = vpop.f32.mrf.mxu0
      %4097 = vmatprep.mubr.f32.mxu0 0.0
      %4098 = vmatmul.mubr.f32.gmra.mxu0 %v3919
      %v4099 = vpop.f32.mrf.mxu0
      %v4100 = vadd.f32 0.0, %v4099
      %v4101 = vpop.f32.mrf.mxu0
      %4102 = vmatprep.mubr.f32.mxu0 0.0
      %4103 = vmatmul.mubr.f32.gmra.mxu0 %v3922
      %v4104 = vpop.f32.mrf.mxu0
      %v4105 = vadd.f32 0.0, %v4104
      %v4106 = vpop.f32.mrf.mxu0
      %4107 = vmatprep.mubr.f32.mxu0 0.0
      %4108 = vmatmul.mubr.f32.gmra.mxu0 %v3925
      %v4109 = vpop.f32.mrf.mxu0
      %v4110 = vadd.f32 0.0, %v4109
      %v4111 = vpop.f32.mrf.mxu0
      %4112 = vmatprep.mubr.f32.mxu0 0.0
      %4113 = vmatmul.mubr.f32.gmra.mxu0 %v3928
      %v4114 = vpop.f32.mrf.mxu0
      %v4115 = vadd.f32 0.0, %v4114
      %v4116 = vpop.f32.mrf.mxu0
      %4117 = vmatprep.mubr.f32.mxu0 0.0
      %4118 = vmatmul.mubr.f32.gmra.mxu0 %v3931
      %v4119 = vpop.f32.mrf.mxu0
      %v4120 = vadd.f32 0.0, %v4119
      %v4121 = vpop.f32.mrf.mxu0
      %4122 = vmatprep.mubr.f32.mxu0 0.0
      %4123 = vmatmul.mubr.f32.gmra.mxu0 %v3934
      %v4124 = vpop.f32.mrf.mxu0
      %v4125 = vadd.f32 0.0, %v4124
      %v4126 = vpop.f32.mrf.mxu0
      %4127 = vmatprep.mubr.f32.mxu0 0.0
      %4128 = vmatmul.mubr.f32.gmra.mxu0 %v3937
      %v4129 = vpop.f32.mrf.mxu0
      %v4130 = vadd.f32 0.0, %v4129
      %v4131 = vpop.f32.mrf.mxu0
      %4132 = vmatprep.mubr.f32.mxu0 0.0
      %4133 = vmatmul.mubr.f32.gmra.mxu0 %v3940
      %v4134 = vpop.f32.mrf.mxu0
      %v4135 = vadd.f32 0.0, %v4134
      %v4136 = vpop.f32.mrf.mxu0
      %4137 = vmatprep.mubr.f32.mxu0 0.0
      %4138 = vmatmul.mubr.f32.gmra.mxu0 %v3943
      %v4139 = vpop.f32.mrf.mxu0
      %v4140 = vadd.f32 0.0, %v4139
      %v4141 = vpop.f32.mrf.mxu0
      %4142 = vmatprep.mubr.f32.mxu0 0.0
      %4143 = vmatmul.mubr.f32.gmra.mxu0 %v3946
      %v4144 = vpop.f32.mrf.mxu0
      %v4145 = vadd.f32 0.0, %v4144
      %v4146 = vpop.f32.mrf.mxu0
      %4147 = vmatprep.mubr.f32.mxu0 0.0
      %4148 = vmatmul.mubr.f32.gmra.mxu0 %v3949
      %v4149 = vpop.f32.mrf.mxu0
      %v4150 = vadd.f32 0.0, %v4149
      %v4151 = vpop.f32.mrf.mxu0
      %4152 = vmatprep.mubr.f32.mxu0 0.0
      %4153 = vmatmul.mubr.f32.gmra.mxu0 %v3952
      %v4154 = vpop.f32.mrf.mxu0
      %v4155 = vadd.f32 0.0, %v4154
      %v4156 = vpop.f32.mrf.mxu0
      %4157 = vmatprep.mubr.f32.mxu0 0.0
      %4158 = vmatmul.mubr.f32.gmra.mxu0 %v3955
      %v4159 = vpop.f32.mrf.mxu0
      %v4160 = vadd.f32 0.0, %v4159
      %v4161 = vpop.f32.mrf.mxu0
      %4162 = vmatprep.mubr.f32.mxu0 0.0
      %4163 = vmatmul.mubr.f32.gmra.mxu0 %v3958
      %v4164 = vpop.f32.mrf.mxu0
      %v4165 = vadd.f32 0.0, %v4164
      %v4166 = vpop.f32.mrf.mxu0
      %4167 = vmatprep.mubr.f32.mxu0 0.0
      %4168 = vmatmul.mubr.f32.gmra.mxu0 %v3961
      %v4169 = vpop.f32.mrf.mxu0
      %v4170 = vadd.f32 0.0, %v4169
      %v4171 = vpop.f32.mrf.mxu0
      %4172 = vmatprep.mubr.f32.mxu0 0.0
      %4173 = vmatmul.mubr.f32.gmra.mxu0 %v3964
      %v4174 = vpop.f32.mrf.mxu0
      %v4175 = vadd.f32 0.0, %v4174
      %v4176 = vpop.f32.mrf.mxu0
      %4177 = vmatprep.mubr.f32.mxu0 0.0
      %4178 = vmatmul.mubr.f32.gmra.mxu0 %v3967
      %v4179 = vpop.f32.mrf.mxu0
      %v4180 = vadd.f32 0.0, %v4179
      %v4181 = vpop.f32.mrf.mxu0
      %4182 = vmatprep.mubr.f32.mxu0 0.0
      %4183 = vmatmul.mubr.f32.gmra.mxu0 %v3970
      %v4184 = vpop.f32.mrf.mxu0
      %v4185 = vadd.f32 0.0, %v4184
      %v4186 = vpop.f32.mrf.mxu0
      %4187 = vmatprep.mubr.f32.mxu0 0.0
      %4188 = vmatmul.mubr.f32.gmra.mxu0 %v3973
      %v4189 = vpop.f32.mrf.mxu0
      %v4190 = vadd.f32 0.0, %v4189
      %v4191 = vpop.f32.mrf.mxu0
      %4192 = vmatprep.mubr.f32.mxu0 0.0
      %4193 = vmatmul.mubr.f32.gmra.mxu0 %v3976
      %v4194 = vpop.f32.mrf.mxu0
      %v4195 = vadd.f32 0.0, %v4194
      %v4196 = vpop.f32.mrf.mxu0
      %4197 = vmatprep.mubr.f32.mxu0 0.0
      %4198 = vmatmul.mubr.f32.gmra.mxu0 %v3979
      %v4199 = vpop.f32.mrf.mxu0
      %v4200 = vadd.f32 0.0, %v4199
      %v4201 = vpop.f32.mrf.mxu0
      %4202 = vmatprep.mubr.f32.mxu0 0.0
      %4203 = vmatmul.mubr.f32.gmra.mxu0 %v3982
      %v4204 = vpop.f32.mrf.mxu0
      %v4205 = vadd.f32 0.0, %v4204
      %v4206 = vpop.f32.mrf.mxu0
      %4207 = vmatprep.mubr.f32.mxu0 0.0
      %4208 = vmatmul.mubr.f32.gmra.mxu0 %v3985
      %v4209 = vpop.f32.mrf.mxu0
      %v4210 = vadd.f32 0.0, %v4209
      %v4211 = vpop.f32.mrf.mxu0
      %4212 = vmatprep.mubr.f32.mxu0 0.0
      %4213 = vmatmul.mubr.f32.gmra.mxu0 %v3988
      %v4214 = vpop.f32.mrf.mxu0
      %v4215 = vadd.f32 0.0, %v4214
      %v4216 = vpop.f32.mrf.mxu0
      %4217 = vdwg.mxu0
      %v4218 = vadd.f32 %v3827, %v4060
      %v4219 = vadd.f32 %v3828, %v4065
      %v4220 = vadd.f32 %v3829, %v4070
      %v4221 = vadd.f32 %v3830, %v4075
      %v4222 = vadd.f32 %v3831, %v4080
      %v4223 = vadd.f32 %v3832, %v4085
      %v4224 = vadd.f32 %v3833, %v4090
      %v4225 = vadd.f32 %v3834, %v4095
      %v4226 = vadd.f32 %v3835, %v4100
      %v4227 = vadd.f32 %v3836, %v4105
      %v4228 = vadd.f32 %v3837, %v4110
      %v4229 = vadd.f32 %v3838, %v4115
      %v4230 = vadd.f32 %v3839, %v4120
      %v4231 = vadd.f32 %v3840, %v4125
      %v4232 = vadd.f32 %v3841, %v4130
      %v4233 = vadd.f32 %v3842, %v4135
      %v4234 = vadd.f32 %v3843, %v4140
      %v4235 = vadd.f32 %v3844, %v4145
      %v4236 = vadd.f32 %v3845, %v4150
      %v4237 = vadd.f32 %v3846, %v4155
      %v4238 = vadd.f32 %v3847, %v4160
      %v4239 = vadd.f32 %v3848, %v4165
      %v4240 = vadd.f32 %v3849, %v4170
      %v4241 = vadd.f32 %v3850, %v4175
      %v4242 = vadd.f32 %v3851, %v4180
      %v4243 = vadd.f32 %v3852, %v4185
      %v4244 = vadd.f32 %v3853, %v4190
      %v4245 = vadd.f32 %v3854, %v4195
      %v4246 = vadd.f32 %v3855, %v4200
      %v4247 = vadd.f32 %v3856, %v4205
      %v4248 = vadd.f32 %v3857, %v4210
      %v4249 = vadd.f32 %v3858, %v4215
      %v4250 = vld [vmem:[%s3859 + $0x1] sm:$0xff]
      %v4251 = vld [vmem:[%s3859 + $0x9] sm:$0xff]
      %v4252 = vld [vmem:[%s3859 + $0x19] sm:$0xff]
      %v4253 = vld [vmem:[%s3859 + $0x21] sm:$0xff]
      %v4254 = vld [vmem:[%s3859 + $0x31] sm:$0xff]
      %v4255 = vld [vmem:[%s3859 + $0x39] sm:$0xff]
      %v4256 = vld [vmem:[%s3859 + $0x49] sm:$0xff]
      %v4257 = vld [vmem:[%s3859 + $0x51] sm:$0xff]
      %v4258 = vld [vmem:[%s3859 + $0x61] sm:$0xff]
      %v4259 = vld [vmem:[%s3859 + $0x69] sm:$0xff]
      %v4260 = vld [vmem:[%s3859 + $0x79] sm:$0xff]
      %v4261 = vld [vmem:[%s3859 + $0x81] sm:$0xff]
      %v4262 = vld [vmem:[%s3859 + $0x91] sm:$0xff]
      %v4263 = vld [vmem:[%s3859 + $0x99] sm:$0xff]
      %v4264 = vld [vmem:[%s3859 + $0xa9] sm:$0xff]
      %v4265 = vld [vmem:[%s3859 + $0xb1] sm:$0xff]
      %v4266 = vld [vmem:[%s3859 + $0xc1] sm:$0xff]
      %v4267 = vld [vmem:[%s3859 + $0xc9] sm:$0xff]
      %v4268 = vld [vmem:[%s3859 + $0xd9] sm:$0xff]
      %v4269 = vld [vmem:[%s3859 + $0xe1] sm:$0xff]
      %v4270 = vld [vmem:[%s3859 + $0xf1] sm:$0xff]
      %v4271 = vld [vmem:[%s3859 + $0xf9] sm:$0xff]
      %v4272 = vld [vmem:[%s3859 + $0x109] sm:$0xff]
      %v4273 = vld [vmem:[%s3859 + $0x111] sm:$0xff]
      %v4274 = vld [vmem:[%s3859 + $0x121] sm:$0xff]
      %v4275 = vld [vmem:[%s3859 + $0x129] sm:$0xff]
      %v4276 = vld [vmem:[%s3859 + $0x139] sm:$0xff]
      %v4277 = vld [vmem:[%s3859 + $0x141] sm:$0xff]
      %v4278 = vld [vmem:[%s3859 + $0x151] sm:$0xff]
      %v4279 = vld [vmem:[%s3859 + $0x159] sm:$0xff]
      %v4280 = vld [vmem:[%s3859 + $0x169] sm:$0xff]
      %v4281 = vld [vmem:[%s3859 + $0x171] sm:$0xff]
      %s4282 = scalar_lea.vmem %s3, 28
      %v4283 = vld [vmem:[%s4282] sm:$0xf]
      %v4285 = vsel %vm1455, %v4250, 0
      %v4288 = vsel %vm1455, %v4251, 0
      %v4291 = vsel %vm1455, %v4252, 0
      %v4294 = vsel %vm1455, %v4253, 0
      %v4297 = vsel %vm1455, %v4254, 0
      %v4300 = vsel %vm1455, %v4255, 0
      %v4303 = vsel %vm1455, %v4256, 0
      %v4306 = vsel %vm1455, %v4257, 0
      %v4309 = vsel %vm1455, %v4258, 0
      %v4312 = vsel %vm1455, %v4259, 0
      %v4315 = vsel %vm1455, %v4260, 0
      %v4318 = vsel %vm1455, %v4261, 0
      %v4321 = vsel %vm1455, %v4262, 0
      %v4324 = vsel %vm1455, %v4263, 0
      %v4327 = vsel %vm1455, %v4264, 0
      %v4330 = vsel %vm1455, %v4265, 0
      %v4333 = vsel %vm1455, %v4266, 0
      %v4336 = vsel %vm1455, %v4267, 0
      %v4339 = vsel %vm1455, %v4268, 0
      %v4342 = vsel %vm1455, %v4269, 0
      %v4345 = vsel %vm1455, %v4270, 0
      %v4348 = vsel %vm1455, %v4271, 0
      %v4351 = vsel %vm1455, %v4272, 0
      %v4354 = vsel %vm1455, %v4273, 0
      %v4357 = vsel %vm1455, %v4274, 0
      %v4360 = vsel %vm1455, %v4275, 0
      %v4363 = vsel %vm1455, %v4276, 0
      %v4366 = vsel %vm1455, %v4277, 0
      %v4369 = vsel %vm1455, %v4278, 0
      %v4372 = vsel %vm1455, %v4279, 0
      %v4375 = vsel %vm1455, %v4280, 0
      %v4378 = vsel %vm1455, %v4281, 0
      %v4381 = vsel %vm1647, %v4283, 0
      %4383 = vmatprep.subr.mxu0 0.0
      %4384 = vmatpush1.msra.mxu0 0.0
      %4385 = vmatprep.subr.mxu0 0.0
      %4386 = vmatpush1.msra.mxu0 0.0
      %4387 = vmatprep.subr.mxu0 0.0
      %4388 = vmatpush1.msra.mxu0 0.0
      %4389 = vmatprep.subr.mxu0 0.0
      %4390 = vmatpush1.msra.mxu0 0.0
      %4391 = vmatprep.subr.mxu0 0.0
      %4392 = vmatpush1.msra.mxu0 0.0
      %4393 = vmatprep.subr.mxu0 0.0
      %4394 = vmatpush1.msra.mxu0 0.0
      %4395 = vmatprep.subr.mxu0 0.0
      %4396 = vmatpush1.msra.mxu0 0.0
      %4397 = vmatprep.subr.mxu0 0.0
      %4398 = vmatpush1.msra.mxu0 0.0
      %4399 = vmatprep.subr.mxu0 0.0
      %4400 = vmatpush1.msra.mxu0 0.0
      %4401 = vmatprep.subr.mxu0 0.0
      %4402 = vmatpush1.msra.mxu0 0.0
      %4403 = vmatprep.subr.mxu0 0.0
      %4404 = vmatpush1.msra.mxu0 0.0
      %4405 = vmatprep.subr.mxu0 0.0
      %4406 = vmatpush1.msra.mxu0 0.0
      %4407 = vmatprep.subr.mxu0 0.0
      %4408 = vmatpush1.msra.mxu0 0.0
      %4409 = vmatprep.subr.mxu0 0.0
      %4410 = vmatpush1.msra.mxu0 0.0
      %4411 = vmatprep.subr.mxu0 0.0
      %4412 = vmatpush1.msra.mxu0 0.0
      %4413 = vmatprep.subr.mxu0 0.0
      %4414 = vmatpush1.msra.mxu0 %v4381
      %4415 = vmatprep.subr.mxu0 0.0
      %4416 = vmatpush2.msra.mxu0 0.0
      %4417 = vmatprep.subr.mxu0 0.0
      %4418 = vmatpush2.msra.mxu0 0.0
      %4419 = vmatprep.subr.mxu0 0.0
      %4420 = vmatpush2.msra.mxu0 0.0
      %4421 = vmatprep.subr.mxu0 0.0
      %4422 = vmatpush2.msra.mxu0 0.0
      %4423 = vmatprep.subr.mxu0 0.0
      %4424 = vmatpush2.msra.mxu0 0.0
      %4425 = vmatprep.subr.mxu0 0.0
      %4426 = vmatpush2.msra.mxu0 0.0
      %4427 = vmatprep.subr.mxu0 0.0
      %4428 = vmatpush2.msra.mxu0 0.0
      %4429 = vmatprep.subr.mxu0 0.0
      %4430 = vmatpush2.msra.mxu0 0.0
      %4431 = vmatprep.subr.mxu0 0.0
      %4432 = vmatpush2.msra.mxu0 0.0
      %4433 = vmatprep.subr.mxu0 0.0
      %4434 = vmatpush2.msra.mxu0 0.0
      %4435 = vmatprep.subr.mxu0 0.0
      %4436 = vmatpush2.msra.mxu0 0.0
      %4437 = vmatprep.subr.mxu0 0.0
      %4438 = vmatpush2.msra.mxu0 0.0
      %4439 = vmatprep.subr.mxu0 0.0
      %4440 = vmatpush2.msra.mxu0 0.0
      %4441 = vmatprep.subr.mxu0 0.0
      %4442 = vmatpush2.msra.mxu0 0.0
      %4443 = vmatprep.subr.mxu0 0.0
      %4444 = vmatpush2.msra.mxu0 0.0
      %4445 = vmatprep.subr.mxu0 0.0
      %4446 = vmatpush2.msra.mxu0 0.0
      %4447 = vmatprep.mubr.f32.mxu0 0.0
      %4448 = vmatmul.mubr.f32.gmra.mxu0 %v4285
      %v4449 = vpop.f32.mrf.mxu0
      %v4450 = vadd.f32 0.0, %v4449
      %v4451 = vpop.f32.mrf.mxu0
      %4452 = vmatprep.mubr.f32.mxu0 0.0
      %4453 = vmatmul.mubr.f32.gmra.mxu0 %v4288
      %v4454 = vpop.f32.mrf.mxu0
      %v4455 = vadd.f32 0.0, %v4454
      %v4456 = vpop.f32.mrf.mxu0
      %4457 = vmatprep.mubr.f32.mxu0 0.0
      %4458 = vmatmul.mubr.f32.gmra.mxu0 %v4291
      %v4459 = vpop.f32.mrf.mxu0
      %v4460 = vadd.f32 0.0, %v4459
      %v4461 = vpop.f32.mrf.mxu0
      %4462 = vmatprep.mubr.f32.mxu0 0.0
      %4463 = vmatmul.mubr.f32.gmra.mxu0 %v4294
      %v4464 = vpop.f32.mrf.mxu0
      %v4465 = vadd.f32 0.0, %v4464
      %v4466 = vpop.f32.mrf.mxu0
      %4467 = vmatprep.mubr.f32.mxu0 0.0
      %4468 = vmatmul.mubr.f32.gmra.mxu0 %v4297
      %v4469 = vpop.f32.mrf.mxu0
      %v4470 = vadd.f32 0.0, %v4469
      %v4471 = vpop.f32.mrf.mxu0
      %4472 = vmatprep.mubr.f32.mxu0 0.0
      %4473 = vmatmul.mubr.f32.gmra.mxu0 %v4300
      %v4474 = vpop.f32.mrf.mxu0
      %v4475 = vadd.f32 0.0, %v4474
      %v4476 = vpop.f32.mrf.mxu0
      %4477 = vmatprep.mubr.f32.mxu0 0.0
      %4478 = vmatmul.mubr.f32.gmra.mxu0 %v4303
      %v4479 = vpop.f32.mrf.mxu0
      %v4480 = vadd.f32 0.0, %v4479
      %v4481 = vpop.f32.mrf.mxu0
      %4482 = vmatprep.mubr.f32.mxu0 0.0
      %4483 = vmatmul.mubr.f32.gmra.mxu0 %v4306
      %v4484 = vpop.f32.mrf.mxu0
      %v4485 = vadd.f32 0.0, %v4484
      %v4486 = vpop.f32.mrf.mxu0
      %4487 = vmatprep.mubr.f32.mxu0 0.0
      %4488 = vmatmul.mubr.f32.gmra.mxu0 %v4309
      %v4489 = vpop.f32.mrf.mxu0
      %v4490 = vadd.f32 0.0, %v4489
      %v4491 = vpop.f32.mrf.mxu0
      %4492 = vmatprep.mubr.f32.mxu0 0.0
      %4493 = vmatmul.mubr.f32.gmra.mxu0 %v4312
      %v4494 = vpop.f32.mrf.mxu0
      %v4495 = vadd.f32 0.0, %v4494
      %v4496 = vpop.f32.mrf.mxu0
      %4497 = vmatprep.mubr.f32.mxu0 0.0
      %4498 = vmatmul.mubr.f32.gmra.mxu0 %v4315
      %v4499 = vpop.f32.mrf.mxu0
      %v4500 = vadd.f32 0.0, %v4499
      %v4501 = vpop.f32.mrf.mxu0
      %4502 = vmatprep.mubr.f32.mxu0 0.0
      %4503 = vmatmul.mubr.f32.gmra.mxu0 %v4318
      %v4504 = vpop.f32.mrf.mxu0
      %v4505 = vadd.f32 0.0, %v4504
      %v4506 = vpop.f32.mrf.mxu0
      %4507 = vmatprep.mubr.f32.mxu0 0.0
      %4508 = vmatmul.mubr.f32.gmra.mxu0 %v4321
      %v4509 = vpop.f32.mrf.mxu0
      %v4510 = vadd.f32 0.0, %v4509
      %v4511 = vpop.f32.mrf.mxu0
      %4512 = vmatprep.mubr.f32.mxu0 0.0
      %4513 = vmatmul.mubr.f32.gmra.mxu0 %v4324
      %v4514 = vpop.f32.mrf.mxu0
      %v4515 = vadd.f32 0.0, %v4514
      %v4516 = vpop.f32.mrf.mxu0
      %4517 = vmatprep.mubr.f32.mxu0 0.0
      %4518 = vmatmul.mubr.f32.gmra.mxu0 %v4327
      %v4519 = vpop.f32.mrf.mxu0
      %v4520 = vadd.f32 0.0, %v4519
      %v4521 = vpop.f32.mrf.mxu0
      %4522 = vmatprep.mubr.f32.mxu0 0.0
      %4523 = vmatmul.mubr.f32.gmra.mxu0 %v4330
      %v4524 = vpop.f32.mrf.mxu0
      %v4525 = vadd.f32 0.0, %v4524
      %v4526 = vpop.f32.mrf.mxu0
      %4527 = vmatprep.mubr.f32.mxu0 0.0
      %4528 = vmatmul.mubr.f32.gmra.mxu0 %v4333
      %v4529 = vpop.f32.mrf.mxu0
      %v4530 = vadd.f32 0.0, %v4529
      %v4531 = vpop.f32.mrf.mxu0
      %4532 = vmatprep.mubr.f32.mxu0 0.0
      %4533 = vmatmul.mubr.f32.gmra.mxu0 %v4336
      %v4534 = vpop.f32.mrf.mxu0
      %v4535 = vadd.f32 0.0, %v4534
      %v4536 = vpop.f32.mrf.mxu0
      %4537 = vmatprep.mubr.f32.mxu0 0.0
      %4538 = vmatmul.mubr.f32.gmra.mxu0 %v4339
      %v4539 = vpop.f32.mrf.mxu0
      %v4540 = vadd.f32 0.0, %v4539
      %v4541 = vpop.f32.mrf.mxu0
      %4542 = vmatprep.mubr.f32.mxu0 0.0
      %4543 = vmatmul.mubr.f32.gmra.mxu0 %v4342
      %v4544 = vpop.f32.mrf.mxu0
      %v4545 = vadd.f32 0.0, %v4544
      %v4546 = vpop.f32.mrf.mxu0
      %4547 = vmatprep.mubr.f32.mxu0 0.0
      %4548 = vmatmul.mubr.f32.gmra.mxu0 %v4345
      %v4549 = vpop.f32.mrf.mxu0
      %v4550 = vadd.f32 0.0, %v4549
      %v4551 = vpop.f32.mrf.mxu0
      %4552 = vmatprep.mubr.f32.mxu0 0.0
      %4553 = vmatmul.mubr.f32.gmra.mxu0 %v4348
      %v4554 = vpop.f32.mrf.mxu0
      %v4555 = vadd.f32 0.0, %v4554
      %v4556 = vpop.f32.mrf.mxu0
      %4557 = vmatprep.mubr.f32.mxu0 0.0
      %4558 = vmatmul.mubr.f32.gmra.mxu0 %v4351
      %v4559 = vpop.f32.mrf.mxu0
      %v4560 = vadd.f32 0.0, %v4559
      %v4561 = vpop.f32.mrf.mxu0
      %4562 = vmatprep.mubr.f32.mxu0 0.0
      %4563 = vmatmul.mubr.f32.gmra.mxu0 %v4354
      %v4564 = vpop.f32.mrf.mxu0
      %v4565 = vadd.f32 0.0, %v4564
      %v4566 = vpop.f32.mrf.mxu0
      %4567 = vmatprep.mubr.f32.mxu0 0.0
      %4568 = vmatmul.mubr.f32.gmra.mxu0 %v4357
      %v4569 = vpop.f32.mrf.mxu0
      %v4570 = vadd.f32 0.0, %v4569
      %v4571 = vpop.f32.mrf.mxu0
      %4572 = vmatprep.mubr.f32.mxu0 0.0
      %4573 = vmatmul.mubr.f32.gmra.mxu0 %v4360
      %v4574 = vpop.f32.mrf.mxu0
      %v4575 = vadd.f32 0.0, %v4574
      %v4576 = vpop.f32.mrf.mxu0
      %4577 = vmatprep.mubr.f32.mxu0 0.0
      %4578 = vmatmul.mubr.f32.gmra.mxu0 %v4363
      %v4579 = vpop.f32.mrf.mxu0
      %v4580 = vadd.f32 0.0, %v4579
      %v4581 = vpop.f32.mrf.mxu0
      %4582 = vmatprep.mubr.f32.mxu0 0.0
      %4583 = vmatmul.mubr.f32.gmra.mxu0 %v4366
      %v4584 = vpop.f32.mrf.mxu0
      %v4585 = vadd.f32 0.0, %v4584
      %v4586 = vpop.f32.mrf.mxu0
      %4587 = vmatprep.mubr.f32.mxu0 0.0
      %4588 = vmatmul.mubr.f32.gmra.mxu0 %v4369
      %v4589 = vpop.f32.mrf.mxu0
      %v4590 = vadd.f32 0.0, %v4589
      %v4591 = vpop.f32.mrf.mxu0
      %4592 = vmatprep.mubr.f32.mxu0 0.0
      %4593 = vmatmul.mubr.f32.gmra.mxu0 %v4372
      %v4594 = vpop.f32.mrf.mxu0
      %v4595 = vadd.f32 0.0, %v4594
      %v4596 = vpop.f32.mrf.mxu0
      %4597 = vmatprep.mubr.f32.mxu0 0.0
      %4598 = vmatmul.mubr.f32.gmra.mxu0 %v4375
      %v4599 = vpop.f32.mrf.mxu0
      %v4600 = vadd.f32 0.0, %v4599
      %v4601 = vpop.f32.mrf.mxu0
      %4602 = vmatprep.mubr.f32.mxu0 0.0
      %4603 = vmatmul.mubr.f32.gmra.mxu0 %v4378
      %v4604 = vpop.f32.mrf.mxu0
      %v4605 = vadd.f32 0.0, %v4604
      %v4606 = vpop.f32.mrf.mxu0
      %4607 = vdwg.mxu0
      %v4608 = vadd.f32 %v4218, %v4450
      %v4609 = vadd.f32 %v4219, %v4455
      %v4610 = vadd.f32 %v4220, %v4460
      %v4611 = vadd.f32 %v4221, %v4465
      %v4612 = vadd.f32 %v4222, %v4470
      %v4613 = vadd.f32 %v4223, %v4475
      %v4614 = vadd.f32 %v4224, %v4480
      %v4615 = vadd.f32 %v4225, %v4485
      %v4616 = vadd.f32 %v4226, %v4490
      %v4617 = vadd.f32 %v4227, %v4495
      %v4618 = vadd.f32 %v4228, %v4500
      %v4619 = vadd.f32 %v4229, %v4505
      %v4620 = vadd.f32 %v4230, %v4510
      %v4621 = vadd.f32 %v4231, %v4515
      %v4622 = vadd.f32 %v4232, %v4520
      %v4623 = vadd.f32 %v4233, %v4525
      %v4624 = vadd.f32 %v4234, %v4530
      %v4625 = vadd.f32 %v4235, %v4535
      %v4626 = vadd.f32 %v4236, %v4540
      %v4627 = vadd.f32 %v4237, %v4545
      %v4628 = vadd.f32 %v4238, %v4550
      %v4629 = vadd.f32 %v4239, %v4555
      %v4630 = vadd.f32 %v4240, %v4560
      %v4631 = vadd.f32 %v4241, %v4565
      %v4632 = vadd.f32 %v4242, %v4570
      %v4633 = vadd.f32 %v4243, %v4575
      %v4634 = vadd.f32 %v4244, %v4580
      %v4635 = vadd.f32 %v4245, %v4585
      %v4636 = vadd.f32 %v4246, %v4590
      %v4637 = vadd.f32 %v4247, %v4595
      %v4638 = vadd.f32 %v4248, %v4600
      %v4639 = vadd.f32 %v4249, %v4605
      %v4640 = vld [vmem:[%s3859 + $0x2] sm:$0xff]
      %v4641 = vld [vmem:[%s3859 + $0xa] sm:$0xff]
      %v4642 = vld [vmem:[%s3859 + $0x1a] sm:$0xff]
      %v4643 = vld [vmem:[%s3859 + $0x22] sm:$0xff]
      %v4644 = vld [vmem:[%s3859 + $0x32] sm:$0xff]
      %v4645 = vld [vmem:[%s3859 + $0x3a] sm:$0xff]
      %v4646 = vld [vmem:[%s3859 + $0x4a] sm:$0xff]
      %v4647 = vld [vmem:[%s3859 + $0x52] sm:$0xff]
      %v4648 = vld [vmem:[%s3859 + $0x62] sm:$0xff]
      %v4649 = vld [vmem:[%s3859 + $0x6a] sm:$0xff]
      %v4650 = vld [vmem:[%s3859 + $0x7a] sm:$0xff]
      %v4651 = vld [vmem:[%s3859 + $0x82] sm:$0xff]
      %v4652 = vld [vmem:[%s3859 + $0x92] sm:$0xff]
      %v4653 = vld [vmem:[%s3859 + $0x9a] sm:$0xff]
      %v4654 = vld [vmem:[%s3859 + $0xaa] sm:$0xff]
      %v4655 = vld [vmem:[%s3859 + $0xb2] sm:$0xff]
      %v4656 = vld [vmem:[%s3859 + $0xc2] sm:$0xff]
      %v4657 = vld [vmem:[%s3859 + $0xca] sm:$0xff]
      %v4658 = vld [vmem:[%s3859 + $0xda] sm:$0xff]
      %v4659 = vld [vmem:[%s3859 + $0xe2] sm:$0xff]
      %v4660 = vld [vmem:[%s3859 + $0xf2] sm:$0xff]
      %v4661 = vld [vmem:[%s3859 + $0xfa] sm:$0xff]
      %v4662 = vld [vmem:[%s3859 + $0x10a] sm:$0xff]
      %v4663 = vld [vmem:[%s3859 + $0x112] sm:$0xff]
      %v4664 = vld [vmem:[%s3859 + $0x122] sm:$0xff]
      %v4665 = vld [vmem:[%s3859 + $0x12a] sm:$0xff]
      %v4666 = vld [vmem:[%s3859 + $0x13a] sm:$0xff]
      %v4667 = vld [vmem:[%s3859 + $0x142] sm:$0xff]
      %v4668 = vld [vmem:[%s3859 + $0x152] sm:$0xff]
      %v4669 = vld [vmem:[%s3859 + $0x15a] sm:$0xff]
      %v4670 = vld [vmem:[%s3859 + $0x16a] sm:$0xff]
      %v4671 = vld [vmem:[%s3859 + $0x172] sm:$0xff]
      %s4672 = scalar_lea.vmem %s3, 32
      %v4673 = vld [vmem:[%s4672] sm:$0xf]
      %v4675 = vsel %vm1455, %v4640, 0
      %v4678 = vsel %vm1455, %v4641, 0
      %v4681 = vsel %vm1455, %v4642, 0
      %v4684 = vsel %vm1455, %v4643, 0
      %v4687 = vsel %vm1455, %v4644, 0
      %v4690 = vsel %vm1455, %v4645, 0
      %v4693 = vsel %vm1455, %v4646, 0
      %v4696 = vsel %vm1455, %v4647, 0
      %v4699 = vsel %vm1455, %v4648, 0
      %v4702 = vsel %vm1455, %v4649, 0
      %v4705 = vsel %vm1455, %v4650, 0
      %v4708 = vsel %vm1455, %v4651, 0
      %v4711 = vsel %vm1455, %v4652, 0
      %v4714 = vsel %vm1455, %v4653, 0
      %v4717 = vsel %vm1455, %v4654, 0
      %v4720 = vsel %vm1455, %v4655, 0
      %v4723 = vsel %vm1455, %v4656, 0
      %v4726 = vsel %vm1455, %v4657, 0
      %v4729 = vsel %vm1455, %v4658, 0
      %v4732 = vsel %vm1455, %v4659, 0
      %v4735 = vsel %vm1455, %v4660, 0
      %v4738 = vsel %vm1455, %v4661, 0
      %v4741 = vsel %vm1455, %v4662, 0
      %v4744 = vsel %vm1455, %v4663, 0
      %v4747 = vsel %vm1455, %v4664, 0
      %v4750 = vsel %vm1455, %v4665, 0
      %v4753 = vsel %vm1455, %v4666, 0
      %v4756 = vsel %vm1455, %v4667, 0
      %v4759 = vsel %vm1455, %v4668, 0
      %v4762 = vsel %vm1455, %v4669, 0
      %v4765 = vsel %vm1455, %v4670, 0
      %v4768 = vsel %vm1455, %v4671, 0
      %v4771 = vsel %vm1647, %v4673, 0
      %4773 = vmatprep.subr.mxu0 0.0
      %4774 = vmatpush1.msra.mxu0 0.0
      %4775 = vmatprep.subr.mxu0 0.0
      %4776 = vmatpush1.msra.mxu0 0.0
      %4777 = vmatprep.subr.mxu0 0.0
      %4778 = vmatpush1.msra.mxu0 0.0
      %4779 = vmatprep.subr.mxu0 0.0
      %4780 = vmatpush1.msra.mxu0 0.0
      %4781 = vmatprep.subr.mxu0 0.0
      %4782 = vmatpush1.msra.mxu0 0.0
      %4783 = vmatprep.subr.mxu0 0.0
      %4784 = vmatpush1.msra.mxu0 0.0
      %4785 = vmatprep.subr.mxu0 0.0
      %4786 = vmatpush1.msra.mxu0 0.0
      %4787 = vmatprep.subr.mxu0 0.0
      %4788 = vmatpush1.msra.mxu0 0.0
      %4789 = vmatprep.subr.mxu0 0.0
      %4790 = vmatpush1.msra.mxu0 0.0
      %4791 = vmatprep.subr.mxu0 0.0
      %4792 = vmatpush1.msra.mxu0 0.0
      %4793 = vmatprep.subr.mxu0 0.0
      %4794 = vmatpush1.msra.mxu0 0.0
      %4795 = vmatprep.subr.mxu0 0.0
      %4796 = vmatpush1.msra.mxu0 0.0
      %4797 = vmatprep.subr.mxu0 0.0
      %4798 = vmatpush1.msra.mxu0 0.0
      %4799 = vmatprep.subr.mxu0 0.0
      %4800 = vmatpush1.msra.mxu0 0.0
      %4801 = vmatprep.subr.mxu0 0.0
      %4802 = vmatpush1.msra.mxu0 0.0
      %4803 = vmatprep.subr.mxu0 0.0
      %4804 = vmatpush1.msra.mxu0 %v4771
      %4805 = vmatprep.subr.mxu0 0.0
      %4806 = vmatpush2.msra.mxu0 0.0
      %4807 = vmatprep.subr.mxu0 0.0
      %4808 = vmatpush2.msra.mxu0 0.0
      %4809 = vmatprep.subr.mxu0 0.0
      %4810 = vmatpush2.msra.mxu0 0.0
      %4811 = vmatprep.subr.mxu0 0.0
      %4812 = vmatpush2.msra.mxu0 0.0
      %4813 = vmatprep.subr.mxu0 0.0
      %4814 = vmatpush2.msra.mxu0 0.0
      %4815 = vmatprep.subr.mxu0 0.0
      %4816 = vmatpush2.msra.mxu0 0.0
      %4817 = vmatprep.subr.mxu0 0.0
      %4818 = vmatpush2.msra.mxu0 0.0
      %4819 = vmatprep.subr.mxu0 0.0
      %4820 = vmatpush2.msra.mxu0 0.0
      %4821 = vmatprep.subr.mxu0 0.0
      %4822 = vmatpush2.msra.mxu0 0.0
      %4823 = vmatprep.subr.mxu0 0.0
      %4824 = vmatpush2.msra.mxu0 0.0
      %4825 = vmatprep.subr.mxu0 0.0
      %4826 = vmatpush2.msra.mxu0 0.0
      %4827 = vmatprep.subr.mxu0 0.0
      %4828 = vmatpush2.msra.mxu0 0.0
      %4829 = vmatprep.subr.mxu0 0.0
      %4830 = vmatpush2.msra.mxu0 0.0
      %4831 = vmatprep.subr.mxu0 0.0
      %4832 = vmatpush2.msra.mxu0 0.0
      %4833 = vmatprep.subr.mxu0 0.0
      %4834 = vmatpush2.msra.mxu0 0.0
      %4835 = vmatprep.subr.mxu0 0.0
      %4836 = vmatpush2.msra.mxu0 0.0
      %4837 = vmatprep.mubr.f32.mxu0 0.0
      %4838 = vmatmul.mubr.f32.gmra.mxu0 %v4675
      %v4839 = vpop.f32.mrf.mxu0
      %v4840 = vadd.f32 0.0, %v4839
      %v4841 = vpop.f32.mrf.mxu0
      %4842 = vmatprep.mubr.f32.mxu0 0.0
      %4843 = vmatmul.mubr.f32.gmra.mxu0 %v4678
      %v4844 = vpop.f32.mrf.mxu0
      %v4845 = vadd.f32 0.0, %v4844
      %v4846 = vpop.f32.mrf.mxu0
      %4847 = vmatprep.mubr.f32.mxu0 0.0
      %4848 = vmatmul.mubr.f32.gmra.mxu0 %v4681
      %v4849 = vpop.f32.mrf.mxu0
      %v4850 = vadd.f32 0.0, %v4849
      %v4851 = vpop.f32.mrf.mxu0
      %4852 = vmatprep.mubr.f32.mxu0 0.0
      %4853 = vmatmul.mubr.f32.gmra.mxu0 %v4684
      %v4854 = vpop.f32.mrf.mxu0
      %v4855 = vadd.f32 0.0, %v4854
      %v4856 = vpop.f32.mrf.mxu0
      %4857 = vmatprep.mubr.f32.mxu0 0.0
      %4858 = vmatmul.mubr.f32.gmra.mxu0 %v4687
      %v4859 = vpop.f32.mrf.mxu0
      %v4860 = vadd.f32 0.0, %v4859
      %v4861 = vpop.f32.mrf.mxu0
      %4862 = vmatprep.mubr.f32.mxu0 0.0
      %4863 = vmatmul.mubr.f32.gmra.mxu0 %v4690
      %v4864 = vpop.f32.mrf.mxu0
      %v4865 = vadd.f32 0.0, %v4864
      %v4866 = vpop.f32.mrf.mxu0
      %4867 = vmatprep.mubr.f32.mxu0 0.0
      %4868 = vmatmul.mubr.f32.gmra.mxu0 %v4693
      %v4869 = vpop.f32.mrf.mxu0
      %v4870 = vadd.f32 0.0, %v4869
      %v4871 = vpop.f32.mrf.mxu0
      %4872 = vmatprep.mubr.f32.mxu0 0.0
      %4873 = vmatmul.mubr.f32.gmra.mxu0 %v4696
      %v4874 = vpop.f32.mrf.mxu0
      %v4875 = vadd.f32 0.0, %v4874
      %v4876 = vpop.f32.mrf.mxu0
      %4877 = vmatprep.mubr.f32.mxu0 0.0
      %4878 = vmatmul.mubr.f32.gmra.mxu0 %v4699
      %v4879 = vpop.f32.mrf.mxu0
      %v4880 = vadd.f32 0.0, %v4879
      %v4881 = vpop.f32.mrf.mxu0
      %4882 = vmatprep.mubr.f32.mxu0 0.0
      %4883 = vmatmul.mubr.f32.gmra.mxu0 %v4702
      %v4884 = vpop.f32.mrf.mxu0
      %v4885 = vadd.f32 0.0, %v4884
      %v4886 = vpop.f32.mrf.mxu0
      %4887 = vmatprep.mubr.f32.mxu0 0.0
      %4888 = vmatmul.mubr.f32.gmra.mxu0 %v4705
      %v4889 = vpop.f32.mrf.mxu0
      %v4890 = vadd.f32 0.0, %v4889
      %v4891 = vpop.f32.mrf.mxu0
      %4892 = vmatprep.mubr.f32.mxu0 0.0
      %4893 = vmatmul.mubr.f32.gmra.mxu0 %v4708
      %v4894 = vpop.f32.mrf.mxu0
      %v4895 = vadd.f32 0.0, %v4894
      %v4896 = vpop.f32.mrf.mxu0
      %4897 = vmatprep.mubr.f32.mxu0 0.0
      %4898 = vmatmul.mubr.f32.gmra.mxu0 %v4711
      %v4899 = vpop.f32.mrf.mxu0
      %v4900 = vadd.f32 0.0, %v4899
      %v4901 = vpop.f32.mrf.mxu0
      %4902 = vmatprep.mubr.f32.mxu0 0.0
      %4903 = vmatmul.mubr.f32.gmra.mxu0 %v4714
      %v4904 = vpop.f32.mrf.mxu0
      %v4905 = vadd.f32 0.0, %v4904
      %v4906 = vpop.f32.mrf.mxu0
      %4907 = vmatprep.mubr.f32.mxu0 0.0
      %4908 = vmatmul.mubr.f32.gmra.mxu0 %v4717
      %v4909 = vpop.f32.mrf.mxu0
      %v4910 = vadd.f32 0.0, %v4909
      %v4911 = vpop.f32.mrf.mxu0
      %4912 = vmatprep.mubr.f32.mxu0 0.0
      %4913 = vmatmul.mubr.f32.gmra.mxu0 %v4720
      %v4914 = vpop.f32.mrf.mxu0
      %v4915 = vadd.f32 0.0, %v4914
      %v4916 = vpop.f32.mrf.mxu0
      %4917 = vmatprep.mubr.f32.mxu0 0.0
      %4918 = vmatmul.mubr.f32.gmra.mxu0 %v4723
      %v4919 = vpop.f32.mrf.mxu0
      %v4920 = vadd.f32 0.0, %v4919
      %v4921 = vpop.f32.mrf.mxu0
      %4922 = vmatprep.mubr.f32.mxu0 0.0
      %4923 = vmatmul.mubr.f32.gmra.mxu0 %v4726
      %v4924 = vpop.f32.mrf.mxu0
      %v4925 = vadd.f32 0.0, %v4924
      %v4926 = vpop.f32.mrf.mxu0
      %4927 = vmatprep.mubr.f32.mxu0 0.0
      %4928 = vmatmul.mubr.f32.gmra.mxu0 %v4729
      %v4929 = vpop.f32.mrf.mxu0
      %v4930 = vadd.f32 0.0, %v4929
      %v4931 = vpop.f32.mrf.mxu0
      %4932 = vmatprep.mubr.f32.mxu0 0.0
      %4933 = vmatmul.mubr.f32.gmra.mxu0 %v4732
      %v4934 = vpop.f32.mrf.mxu0
      %v4935 = vadd.f32 0.0, %v4934
      %v4936 = vpop.f32.mrf.mxu0
      %4937 = vmatprep.mubr.f32.mxu0 0.0
      %4938 = vmatmul.mubr.f32.gmra.mxu0 %v4735
      %v4939 = vpop.f32.mrf.mxu0
      %v4940 = vadd.f32 0.0, %v4939
      %v4941 = vpop.f32.mrf.mxu0
      %4942 = vmatprep.mubr.f32.mxu0 0.0
      %4943 = vmatmul.mubr.f32.gmra.mxu0 %v4738
      %v4944 = vpop.f32.mrf.mxu0
      %v4945 = vadd.f32 0.0, %v4944
      %v4946 = vpop.f32.mrf.mxu0
      %4947 = vmatprep.mubr.f32.mxu0 0.0
      %4948 = vmatmul.mubr.f32.gmra.mxu0 %v4741
      %v4949 = vpop.f32.mrf.mxu0
      %v4950 = vadd.f32 0.0, %v4949
      %v4951 = vpop.f32.mrf.mxu0
      %4952 = vmatprep.mubr.f32.mxu0 0.0
      %4953 = vmatmul.mubr.f32.gmra.mxu0 %v4744
      %v4954 = vpop.f32.mrf.mxu0
      %v4955 = vadd.f32 0.0, %v4954
      %v4956 = vpop.f32.mrf.mxu0
      %4957 = vmatprep.mubr.f32.mxu0 0.0
      %4958 = vmatmul.mubr.f32.gmra.mxu0 %v4747
      %v4959 = vpop.f32.mrf.mxu0
      %v4960 = vadd.f32 0.0, %v4959
      %v4961 = vpop.f32.mrf.mxu0
      %4962 = vmatprep.mubr.f32.mxu0 0.0
      %4963 = vmatmul.mubr.f32.gmra.mxu0 %v4750
      %v4964 = vpop.f32.mrf.mxu0
      %v4965 = vadd.f32 0.0, %v4964
      %v4966 = vpop.f32.mrf.mxu0
      %4967 = vmatprep.mubr.f32.mxu0 0.0
      %4968 = vmatmul.mubr.f32.gmra.mxu0 %v4753
      %v4969 = vpop.f32.mrf.mxu0
      %v4970 = vadd.f32 0.0, %v4969
      %v4971 = vpop.f32.mrf.mxu0
      %4972 = vmatprep.mubr.f32.mxu0 0.0
      %4973 = vmatmul.mubr.f32.gmra.mxu0 %v4756
      %v4974 = vpop.f32.mrf.mxu0
      %v4975 = vadd.f32 0.0, %v4974
      %v4976 = vpop.f32.mrf.mxu0
      %4977 = vmatprep.mubr.f32.mxu0 0.0
      %4978 = vmatmul.mubr.f32.gmra.mxu0 %v4759
      %v4979 = vpop.f32.mrf.mxu0
      %v4980 = vadd.f32 0.0, %v4979
      %v4981 = vpop.f32.mrf.mxu0
      %4982 = vmatprep.mubr.f32.mxu0 0.0
      %4983 = vmatmul.mubr.f32.gmra.mxu0 %v4762
      %v4984 = vpop.f32.mrf.mxu0
      %v4985 = vadd.f32 0.0, %v4984
      %v4986 = vpop.f32.mrf.mxu0
      %4987 = vmatprep.mubr.f32.mxu0 0.0
      %4988 = vmatmul.mubr.f32.gmra.mxu0 %v4765
      %v4989 = vpop.f32.mrf.mxu0
      %v4990 = vadd.f32 0.0, %v4989
      %v4991 = vpop.f32.mrf.mxu0
      %4992 = vmatprep.mubr.f32.mxu0 0.0
      %4993 = vmatmul.mubr.f32.gmra.mxu0 %v4768
      %v4994 = vpop.f32.mrf.mxu0
      %v4995 = vadd.f32 0.0, %v4994
      %v4996 = vpop.f32.mrf.mxu0
      %4997 = vdwg.mxu0
      %v4998 = vadd.f32 %v4608, %v4840
      %v4999 = vadd.f32 %v4609, %v4845
      %v5000 = vadd.f32 %v4610, %v4850
      %v5001 = vadd.f32 %v4611, %v4855
      %v5002 = vadd.f32 %v4612, %v4860
      %v5003 = vadd.f32 %v4613, %v4865
      %v5004 = vadd.f32 %v4614, %v4870
      %v5005 = vadd.f32 %v4615, %v4875
      %v5006 = vadd.f32 %v4616, %v4880
      %v5007 = vadd.f32 %v4617, %v4885
      %v5008 = vadd.f32 %v4618, %v4890
      %v5009 = vadd.f32 %v4619, %v4895
      %v5010 = vadd.f32 %v4620, %v4900
      %v5011 = vadd.f32 %v4621, %v4905
      %v5012 = vadd.f32 %v4622, %v4910
      %v5013 = vadd.f32 %v4623, %v4915
      %v5014 = vadd.f32 %v4624, %v4920
      %v5015 = vadd.f32 %v4625, %v4925
      %v5016 = vadd.f32 %v4626, %v4930
      %v5017 = vadd.f32 %v4627, %v4935
      %v5018 = vadd.f32 %v4628, %v4940
      %v5019 = vadd.f32 %v4629, %v4945
      %v5020 = vadd.f32 %v4630, %v4950
      %v5021 = vadd.f32 %v4631, %v4955
      %v5022 = vadd.f32 %v4632, %v4960
      %v5023 = vadd.f32 %v4633, %v4965
      %v5024 = vadd.f32 %v4634, %v4970
      %v5025 = vadd.f32 %v4635, %v4975
      %v5026 = vadd.f32 %v4636, %v4980
      %v5027 = vadd.f32 %v4637, %v4985
      %v5028 = vadd.f32 %v4638, %v4990
      %v5029 = vadd.f32 %v4639, %v4995
      %v5030 = vmax.f32 %v4998, 0.0
      %v5031 = vmax.f32 %v4999, 0.0
      %v5032 = vmax.f32 %v5000, 0.0
      %v5033 = vmax.f32 %v5001, 0.0
      %v5034 = vmax.f32 %v5002, 0.0
      %v5035 = vmax.f32 %v5003, 0.0
      %v5036 = vmax.f32 %v5004, 0.0
      %v5037 = vmax.f32 %v5005, 0.0
      %v5038 = vmax.f32 %v5006, 0.0
      %v5039 = vmax.f32 %v5007, 0.0
      %v5040 = vmax.f32 %v5008, 0.0
      %v5041 = vmax.f32 %v5009, 0.0
      %v5042 = vmax.f32 %v5010, 0.0
      %v5043 = vmax.f32 %v5011, 0.0
      %v5044 = vmax.f32 %v5012, 0.0
      %v5045 = vmax.f32 %v5013, 0.0
      %v5046 = vmax.f32 %v5014, 0.0
      %v5047 = vmax.f32 %v5015, 0.0
      %v5048 = vmax.f32 %v5016, 0.0
      %v5049 = vmax.f32 %v5017, 0.0
      %v5050 = vmax.f32 %v5018, 0.0
      %v5051 = vmax.f32 %v5019, 0.0
      %v5052 = vmax.f32 %v5020, 0.0
      %v5053 = vmax.f32 %v5021, 0.0
      %v5054 = vmax.f32 %v5022, 0.0
      %v5055 = vmax.f32 %v5023, 0.0
      %v5056 = vmax.f32 %v5024, 0.0
      %v5057 = vmax.f32 %v5025, 0.0
      %v5058 = vmax.f32 %v5026, 0.0
      %v5059 = vmax.f32 %v5027, 0.0
      %v5060 = vmax.f32 %v5028, 0.0
      %v5061 = vmax.f32 %v5029, 0.0
      %v5062 = vand.u32 2147483647, %v4998
      %v5063 = vand.u32 2147483647, %v4999
      %v5064 = vand.u32 2147483647, %v5000
      %v5065 = vand.u32 2147483647, %v5001
      %v5066 = vand.u32 2147483647, %v5002
      %v5067 = vand.u32 2147483647, %v5003
      %v5068 = vand.u32 2147483647, %v5004
      %v5069 = vand.u32 2147483647, %v5005
      %v5070 = vand.u32 2147483647, %v5006
      %v5071 = vand.u32 2147483647, %v5007
      %v5072 = vand.u32 2147483647, %v5008
      %v5073 = vand.u32 2147483647, %v5009
      %v5074 = vand.u32 2147483647, %v5010
      %v5075 = vand.u32 2147483647, %v5011
      %v5076 = vand.u32 2147483647, %v5012
      %v5077 = vand.u32 2147483647, %v5013
      %v5078 = vand.u32 2147483647, %v5014
      %v5079 = vand.u32 2147483647, %v5015
      %v5080 = vand.u32 2147483647, %v5016
      %v5081 = vand.u32 2147483647, %v5017
      %v5082 = vand.u32 2147483647, %v5018
      %v5083 = vand.u32 2147483647, %v5019
      %v5084 = vand.u32 2147483647, %v5020
      %v5085 = vand.u32 2147483647, %v5021
      %v5086 = vand.u32 2147483647, %v5022
      %v5087 = vand.u32 2147483647, %v5023
      %v5088 = vand.u32 2147483647, %v5024
      %v5089 = vand.u32 2147483647, %v5025
      %v5090 = vand.u32 2147483647, %v5026
      %v5091 = vand.u32 2147483647, %v5027
      %v5092 = vand.u32 2147483647, %v5028
      %v5093 = vand.u32 2147483647, %v5029
      %v5094 = vsub.f32 0.0, %v5062
      %v5095 = vsub.f32 0.0, %v5063
      %v5096 = vsub.f32 0.0, %v5064
      %v5097 = vsub.f32 0.0, %v5065
      %v5098 = vsub.f32 0.0, %v5066
      %v5099 = vsub.f32 0.0, %v5067
      %v5100 = vsub.f32 0.0, %v5068
      %v5101 = vsub.f32 0.0, %v5069
      %v5102 = vsub.f32 0.0, %v5070
      %v5103 = vsub.f32 0.0, %v5071
      %v5104 = vsub.f32 0.0, %v5072
      %v5105 = vsub.f32 0.0, %v5073
      %v5106 = vsub.f32 0.0, %v5074
      %v5107 = vsub.f32 0.0, %v5075
      %v5108 = vsub.f32 0.0, %v5076
      %v5109 = vsub.f32 0.0, %v5077
      %v5110 = vsub.f32 0.0, %v5078
      %v5111 = vsub.f32 0.0, %v5079
      %v5112 = vsub.f32 0.0, %v5080
      %v5113 = vsub.f32 0.0, %v5081
      %v5114 = vsub.f32 0.0, %v5082
      %v5115 = vsub.f32 0.0, %v5083
      %v5116 = vsub.f32 0.0, %v5084
      %v5117 = vsub.f32 0.0, %v5085
      %v5118 = vsub.f32 0.0, %v5086
      %v5119 = vsub.f32 0.0, %v5087
      %v5120 = vsub.f32 0.0, %v5088
      %v5121 = vsub.f32 0.0, %v5089
      %v5122 = vsub.f32 0.0, %v5090
      %v5123 = vsub.f32 0.0, %v5091
      %v5124 = vsub.f32 0.0, %v5092
      %v5125 = vsub.f32 0.0, %v5093
      %v5126 = vmul.f32 %v5094, 1.442695
      %v5127 = vpow.pop %v5126
      %v5128 = vmul.f32 %v5095, 1.442695
      %v5129 = vpow.pop %v5128
      %v5130 = vmul.f32 %v5096, 1.442695
      %v5131 = vpow.pop %v5130
      %v5132 = vmul.f32 %v5097, 1.442695
      %v5133 = vpow.pop %v5132
      %v5134 = vmul.f32 %v5098, 1.442695
      %v5135 = vpow.pop %v5134
      %v5136 = vmul.f32 %v5099, 1.442695
      %v5137 = vpow.pop %v5136
      %v5138 = vmul.f32 %v5100, 1.442695
      %v5139 = vpow.pop %v5138
      %v5140 = vmul.f32 %v5101, 1.442695
      %v5141 = vpow.pop %v5140
      %v5142 = vmul.f32 %v5102, 1.442695
      %v5143 = vpow.pop %v5142
      %v5144 = vmul.f32 %v5103, 1.442695
      %v5145 = vpow.pop %v5144
      %v5146 = vmul.f32 %v5104, 1.442695
      %v5147 = vpow.pop %v5146
      %v5148 = vmul.f32 %v5105, 1.442695
      %v5149 = vpow.pop %v5148
      %v5150 = vmul.f32 %v5106, 1.442695
      %v5151 = vpow.pop %v5150
      %v5152 = vmul.f32 %v5107, 1.442695
      %v5153 = vpow.pop %v5152
      %v5154 = vmul.f32 %v5108, 1.442695
      %v5155 = vpow.pop %v5154
      %v5156 = vmul.f32 %v5109, 1.442695
      %v5157 = vpow.pop %v5156
      %v5158 = vmul.f32 %v5110, 1.442695
      %v5159 = vpow.pop %v5158
      %v5160 = vmul.f32 %v5111, 1.442695
      %v5161 = vpow.pop %v5160
      %v5162 = vmul.f32 %v5112, 1.442695
      %v5163 = vpow.pop %v5162
      %v5164 = vmul.f32 %v5113, 1.442695
      %v5165 = vpow.pop %v5164
      %v5166 = vmul.f32 %v5114, 1.442695
      %v5167 = vpow.pop %v5166
      %v5168 = vmul.f32 %v5115, 1.442695
      %v5169 = vpow.pop %v5168
      %v5170 = vmul.f32 %v5116, 1.442695
      %v5171 = vpow.pop %v5170
      %v5172 = vmul.f32 %v5117, 1.442695
      %v5173 = vpow.pop %v5172
      %v5174 = vmul.f32 %v5118, 1.442695
      %v5175 = vpow.pop %v5174
      %v5176 = vmul.f32 %v5119, 1.442695
      %v5177 = vpow.pop %v5176
      %v5178 = vmul.f32 %v5120, 1.442695
      %v5179 = vpow.pop %v5178
      %v5180 = vmul.f32 %v5121, 1.442695
      %v5181 = vpow.pop %v5180
      %v5182 = vmul.f32 %v5122, 1.442695
      %v5183 = vpow.pop %v5182
      %v5184 = vmul.f32 %v5123, 1.442695
      %v5185 = vpow.pop %v5184
      %v5186 = vmul.f32 %v5124, 1.442695
      %v5187 = vpow.pop %v5186
      %v5188 = vmul.f32 %v5125, 1.442695
      %v5189 = vpow.pop %v5188
      %v5190 = vadd.f32 %v5127, 1.0
      %v5191 = vadd.f32 %v5129, 1.0
      %v5192 = vadd.f32 %v5131, 1.0
      %v5193 = vadd.f32 %v5133, 1.0
      %v5194 = vadd.f32 %v5135, 1.0
      %v5195 = vadd.f32 %v5137, 1.0
      %v5196 = vadd.f32 %v5139, 1.0
      %v5197 = vadd.f32 %v5141, 1.0
      %v5198 = vadd.f32 %v5143, 1.0
      %v5199 = vadd.f32 %v5145, 1.0
      %v5200 = vadd.f32 %v5147, 1.0
      %v5201 = vadd.f32 %v5149, 1.0
      %v5202 = vadd.f32 %v5151, 1.0
      %v5203 = vadd.f32 %v5153, 1.0
      %v5204 = vadd.f32 %v5155, 1.0
      %v5205 = vadd.f32 %v5157, 1.0
      %v5206 = vadd.f32 %v5159, 1.0
      %v5207 = vadd.f32 %v5161, 1.0
      %v5208 = vadd.f32 %v5163, 1.0
      %v5209 = vadd.f32 %v5165, 1.0
      %v5210 = vadd.f32 %v5167, 1.0
      %v5211 = vadd.f32 %v5169, 1.0
      %v5212 = vadd.f32 %v5171, 1.0
      %v5213 = vadd.f32 %v5173, 1.0
      %v5214 = vadd.f32 %v5175, 1.0
      %v5215 = vadd.f32 %v5177, 1.0
      %v5216 = vadd.f32 %v5179, 1.0
      %v5217 = vadd.f32 %v5181, 1.0
      %v5218 = vadd.f32 %v5183, 1.0
      %v5219 = vadd.f32 %v5185, 1.0
      %v5220 = vadd.f32 %v5187, 1.0
      %v5221 = vadd.f32 %v5189, 1.0
      %v5222 = vlog2.pop %v5190
      %v5223 = vmul.f32 %v5222, 0.6931472
      %v5224 = vlog2.pop %v5191
      %v5225 = vmul.f32 %v5224, 0.6931472
      %v5226 = vlog2.pop %v5192
      %v5227 = vmul.f32 %v5226, 0.6931472
      %v5228 = vlog2.pop %v5193
      %v5229 = vmul.f32 %v5228, 0.6931472
      %v5230 = vlog2.pop %v5194
      %v5231 = vmul.f32 %v5230, 0.6931472
      %v5232 = vlog2.pop %v5195
      %v5233 = vmul.f32 %v5232, 0.6931472
      %v5234 = vlog2.pop %v5196
      %v5235 = vmul.f32 %v5234, 0.6931472
      %v5236 = vlog2.pop %v5197
      %v5237 = vmul.f32 %v5236, 0.6931472
      %v5238 = vlog2.pop %v5198
      %v5239 = vmul.f32 %v5238, 0.6931472
      %v5240 = vlog2.pop %v5199
      %v5241 = vmul.f32 %v5240, 0.6931472
      %v5242 = vlog2.pop %v5200
      %v5243 = vmul.f32 %v5242, 0.6931472
      %v5244 = vlog2.pop %v5201
      %v5245 = vmul.f32 %v5244, 0.6931472
      %v5246 = vlog2.pop %v5202
      %v5247 = vmul.f32 %v5246, 0.6931472
      %v5248 = vlog2.pop %v5203
      %v5249 = vmul.f32 %v5248, 0.6931472
      %v5250 = vlog2.pop %v5204
      %v5251 = vmul.f32 %v5250, 0.6931472
      %v5252 = vlog2.pop %v5205
      %v5253 = vmul.f32 %v5252, 0.6931472
      %v5254 = vlog2.pop %v5206
      %v5255 = vmul.f32 %v5254, 0.6931472
      %v5256 = vlog2.pop %v5207
      %v5257 = vmul.f32 %v5256, 0.6931472
      %v5258 = vlog2.pop %v5208
      %v5259 = vmul.f32 %v5258, 0.6931472
      %v5260 = vlog2.pop %v5209
      %v5261 = vmul.f32 %v5260, 0.6931472
      %v5262 = vlog2.pop %v5210
      %v5263 = vmul.f32 %v5262, 0.6931472
      %v5264 = vlog2.pop %v5211
      %v5265 = vmul.f32 %v5264, 0.6931472
      %v5266 = vlog2.pop %v5212
      %v5267 = vmul.f32 %v5266, 0.6931472
      %v5268 = vlog2.pop %v5213
      %v5269 = vmul.f32 %v5268, 0.6931472
      %v5270 = vlog2.pop %v5214
      %v5271 = vmul.f32 %v5270, 0.6931472
      %v5272 = vlog2.pop %v5215
      %v5273 = vmul.f32 %v5272, 0.6931472
      %v5274 = vlog2.pop %v5216
      %v5275 = vmul.f32 %v5274, 0.6931472
      %v5276 = vlog2.pop %v5217
      %v5277 = vmul.f32 %v5276, 0.6931472
      %v5278 = vlog2.pop %v5218
      %v5279 = vmul.f32 %v5278, 0.6931472
      %v5280 = vlog2.pop %v5219
      %v5281 = vmul.f32 %v5280, 0.6931472
      %v5282 = vlog2.pop %v5220
      %v5283 = vmul.f32 %v5282, 0.6931472
      %v5284 = vlog2.pop %v5221
      %v5285 = vmul.f32 %v5284, 0.6931472
      %v5286 = vadd.f32 %v5030, %v5223
      %v5287 = vadd.f32 %v5031, %v5225
      %v5288 = vadd.f32 %v5032, %v5227
      %v5289 = vadd.f32 %v5033, %v5229
      %v5290 = vadd.f32 %v5034, %v5231
      %v5291 = vadd.f32 %v5035, %v5233
      %v5292 = vadd.f32 %v5036, %v5235
      %v5293 = vadd.f32 %v5037, %v5237
      %v5294 = vadd.f32 %v5038, %v5239
      %v5295 = vadd.f32 %v5039, %v5241
      %v5296 = vadd.f32 %v5040, %v5243
      %v5297 = vadd.f32 %v5041, %v5245
      %v5298 = vadd.f32 %v5042, %v5247
      %v5299 = vadd.f32 %v5043, %v5249
      %v5300 = vadd.f32 %v5044, %v5251
      %v5301 = vadd.f32 %v5045, %v5253
      %v5302 = vadd.f32 %v5046, %v5255
      %v5303 = vadd.f32 %v5047, %v5257
      %v5304 = vadd.f32 %v5048, %v5259
      %v5305 = vadd.f32 %v5049, %v5261
      %v5306 = vadd.f32 %v5050, %v5263
      %v5307 = vadd.f32 %v5051, %v5265
      %v5308 = vadd.f32 %v5052, %v5267
      %v5309 = vadd.f32 %v5053, %v5269
      %v5310 = vadd.f32 %v5054, %v5271
      %v5311 = vadd.f32 %v5055, %v5273
      %v5312 = vadd.f32 %v5056, %v5275
      %v5313 = vadd.f32 %v5057, %v5277
      %v5314 = vadd.f32 %v5058, %v5279
      %v5315 = vadd.f32 %v5059, %v5281
      %v5316 = vadd.f32 %v5060, %v5283
      %v5317 = vadd.f32 %v5061, %v5285
      %v5318 = vtanh.pop %v5286
      %v5319 = vtanh.pop %v5287
      %v5320 = vtanh.pop %v5288
      %v5321 = vtanh.pop %v5289
      %v5322 = vtanh.pop %v5290
      %v5323 = vtanh.pop %v5291
      %v5324 = vtanh.pop %v5292
      %v5325 = vtanh.pop %v5293
      %v5326 = vtanh.pop %v5294
      %v5327 = vtanh.pop %v5295
      %v5328 = vtanh.pop %v5296
      %v5329 = vtanh.pop %v5297
      %v5330 = vtanh.pop %v5298
      %v5331 = vtanh.pop %v5299
      %v5332 = vtanh.pop %v5300
      %v5333 = vtanh.pop %v5301
      %v5334 = vtanh.pop %v5302
      %v5335 = vtanh.pop %v5303
      %v5336 = vtanh.pop %v5304
      %v5337 = vtanh.pop %v5305
      %v5338 = vtanh.pop %v5306
      %v5339 = vtanh.pop %v5307
      %v5340 = vtanh.pop %v5308
      %v5341 = vtanh.pop %v5309
      %v5342 = vtanh.pop %v5310
      %v5343 = vtanh.pop %v5311
      %v5344 = vtanh.pop %v5312
      %v5345 = vtanh.pop %v5313
      %v5346 = vtanh.pop %v5314
      %v5347 = vtanh.pop %v5315
      %v5348 = vtanh.pop %v5316
      %v5349 = vtanh.pop %v5317
      %v5350 = vmul.f32 %v4998, %v5318
      %v5351 = vmul.f32 %v4999, %v5319
      %v5352 = vmul.f32 %v5000, %v5320
      %v5353 = vmul.f32 %v5001, %v5321
      %v5354 = vmul.f32 %v5002, %v5322
      %v5355 = vmul.f32 %v5003, %v5323
      %v5356 = vmul.f32 %v5004, %v5324
      %v5357 = vmul.f32 %v5005, %v5325
      %v5358 = vmul.f32 %v5006, %v5326
      %v5359 = vmul.f32 %v5007, %v5327
      %v5360 = vmul.f32 %v5008, %v5328
      %v5361 = vmul.f32 %v5009, %v5329
      %v5362 = vmul.f32 %v5010, %v5330
      %v5363 = vmul.f32 %v5011, %v5331
      %v5364 = vmul.f32 %v5012, %v5332
      %v5365 = vmul.f32 %v5013, %v5333
      %v5366 = vmul.f32 %v5014, %v5334
      %v5367 = vmul.f32 %v5015, %v5335
      %v5368 = vmul.f32 %v5016, %v5336
      %v5369 = vmul.f32 %v5017, %v5337
      %v5370 = vmul.f32 %v5018, %v5338
      %v5371 = vmul.f32 %v5019, %v5339
      %v5372 = vmul.f32 %v5020, %v5340
      %v5373 = vmul.f32 %v5021, %v5341
      %v5374 = vmul.f32 %v5022, %v5342
      %v5375 = vmul.f32 %v5023, %v5343
      %v5376 = vmul.f32 %v5024, %v5344
      %v5377 = vmul.f32 %v5025, %v5345
      %v5378 = vmul.f32 %v5026, %v5346
      %v5379 = vmul.f32 %v5027, %v5347
      %v5380 = vmul.f32 %v5028, %v5348
      %v5381 = vmul.f32 %v5029, %v5349
      %s5382 = scalar_lea.vmem %s219, 24
      %v5383 = vld [vmem:[%s5382 + $0x1] sm:$0xff]
      %v5384 = vld [vmem:[%s5382 + $0x9] sm:$0xff]
      %v5385 = vld [vmem:[%s5382 + $0x19] sm:$0xff]
      %v5386 = vld [vmem:[%s5382 + $0x21] sm:$0xff]
      %v5387 = vld [vmem:[%s5382 + $0x31] sm:$0xff]
      %v5388 = vld [vmem:[%s5382 + $0x39] sm:$0xff]
      %v5389 = vld [vmem:[%s5382 + $0x49] sm:$0xff]
      %v5390 = vld [vmem:[%s5382 + $0x51] sm:$0xff]
      %v5391 = vld [vmem:[%s5382 + $0x61] sm:$0xff]
      %v5392 = vld [vmem:[%s5382 + $0x69] sm:$0xff]
      %v5393 = vld [vmem:[%s5382 + $0x79] sm:$0xff]
      %v5394 = vld [vmem:[%s5382 + $0x81] sm:$0xff]
      %v5395 = vld [vmem:[%s5382 + $0x91] sm:$0xff]
      %v5396 = vld [vmem:[%s5382 + $0x99] sm:$0xff]
      %v5397 = vld [vmem:[%s5382 + $0xa9] sm:$0xff]
      %v5398 = vld [vmem:[%s5382 + $0xb1] sm:$0xff]
      %v5399 = vld [vmem:[%s5382 + $0xc1] sm:$0xff]
      %v5400 = vld [vmem:[%s5382 + $0xc9] sm:$0xff]
      %v5401 = vld [vmem:[%s5382 + $0xd9] sm:$0xff]
      %v5402 = vld [vmem:[%s5382 + $0xe1] sm:$0xff]
      %v5403 = vld [vmem:[%s5382 + $0xf1] sm:$0xff]
      %v5404 = vld [vmem:[%s5382 + $0xf9] sm:$0xff]
      %v5405 = vld [vmem:[%s5382 + $0x109] sm:$0xff]
      %v5406 = vld [vmem:[%s5382 + $0x111] sm:$0xff]
      %v5407 = vld [vmem:[%s5382 + $0x121] sm:$0xff]
      %v5408 = vld [vmem:[%s5382 + $0x129] sm:$0xff]
      %v5409 = vld [vmem:[%s5382 + $0x139] sm:$0xff]
      %v5410 = vld [vmem:[%s5382 + $0x141] sm:$0xff]
      %v5411 = vld [vmem:[%s5382 + $0x151] sm:$0xff]
      %v5412 = vld [vmem:[%s5382 + $0x159] sm:$0xff]
      %v5413 = vld [vmem:[%s5382 + $0x169] sm:$0xff]
      %v5414 = vld [vmem:[%s5382 + $0x171] sm:$0xff]
      %v5415 = vadd.f32 %v5350, %v5383
      %v5416 = vadd.f32 %v5351, %v5384
      %v5417 = vadd.f32 %v5352, %v5385
      %v5418 = vadd.f32 %v5353, %v5386
      %v5419 = vadd.f32 %v5354, %v5387
      %v5420 = vadd.f32 %v5355, %v5388
      %v5421 = vadd.f32 %v5356, %v5389
      %v5422 = vadd.f32 %v5357, %v5390
      %v5423 = vadd.f32 %v5358, %v5391
      %v5424 = vadd.f32 %v5359, %v5392
      %v5425 = vadd.f32 %v5360, %v5393
      %v5426 = vadd.f32 %v5361, %v5394
      %v5427 = vadd.f32 %v5362, %v5395
      %v5428 = vadd.f32 %v5363, %v5396
      %v5429 = vadd.f32 %v5364, %v5397
      %v5430 = vadd.f32 %v5365, %v5398
      %v5431 = vadd.f32 %v5366, %v5399
      %v5432 = vadd.f32 %v5367, %v5400
      %v5433 = vadd.f32 %v5368, %v5401
      %v5434 = vadd.f32 %v5369, %v5402
      %v5435 = vadd.f32 %v5370, %v5403
      %v5436 = vadd.f32 %v5371, %v5404
      %v5437 = vadd.f32 %v5372, %v5405
      %v5438 = vadd.f32 %v5373, %v5406
      %v5439 = vadd.f32 %v5374, %v5407
      %v5440 = vadd.f32 %v5375, %v5408
      %v5441 = vadd.f32 %v5376, %v5409
      %v5442 = vadd.f32 %v5377, %v5410
      %v5443 = vadd.f32 %v5378, %v5411
      %v5444 = vadd.f32 %v5379, %v5412
      %v5445 = vadd.f32 %v5380, %v5413
      %v5446 = vadd.f32 %v5381, %v5414
      %5447 = vst.msk [vmem:[%s224] sm:$0xff] %vm287, %v5415
      %5448 = vst.msk [vmem:[%s224 + $0x8] sm:$0xff] %vm287, %v5416
      %5449 = vst.msk [vmem:[%s224 + $0x10] sm:$0xff] %vm287, %v5417
      %5450 = vst.msk [vmem:[%s224 + $0x18] sm:$0xff] %vm287, %v5418
      %5451 = vst.msk [vmem:[%s224 + $0x20] sm:$0xff] %vm287, %v5419
      %5452 = vst.msk [vmem:[%s224 + $0x28] sm:$0xff] %vm287, %v5420
      %5453 = vst.msk [vmem:[%s224 + $0x30] sm:$0xff] %vm287, %v5421
      %5454 = vst.msk [vmem:[%s224 + $0x38] sm:$0xff] %vm287, %v5422
      %5455 = vst.msk [vmem:[%s224 + $0x40] sm:$0xff] %vm287, %v5423
      %5456 = vst.msk [vmem:[%s224 + $0x48] sm:$0xff] %vm287, %v5424
      %5457 = vst.msk [vmem:[%s224 + $0x50] sm:$0xff] %vm287, %v5425
      %5458 = vst.msk [vmem:[%s224 + $0x58] sm:$0xff] %vm287, %v5426
      %5459 = vst.msk [vmem:[%s224 + $0x60] sm:$0xff] %vm287, %v5427
      %5460 = vst.msk [vmem:[%s224 + $0x68] sm:$0xff] %vm287, %v5428
      %5461 = vst.msk [vmem:[%s224 + $0x70] sm:$0xff] %vm287, %v5429
      %5462 = vst.msk [vmem:[%s224 + $0x78] sm:$0xff] %vm287, %v5430
      %5463 = vst.msk [vmem:[%s224 + $0x80] sm:$0xff] %vm287, %v5431
      %5464 = vst.msk [vmem:[%s224 + $0x88] sm:$0xff] %vm287, %v5432
      %5465 = vst.msk [vmem:[%s224 + $0x90] sm:$0xff] %vm287, %v5433
      %5466 = vst.msk [vmem:[%s224 + $0x98] sm:$0xff] %vm287, %v5434
      %5467 = vst.msk [vmem:[%s224 + $0xa0] sm:$0xff] %vm287, %v5435
      %5468 = vst.msk [vmem:[%s224 + $0xa8] sm:$0xff] %vm287, %v5436
      %5469 = vst.msk [vmem:[%s224 + $0xb0] sm:$0xff] %vm287, %v5437
      %5470 = vst.msk [vmem:[%s224 + $0xb8] sm:$0xff] %vm287, %v5438
      %5471 = vst.msk [vmem:[%s224 + $0xc0] sm:$0xff] %vm287, %v5439
      %5472 = vst.msk [vmem:[%s224 + $0xc8] sm:$0xff] %vm287, %v5440
      %5473 = vst.msk [vmem:[%s224 + $0xd0] sm:$0xff] %vm287, %v5441
      %5474 = vst.msk [vmem:[%s224 + $0xd8] sm:$0xff] %vm287, %v5442
      %5475 = vst.msk [vmem:[%s224 + $0xe0] sm:$0xff] %vm287, %v5443
      %5476 = vst.msk [vmem:[%s224 + $0xe8] sm:$0xff] %vm287, %v5444
      %5477 = vst.msk [vmem:[%s224 + $0xf0] sm:$0xff] %vm287, %v5445
      %5478 = vst.msk [vmem:[%s224 + $0xf8] sm:$0xff] %vm287, %v5446
      %p5479 = scmp.lt.s32.totalorder %s16, 1
      %s5480 = scalar_select %p5479, %s16, 1
      %s5481 = smul.addr %s5480, 32
      %s5482 = smul.addr %s5481, 8
      %s5483 = scalar_lea.vmem %s5, %s5482
      // Predicated region
      $region41: #{resblock_forward.2} parent=39 // pred_check
        %p5484 = pneg %p144
      $region42: #{resblock_forward.2} parent=39 // pred_check_branch
        %5486 = sbr.rel (%p5484) target = $region44
      $region43: #{resblock_forward.2} parent=39 // pred_region
        _
      $region44: #{resblock_forward.2} parent=39 // pred_fallthru
        _
    $region40: #{resblock_forward.2} parent=5 // pred_fallthru
      _
    %p5487 = scmp.le.s32.totalorder 2, %s11
    // Predicated region
    $region45: #{resblock_forward.2} parent=5 // pred_check
      %p5488 = pneg %p5487
    $region46: #{resblock_forward.2} parent=5 // pred_check_branch
      %5490 = sbr.rel (%p5488) target = $region48
    $region47: #{resblock_forward.2} parent=5 // pred_region
      %s5491 = ssub.s32 %s11, 2
      // Predicated region
      $region49: #{resblock_forward.2} parent=47 // pred_check
        %p5492 = pneg %p150
      $region50: #{resblock_forward.2} parent=47 // pred_check_branch
        %5494 = sbr.rel (%p5492) target = $region52
      $region51: #{resblock_forward.2} parent=47 // pred_region
        %p5495 = scmp.lt.s32.totalorder %s17, 1
        %s5496 = scalar_select %p5495, %s17, 1
        %s5497 = smul.addr %s5496, 32
        %s5498 = smul.addr %s5497, 8
        %s5499 = scalar_lea.vmem %s5, %s5498
      $region52: #{resblock_forward.2} parent=47 // pred_fallthru
        _
    $region48: #{resblock_forward.2} parent=5 // pred_fallthru
      _
  $region6: #{resblock_forward.2} parent=0 // loop_footer
    %s15 = sadd.s32 1, %s11
  $region7: #{resblock_forward.2} parent=0 // loop_footer_branch
    %10 = sbr.rel target = $region3
  $region8: #{resblock_forward.2} parent=0 // loop_exit
    _

</llo_original>
